<compile_context>
chip_gen: v7x
topology: tpu7x:2x2x1
jax: 0.10.0
libtpu: 0.0.40
codegen_flags: <defaults>
</compile_context>

<pallas_src>
import functools
import math

import jax
import jax.numpy as jnp
from jax.experimental import pallas as pl
from jax.experimental.pallas import tpu as pltpu  # noqa: F401  (TPU backend)


# ----------------------------------------------------------------------------
# Fused BERT forward kernel
# ----------------------------------------------------------------------------
def _bert_kernel(
    emb_ref, mask_ref, emb_g_ref, emb_b_ref,
    wqkv_ref, bqkv_ref, wo_ref, bo_ref, ln1g_ref, ln1b_ref,
    wi_ref, bi_ref, wo2_ref, bo2_ref, ln2g_ref, ln2b_ref,
    poolw_ref, poolb_ref, fcw_ref, fcb_ref,
    out_ref,
    *, B, S, H, heads, layers, class_num, eps,
):
    dh = H // heads
    scale = 1.0 / math.sqrt(dh)
    out_m, out_n = out_ref.shape

    def layernorm(x, g, b):
        mean = jnp.mean(x, axis=-1, keepdims=True)
        var = jnp.mean((x - mean) ** 2, axis=-1, keepdims=True)
        return (x - mean) * jax.lax.rsqrt(var + eps) * g + b

    def gelu(x):  # exact (erf) GELU, as in pytorch-pretrained-bert
        return 0.5 * x * (1.0 + jax.lax.erf(x * (1.0 / math.sqrt(2.0))))

    # Embedding LayerNorm (no residual stream).
    x = layernorm(emb_ref[...].astype(jnp.float32), emb_g_ref[...], emb_b_ref[...])  # (B*S, H)
    mask_bias = mask_ref[...]  # (B, S), additive bias = (mask - 1) * 10000, precomputed

    for l in range(layers):
        # ---- fused Q/K/V projection: one (B*S, H) x (H, 3H) matmul ----
        qkv = jnp.dot(x, wqkv_ref[l], preferred_element_type=jnp.float32) + bqkv_ref[l]
        q = qkv[:, 0 * H:1 * H]
        k = qkv[:, 1 * H:2 * H]
        v = qkv[:, 2 * H:3 * H]

        # ---- attention: static per-(batch, head) 2-D matmuls, no transposes/relayouts ----
        ctx_rows = []
        for b in range(B):
            r0, r1 = b * S, (b + 1) * S
            bias_b = mask_bias[b:b + 1, :]                     # (1, S) -> broadcast over queries
            head_ctx = []
            for h in range(heads):
                c0, c1 = h * dh, (h + 1) * dh
                qb = q[r0:r1, c0:c1]                           # (S, dh)
                kb = k[r0:r1, c0:c1]
                vb = v[r0:r1, c0:c1]
                scores = jax.lax.dot_general(
                    qb, kb, (((1,), (1,)), ((), ())),
                    preferred_element_type=jnp.float32) * scale            # (S, S)
                scores = scores + bias_b
                scores = scores - jnp.max(scores, axis=-1, keepdims=True)
                p = jnp.exp(scores)
                p = p * pl.reciprocal(jnp.sum(p, axis=-1, keepdims=True), approx=True)
                head_ctx.append(jnp.dot(p, vb, preferred_element_type=jnp.float32))  # (S, dh)
            ctx_rows.append(jnp.concatenate(head_ctx, axis=-1))             # (S, H)
        ctx = jnp.concatenate(ctx_rows, axis=0)                             # (B*S, H)

        # ---- output projection + residual LayerNorm ----
        attn_out = jnp.dot(ctx, wo_ref[l], preferred_element_type=jnp.float32) + bo_ref[l]
        x = layernorm(attn_out + x, ln1g_ref[l], ln1b_ref[l])

        # ---- feed-forward + residual LayerNorm ----
        inter = gelu(jnp.dot(x, wi_ref[l], preferred_element_type=jnp.float32) + bi_ref[l])
        ffn_out = jnp.dot(inter, wo2_ref[l], preferred_element_type=jnp.float32) + bo2_ref[l]
        x = layernorm(ffn_out + x, ln2g_ref[l], ln2b_ref[l])

    # ---- pooler (first token, dense + tanh) and classifier, fused in the tail ----
    first_rows = jnp.concatenate([x[b * S:b * S + 1, :] for b in range(B)], axis=0)  # (B, H)
    pooled = jnp.tanh(
        jnp.dot(first_rows, poolw_ref[...], preferred_element_type=jnp.float32) + poolb_ref[...])
    logits = jnp.dot(pooled, fcw_ref[...], preferred_element_type=jnp.float32) + fcb_ref[...]  # (B, C)

    # Lane-dense output: pad to (out_m, out_n) and do one full, unmasked store.
    pad_cols = jnp.concatenate(
        [logits, jnp.zeros((B, out_n - class_num), jnp.float32)], axis=-1)           # (B, out_n)
    padded = jnp.concatenate(
        [pad_cols, jnp.zeros((out_m - B, out_n), jnp.float32)], axis=0)              # (out_m, out_n)
    out_ref[...] = padded.astype(out_ref.dtype)


# ----------------------------------------------------------------------------
# Model config, deterministic parameter init, forward pass
# ----------------------------------------------------------------------------
CFG = dict(
    vocab_size=50,
    max_position=16,
    type_vocab_size=2,
    hidden=32,
    heads=2,
    layers=2,
    intermediate=64,
    class_num=5,
)


def init_params(key, cfg):
    H, I, L, C = cfg["hidden"], cfg["intermediate"], cfg["layers"], cfg["class_num"]

    def normal(k, shape):
        return (0.02 * jax.random.normal(k, shape)).astype(jnp.float32)

    keys = iter(jax.random.split(key, 16))
    # Per-layer weights are stacked on a leading layer axis; Q/K/V fused into (H, 3H).
    # TODO(synk): for BERT-base scale-up, store weights in bf16 and K-tile the FFN matmuls
    # with a grid + VMEM f32 accumulator (v7x has only 64 MiB VMEM).
    params = {
        "word_emb": normal(next(keys), (cfg["vocab_size"], H)),
        "pos_emb": normal(next(keys), (cfg["max_position"], H)),
        "tok_emb": normal(next(keys), (cfg["type_vocab_size"], H)),
        "emb_ln_g": jnp.ones((1, H), jnp.float32),
        "emb_ln_b": jnp.zeros((1, H), jnp.float32),
        "wqkv": normal(next(keys), (L, H, 3 * H)),
        "bqkv": jnp.zeros((L, 1, 3 * H), jnp.float32),
        "wo": normal(next(keys), (L, H, H)),
        "bo": jnp.zeros((L, 1, H), jnp.float32),
        "ln1_g": jnp.ones((L, 1, H), jnp.float32),
        "ln1_b": jnp.zeros((L, 1, H), jnp.float32),
        "wi": normal(next(keys), (L, H, I)),
        "bi": jnp.zeros((L, 1, I), jnp.float32),
        "wo2": normal(next(keys), (L, I, H)),
        "bo2": jnp.zeros((L, 1, H), jnp.float32),
        "ln2_g": jnp.ones((L, 1, H), jnp.float32),
        "ln2_b": jnp.zeros((L, 1, H), jnp.float32),
        "pool_w": normal(next(keys), (H, H)),
        "pool_b": jnp.zeros((1, H), jnp.float32),
        "fc_w": normal(next(keys), (H, C)),
        "fc_b": jnp.zeros((1, C), jnp.float32),
    }
    return params


def bert_forward(params, context, mask, cfg):
    """context: (B, S) int32 token ids; mask: (B, S) {0,1}.  Returns logits (B, class_num)."""
    B, S = context.shape
    H, heads, L, C = cfg["hidden"], cfg["heads"], cfg["layers"], cfg["class_num"]

    # Embedding gather is glue (XLA); everything else runs inside the fused Pallas kernel.
    word = jnp.take(params["word_emb"], context, axis=0)          # (B, S, H)
    pos = params["pos_emb"][:S][None, :, :]                       # (1, S, H)
    tok = params["tok_emb"][0][None, None, :]                     # token_type_ids = 0
    emb = (word + pos + tok).reshape(B * S, H).astype(jnp.float32)

    # Precompute BERT's extended additive attention-mask bias once: (mask - 1) * 10000.
    mask_bias = (mask.astype(jnp.float32) - 1.0) * 10000.0        # (B, S)

    out_m = ((B + 7) // 8) * 8          # sublane-aligned
    out_n = ((C + 127) // 128) * 128    # lane-dense output slab

    kernel = functools.partial(
        _bert_kernel, B=B, S=S, H=H, heads=heads, layers=L, class_num=C, eps=1e-12)

    out = pl.pallas_call(
        kernel,
        out_shape=jax.ShapeDtypeStruct((out_m, out_n), jnp.float32),
    )(
        emb, mask_bias, params["emb_ln_g"], params["emb_ln_b"],
        params["wqkv"], params["bqkv"], params["wo"], params["bo"],
        params["ln1_g"], params["ln1_b"],
        params["wi"], params["bi"], params["wo2"], params["bo2"],
        params["ln2_g"], params["ln2_b"],
        params["pool_w"], params["pool_b"], params["fc_w"], params["fc_b"],
    )
    return out[:B, :C]


# ----------------------------------------------------------------------------
if __name__ == "__main__":
    cfg = CFG
    B, S = 2, 8

    key = jax.random.PRNGKey(0)
    k_params, k_tok = jax.random.split(key, 2)

    params = init_params(k_params, cfg)

    # x = (context, seq_len, mask) as in the PyTorch module's forward.
    context = jax.random.randint(k_tok, (B, S), 0, cfg["vocab_size"], dtype=jnp.int32)
    lengths = jnp.array([S, S - 3], dtype=jnp.int32)
    mask = (jnp.arange(S)[None, :] < lengths[:, None]).astype(jnp.int32)
    x = (context, lengths, mask)

    fwd = jax.jit(functools.partial(bert_forward, cfg=cfg))
    logits = fwd(params, x[0], x[2])
    jax.block_until_ready(logits)

    assert logits.shape == (B, cfg["class_num"])
    print("KERNEL_OK")
</pallas_src>

<mosaic_0001>
module attributes {stable_mosaic.version = 11 : i64} {
  func.func @_bert_kernel(%arg0: memref<16x32xf32, #tpu.memory_space<vmem>>, %arg1: memref<2x8xf32, #tpu.memory_space<vmem>>, %arg2: memref<1x32xf32, #tpu.memory_space<vmem>>, %arg3: memref<1x32xf32, #tpu.memory_space<vmem>>, %arg4: memref<2x32x96xf32, #tpu.memory_space<vmem>>, %arg5: memref<2x1x96xf32, #tpu.memory_space<vmem>>, %arg6: memref<2x32x32xf32, #tpu.memory_space<vmem>>, %arg7: memref<2x1x32xf32, #tpu.memory_space<vmem>>, %arg8: memref<2x1x32xf32, #tpu.memory_space<vmem>>, %arg9: memref<2x1x32xf32, #tpu.memory_space<vmem>>, %arg10: memref<2x32x64xf32, #tpu.memory_space<vmem>>, %arg11: memref<2x1x64xf32, #tpu.memory_space<vmem>>, %arg12: memref<2x64x32xf32, #tpu.memory_space<vmem>>, %arg13: memref<2x1x32xf32, #tpu.memory_space<vmem>>, %arg14: memref<2x1x32xf32, #tpu.memory_space<vmem>>, %arg15: memref<2x1x32xf32, #tpu.memory_space<vmem>>, %arg16: memref<32x32xf32, #tpu.memory_space<vmem>>, %arg17: memref<1x32xf32, #tpu.memory_space<vmem>>, %arg18: memref<32x5xf32, #tpu.memory_space<vmem>>, %arg19: memref<1x5xf32, #tpu.memory_space<vmem>>, %arg20: memref<8x128xf32, #tpu.memory_space<vmem>>) attributes {dimension_semantics = [], scalar_prefetch = 0 : i64, scratch_operands = 0 : i64, tpu.core_type = #tpu.core_type<tc>} {
    %c0 = arith.constant 0 : index
    %c0_0 = arith.constant 0 : index
    %0 = vector.load %arg0[%c0, %c0_0] : memref<16x32xf32, #tpu.memory_space<vmem>>, vector<16x32xf32>
    %c0_1 = arith.constant 0 : index
    %c0_2 = arith.constant 0 : index
    %1 = vector.load %arg2[%c0_1, %c0_2] : memref<1x32xf32, #tpu.memory_space<vmem>>, vector<1x32xf32>
    %c0_3 = arith.constant 0 : index
    %c0_4 = arith.constant 0 : index
    %2 = vector.load %arg3[%c0_3, %c0_4] : memref<1x32xf32, #tpu.memory_space<vmem>>, vector<1x32xf32>
    %cst = arith.constant dense<0.000000e+00> : vector<16xf32>
    %3 = vector.multi_reduction <add>, %0, %cst [1] : vector<16x32xf32> to vector<16xf32>
    %4 = vector.shape_cast %3 : vector<16xf32> to vector<16x1xf32>
    %cst_5 = arith.constant 3.200000e+01 : f32
    %5 = vector.broadcast %cst_5 : f32 to vector<16x1xf32>
    %6 = arith.divf %4, %5 : vector<16x1xf32>
    %7 = vector.broadcast %6 : vector<16x1xf32> to vector<16x32xf32>
    %8 = arith.subf %0, %7 : vector<16x32xf32>
    %9 = arith.mulf %8, %8 : vector<16x32xf32>
    %cst_6 = arith.constant dense<0.000000e+00> : vector<16xf32>
    %10 = vector.multi_reduction <add>, %9, %cst_6 [1] : vector<16x32xf32> to vector<16xf32>
    %11 = vector.shape_cast %10 : vector<16xf32> to vector<16x1xf32>
    %cst_7 = arith.constant 3.200000e+01 : f32
    %12 = vector.broadcast %cst_7 : f32 to vector<16x1xf32>
    %13 = arith.divf %11, %12 : vector<16x1xf32>
    %14 = vector.broadcast %6 : vector<16x1xf32> to vector<16x32xf32>
    %15 = arith.subf %0, %14 : vector<16x32xf32>
    %cst_8 = arith.constant 9.99999996E-13 : f32
    %16 = vector.broadcast %cst_8 : f32 to vector<16x1xf32>
    %17 = arith.addf %13, %16 : vector<16x1xf32>
    %18 = math.rsqrt %17 : vector<16x1xf32>
    %19 = vector.broadcast %18 : vector<16x1xf32> to vector<16x32xf32>
    %20 = arith.mulf %15, %19 : vector<16x32xf32>
    %21 = vector.broadcast %1 : vector<1x32xf32> to vector<16x32xf32>
    %22 = arith.mulf %20, %21 : vector<16x32xf32>
    %23 = vector.broadcast %2 : vector<1x32xf32> to vector<16x32xf32>
    %24 = arith.addf %22, %23 : vector<16x32xf32>
    %c0_9 = arith.constant 0 : index
    %c0_10 = arith.constant 0 : index
    %25 = vector.load %arg1[%c0_9, %c0_10] : memref<2x8xf32, #tpu.memory_space<vmem>>, vector<2x8xf32>
    %c0_11 = arith.constant 0 : index
    %c0_12 = arith.constant 0 : index
    %c0_13 = arith.constant 0 : index
    %26 = vector.load %arg4[%c0_11, %c0_12, %c0_13] : memref<2x32x96xf32, #tpu.memory_space<vmem>>, vector<1x32x96xf32>
    %27 = vector.shape_cast %26 : vector<1x32x96xf32> to vector<32x96xf32>
    %cst_14 = arith.constant dense<0.000000e+00> : vector<16x96xf32>
    %28 = tpu.matmul %24, %27, %cst_14 {dimension_numbers = #tpu.dot_dimension_numbers<[1], [0], [0], [1], [0, 0, 1, 1], [], []>} : vector<16x32xf32>, vector<32x96xf32>, vector<16x96xf32> -> vector<16x96xf32>
    %c0_15 = arith.constant 0 : index
    %c0_16 = arith.constant 0 : index
    %c0_17 = arith.constant 0 : index
    %29 = vector.load %arg5[%c0_15, %c0_16, %c0_17] : memref<2x1x96xf32, #tpu.memory_space<vmem>>, vector<1x1x96xf32>
    %30 = vector.shape_cast %29 : vector<1x1x96xf32> to vector<1x96xf32>
    %31 = vector.broadcast %30 : vector<1x96xf32> to vector<16x96xf32>
    %32 = arith.addf %28, %31 : vector<16x96xf32>
    %33 = vector.extract_strided_slice %32 {offsets = [0, 0], sizes = [16, 32], strides = [1, 1]} : vector<16x96xf32> to vector<16x32xf32>
    %34 = vector.extract_strided_slice %32 {offsets = [0, 32], sizes = [16, 32], strides = [1, 1]} : vector<16x96xf32> to vector<16x32xf32>
    %35 = vector.extract_strided_slice %32 {offsets = [0, 64], sizes = [16, 32], strides = [1, 1]} : vector<16x96xf32> to vector<16x32xf32>
    %36 = vector.extract_strided_slice %25 {offsets = [0, 0], sizes = [1, 8], strides = [1, 1]} : vector<2x8xf32> to vector<1x8xf32>
    %37 = vector.extract_strided_slice %33 {offsets = [0, 0], sizes = [8, 16], strides = [1, 1]} : vector<16x32xf32> to vector<8x16xf32>
    %38 = vector.extract_strided_slice %34 {offsets = [0, 0], sizes = [8, 16], strides = [1, 1]} : vector<16x32xf32> to vector<8x16xf32>
    %39 = vector.extract_strided_slice %35 {offsets = [0, 0], sizes = [8, 16], strides = [1, 1]} : vector<16x32xf32> to vector<8x16xf32>
    %cst_18 = arith.constant dense<0.000000e+00> : vector<8x8xf32>
    %40 = tpu.matmul %37, %38, %cst_18 {dimension_numbers = #tpu.dot_dimension_numbers<[1], [1], [0], [0], [0, 0, 1, 0], [], []>} : vector<8x16xf32>, vector<8x16xf32>, vector<8x8xf32> -> vector<8x8xf32>
    %cst_19 = arith.constant 2.500000e-01 : f32
    %41 = vector.broadcast %cst_19 : f32 to vector<8x8xf32>
    %42 = arith.mulf %40, %41 : vector<8x8xf32>
    %43 = vector.broadcast %36 : vector<1x8xf32> to vector<8x8xf32>
    %44 = arith.addf %42, %43 : vector<8x8xf32>
    %cst_20 = arith.constant dense<0xFF800000> : vector<8xf32>
    %45 = vector.multi_reduction <maximumf>, %44, %cst_20 [1] : vector<8x8xf32> to vector<8xf32>
    %46 = vector.shape_cast %45 : vector<8xf32> to vector<8x1xf32>
    %47 = vector.broadcast %46 : vector<8x1xf32> to vector<8x8xf32>
    %48 = arith.subf %44, %47 : vector<8x8xf32>
    %49 = math.exp %48 : vector<8x8xf32>
    %cst_21 = arith.constant dense<0.000000e+00> : vector<8xf32>
    %50 = vector.multi_reduction <add>, %49, %cst_21 [1] : vector<8x8xf32> to vector<8xf32>
    %51 = vector.shape_cast %50 : vector<8xf32> to vector<8x1xf32>
    %52 = tpu.reciprocal %51 {approx = true} : vector<8x1xf32> -> vector<8x1xf32>
    %53 = vector.broadcast %52 : vector<8x1xf32> to vector<8x8xf32>
    %54 = arith.mulf %49, %53 : vector<8x8xf32>
    %cst_22 = arith.constant dense<0.000000e+00> : vector<8x16xf32>
    %55 = tpu.matmul %54, %39, %cst_22 {dimension_numbers = #tpu.dot_dimension_numbers<[1], [0], [0], [1], [0, 0, 1, 1], [], []>} : vector<8x8xf32>, vector<8x16xf32>, vector<8x16xf32> -> vector<8x16xf32>
    %56 = vector.extract_strided_slice %33 {offsets = [0, 16], sizes = [8, 16], strides = [1, 1]} : vector<16x32xf32> to vector<8x16xf32>
    %57 = vector.extract_strided_slice %34 {offsets = [0, 16], sizes = [8, 16], strides = [1, 1]} : vector<16x32xf32> to vector<8x16xf32>
    %58 = vector.extract_strided_slice %35 {offsets = [0, 16], sizes = [8, 16], strides = [1, 1]} : vector<16x32xf32> to vector<8x16xf32>
    %cst_23 = arith.constant dense<0.000000e+00> : vector<8x8xf32>
    %59 = tpu.matmul %56, %57, %cst_23 {dimension_numbers = #tpu.dot_dimension_numbers<[1], [1], [0], [0], [0, 0, 1, 0], [], []>} : vector<8x16xf32>, vector<8x16xf32>, vector<8x8xf32> -> vector<8x8xf32>
    %cst_24 = arith.constant 2.500000e-01 : f32
    %60 = vector.broadcast %cst_24 : f32 to vector<8x8xf32>
    %61 = arith.mulf %59, %60 : vector<8x8xf32>
    %62 = vector.broadcast %36 : vector<1x8xf32> to vector<8x8xf32>
    %63 = arith.addf %61, %62 : vector<8x8xf32>
    %cst_25 = arith.constant dense<0xFF800000> : vector<8xf32>
    %64 = vector.multi_reduction <maximumf>, %63, %cst_25 [1] : vector<8x8xf32> to vector<8xf32>
    %65 = vector.shape_cast %64 : vector<8xf32> to vector<8x1xf32>
    %66 = vector.broadcast %65 : vector<8x1xf32> to vector<8x8xf32>
    %67 = arith.subf %63, %66 : vector<8x8xf32>
    %68 = math.exp %67 : vector<8x8xf32>
    %cst_26 = arith.constant dense<0.000000e+00> : vector<8xf32>
    %69 = vector.multi_reduction <add>, %68, %cst_26 [1] : vector<8x8xf32> to vector<8xf32>
    %70 = vector.shape_cast %69 : vector<8xf32> to vector<8x1xf32>
    %71 = tpu.reciprocal %70 {approx = true} : vector<8x1xf32> -> vector<8x1xf32>
    %72 = vector.broadcast %71 : vector<8x1xf32> to vector<8x8xf32>
    %73 = arith.mulf %68, %72 : vector<8x8xf32>
    %cst_27 = arith.constant dense<0.000000e+00> : vector<8x16xf32>
    %74 = tpu.matmul %73, %58, %cst_27 {dimension_numbers = #tpu.dot_dimension_numbers<[1], [0], [0], [1], [0, 0, 1, 1], [], []>} : vector<8x8xf32>, vector<8x16xf32>, vector<8x16xf32> -> vector<8x16xf32>
    %75 = tpu.concatenate %55, %74 in 1 : vector<8x16xf32>, vector<8x16xf32> -> vector<8x32xf32>
    %76 = vector.extract_strided_slice %25 {offsets = [1, 0], sizes = [1, 8], strides = [1, 1]} : vector<2x8xf32> to vector<1x8xf32>
    %77 = vector.extract_strided_slice %33 {offsets = [8, 0], sizes = [8, 16], strides = [1, 1]} : vector<16x32xf32> to vector<8x16xf32>
    %78 = vector.extract_strided_slice %34 {offsets = [8, 0], sizes = [8, 16], strides = [1, 1]} : vector<16x32xf32> to vector<8x16xf32>
    %79 = vector.extract_strided_slice %35 {offsets = [8, 0], sizes = [8, 16], strides = [1, 1]} : vector<16x32xf32> to vector<8x16xf32>
    %cst_28 = arith.constant dense<0.000000e+00> : vector<8x8xf32>
    %80 = tpu.matmul %77, %78, %cst_28 {dimension_numbers = #tpu.dot_dimension_numbers<[1], [1], [0], [0], [0, 0, 1, 0], [], []>} : vector<8x16xf32>, vector<8x16xf32>, vector<8x8xf32> -> vector<8x8xf32>
    %cst_29 = arith.constant 2.500000e-01 : f32
    %81 = vector.broadcast %cst_29 : f32 to vector<8x8xf32>
    %82 = arith.mulf %80, %81 : vector<8x8xf32>
    %83 = vector.broadcast %76 : vector<1x8xf32> to vector<8x8xf32>
    %84 = arith.addf %82, %83 : vector<8x8xf32>
    %cst_30 = arith.constant dense<0xFF800000> : vector<8xf32>
    %85 = vector.multi_reduction <maximumf>, %84, %cst_30 [1] : vector<8x8xf32> to vector<8xf32>
    %86 = vector.shape_cast %85 : vector<8xf32> to vector<8x1xf32>
    %87 = vector.broadcast %86 : vector<8x1xf32> to vector<8x8xf32>
    %88 = arith.subf %84, %87 : vector<8x8xf32>
    %89 = math.exp %88 : vector<8x8xf32>
    %cst_31 = arith.constant dense<0.000000e+00> : vector<8xf32>
    %90 = vector.multi_reduction <add>, %89, %cst_31 [1] : vector<8x8xf32> to vector<8xf32>
    %91 = vector.shape_cast %90 : vector<8xf32> to vector<8x1xf32>
    %92 = tpu.reciprocal %91 {approx = true} : vector<8x1xf32> -> vector<8x1xf32>
    %93 = vector.broadcast %92 : vector<8x1xf32> to vector<8x8xf32>
    %94 = arith.mulf %89, %93 : vector<8x8xf32>
    %cst_32 = arith.constant dense<0.000000e+00> : vector<8x16xf32>
    %95 = tpu.matmul %94, %79, %cst_32 {dimension_numbers = #tpu.dot_dimension_numbers<[1], [0], [0], [1], [0, 0, 1, 1], [], []>} : vector<8x8xf32>, vector<8x16xf32>, vector<8x16xf32> -> vector<8x16xf32>
    %96 = vector.extract_strided_slice %33 {offsets = [8, 16], sizes = [8, 16], strides = [1, 1]} : vector<16x32xf32> to vector<8x16xf32>
    %97 = vector.extract_strided_slice %34 {offsets = [8, 16], sizes = [8, 16], strides = [1, 1]} : vector<16x32xf32> to vector<8x16xf32>
    %98 = vector.extract_strided_slice %35 {offsets = [8, 16], sizes = [8, 16], strides = [1, 1]} : vector<16x32xf32> to vector<8x16xf32>
    %cst_33 = arith.constant dense<0.000000e+00> : vector<8x8xf32>
    %99 = tpu.matmul %96, %97, %cst_33 {dimension_numbers = #tpu.dot_dimension_numbers<[1], [1], [0], [0], [0, 0, 1, 0], [], []>} : vector<8x16xf32>, vector<8x16xf32>, vector<8x8xf32> -> vector<8x8xf32>
    %cst_34 = arith.constant 2.500000e-01 : f32
    %100 = vector.broadcast %cst_34 : f32 to vector<8x8xf32>
    %101 = arith.mulf %99, %100 : vector<8x8xf32>
    %102 = vector.broadcast %76 : vector<1x8xf32> to vector<8x8xf32>
    %103 = arith.addf %101, %102 : vector<8x8xf32>
    %cst_35 = arith.constant dense<0xFF800000> : vector<8xf32>
    %104 = vector.multi_reduction <maximumf>, %103, %cst_35 [1] : vector<8x8xf32> to vector<8xf32>
    %105 = vector.shape_cast %104 : vector<8xf32> to vector<8x1xf32>
    %106 = vector.broadcast %105 : vector<8x1xf32> to vector<8x8xf32>
    %107 = arith.subf %103, %106 : vector<8x8xf32>
    %108 = math.exp %107 : vector<8x8xf32>
    %cst_36 = arith.constant dense<0.000000e+00> : vector<8xf32>
    %109 = vector.multi_reduction <add>, %108, %cst_36 [1] : vector<8x8xf32> to vector<8xf32>
    %110 = vector.shape_cast %109 : vector<8xf32> to vector<8x1xf32>
    %111 = tpu.reciprocal %110 {approx = true} : vector<8x1xf32> -> vector<8x1xf32>
    %112 = vector.broadcast %111 : vector<8x1xf32> to vector<8x8xf32>
    %113 = arith.mulf %108, %112 : vector<8x8xf32>
    %cst_37 = arith.constant dense<0.000000e+00> : vector<8x16xf32>
    %114 = tpu.matmul %113, %98, %cst_37 {dimension_numbers = #tpu.dot_dimension_numbers<[1], [0], [0], [1], [0, 0, 1, 1], [], []>} : vector<8x8xf32>, vector<8x16xf32>, vector<8x16xf32> -> vector<8x16xf32>
    %115 = tpu.concatenate %95, %114 in 1 : vector<8x16xf32>, vector<8x16xf32> -> vector<8x32xf32>
    %116 = tpu.concatenate %75, %115 in 0 : vector<8x32xf32>, vector<8x32xf32> -> vector<16x32xf32>
    %c0_38 = arith.constant 0 : index
    %c0_39 = arith.constant 0 : index
    %c0_40 = arith.constant 0 : index
    %117 = vector.load %arg6[%c0_38, %c0_39, %c0_40] : memref<2x32x32xf32, #tpu.memory_space<vmem>>, vector<1x32x32xf32>
    %118 = vector.shape_cast %117 : vector<1x32x32xf32> to vector<32x32xf32>
    %cst_41 = arith.constant dense<0.000000e+00> : vector<16x32xf32>
    %119 = tpu.matmul %116, %118, %cst_41 {dimension_numbers = #tpu.dot_dimension_numbers<[1], [0], [0], [1], [0, 0, 1, 1], [], []>} : vector<16x32xf32>, vector<32x32xf32>, vector<16x32xf32> -> vector<16x32xf32>
    %c0_42 = arith.constant 0 : index
    %c0_43 = arith.constant 0 : index
    %c0_44 = arith.constant 0 : index
    %120 = vector.load %arg7[%c0_42, %c0_43, %c0_44] : memref<2x1x32xf32, #tpu.memory_space<vmem>>, vector<1x1x32xf32>
    %121 = vector.shape_cast %120 : vector<1x1x32xf32> to vector<1x32xf32>
    %122 = vector.broadcast %121 : vector<1x32xf32> to vector<16x32xf32>
    %123 = arith.addf %119, %122 : vector<16x32xf32>
    %124 = arith.addf %123, %24 : vector<16x32xf32>
    %c0_45 = arith.constant 0 : index
    %c0_46 = arith.constant 0 : index
    %c0_47 = arith.constant 0 : index
    %125 = vector.load %arg8[%c0_45, %c0_46, %c0_47] : memref<2x1x32xf32, #tpu.memory_space<vmem>>, vector<1x1x32xf32>
    %126 = vector.shape_cast %125 : vector<1x1x32xf32> to vector<1x32xf32>
    %c0_48 = arith.constant 0 : index
    %c0_49 = arith.constant 0 : index
    %c0_50 = arith.constant 0 : index
    %127 = vector.load %arg9[%c0_48, %c0_49, %c0_50] : memref<2x1x32xf32, #tpu.memory_space<vmem>>, vector<1x1x32xf32>
    %128 = vector.shape_cast %127 : vector<1x1x32xf32> to vector<1x32xf32>
    %cst_51 = arith.constant dense<0.000000e+00> : vector<16xf32>
    %129 = vector.multi_reduction <add>, %124, %cst_51 [1] : vector<16x32xf32> to vector<16xf32>
    %130 = vector.shape_cast %129 : vector<16xf32> to vector<16x1xf32>
    %cst_52 = arith.constant 3.200000e+01 : f32
    %131 = vector.broadcast %cst_52 : f32 to vector<16x1xf32>
    %132 = arith.divf %130, %131 : vector<16x1xf32>
    %133 = vector.broadcast %132 : vector<16x1xf32> to vector<16x32xf32>
    %134 = arith.subf %124, %133 : vector<16x32xf32>
    %135 = arith.mulf %134, %134 : vector<16x32xf32>
    %cst_53 = arith.constant dense<0.000000e+00> : vector<16xf32>
    %136 = vector.multi_reduction <add>, %135, %cst_53 [1] : vector<16x32xf32> to vector<16xf32>
    %137 = vector.shape_cast %136 : vector<16xf32> to vector<16x1xf32>
    %cst_54 = arith.constant 3.200000e+01 : f32
    %138 = vector.broadcast %cst_54 : f32 to vector<16x1xf32>
    %139 = arith.divf %137, %138 : vector<16x1xf32>
    %140 = vector.broadcast %132 : vector<16x1xf32> to vector<16x32xf32>
    %141 = arith.subf %124, %140 : vector<16x32xf32>
    %cst_55 = arith.constant 9.99999996E-13 : f32
    %142 = vector.broadcast %cst_55 : f32 to vector<16x1xf32>
    %143 = arith.addf %139, %142 : vector<16x1xf32>
    %144 = math.rsqrt %143 : vector<16x1xf32>
    %145 = vector.broadcast %144 : vector<16x1xf32> to vector<16x32xf32>
    %146 = arith.mulf %141, %145 : vector<16x32xf32>
    %147 = vector.broadcast %126 : vector<1x32xf32> to vector<16x32xf32>
    %148 = arith.mulf %146, %147 : vector<16x32xf32>
    %149 = vector.broadcast %128 : vector<1x32xf32> to vector<16x32xf32>
    %150 = arith.addf %148, %149 : vector<16x32xf32>
    %c0_56 = arith.constant 0 : index
    %c0_57 = arith.constant 0 : index
    %c0_58 = arith.constant 0 : index
    %151 = vector.load %arg10[%c0_56, %c0_57, %c0_58] : memref<2x32x64xf32, #tpu.memory_space<vmem>>, vector<1x32x64xf32>
    %152 = vector.shape_cast %151 : vector<1x32x64xf32> to vector<32x64xf32>
    %cst_59 = arith.constant dense<0.000000e+00> : vector<16x64xf32>
    %153 = tpu.matmul %150, %152, %cst_59 {dimension_numbers = #tpu.dot_dimension_numbers<[1], [0], [0], [1], [0, 0, 1, 1], [], []>} : vector<16x32xf32>, vector<32x64xf32>, vector<16x64xf32> -> vector<16x64xf32>
    %c0_60 = arith.constant 0 : index
    %c0_61 = arith.constant 0 : index
    %c0_62 = arith.constant 0 : index
    %154 = vector.load %arg11[%c0_60, %c0_61, %c0_62] : memref<2x1x64xf32, #tpu.memory_space<vmem>>, vector<1x1x64xf32>
    %155 = vector.shape_cast %154 : vector<1x1x64xf32> to vector<1x64xf32>
    %156 = vector.broadcast %155 : vector<1x64xf32> to vector<16x64xf32>
    %157 = arith.addf %153, %156 : vector<16x64xf32>
    %cst_63 = arith.constant 5.000000e-01 : f32
    %158 = vector.broadcast %cst_63 : f32 to vector<16x64xf32>
    %159 = arith.mulf %158, %157 : vector<16x64xf32>
    %cst_64 = arith.constant 0.707106769 : f32
    %160 = vector.broadcast %cst_64 : f32 to vector<16x64xf32>
    %161 = arith.mulf %157, %160 : vector<16x64xf32>
    %162 = math.erf %161 : vector<16x64xf32>
    %cst_65 = arith.constant 1.000000e+00 : f32
    %163 = vector.broadcast %cst_65 : f32 to vector<16x64xf32>
    %164 = arith.addf %163, %162 : vector<16x64xf32>
    %165 = arith.mulf %159, %164 : vector<16x64xf32>
    %c0_66 = arith.constant 0 : index
    %c0_67 = arith.constant 0 : index
    %c0_68 = arith.constant 0 : index
    %166 = vector.load %arg12[%c0_66, %c0_67, %c0_68] : memref<2x64x32xf32, #tpu.memory_space<vmem>>, vector<1x64x32xf32>
    %167 = vector.shape_cast %166 : vector<1x64x32xf32> to vector<64x32xf32>
    %cst_69 = arith.constant dense<0.000000e+00> : vector<16x32xf32>
    %168 = tpu.matmul %165, %167, %cst_69 {dimension_numbers = #tpu.dot_dimension_numbers<[1], [0], [0], [1], [0, 0, 1, 1], [], []>} : vector<16x64xf32>, vector<64x32xf32>, vector<16x32xf32> -> vector<16x32xf32>
    %c0_70 = arith.constant 0 : index
    %c0_71 = arith.constant 0 : index
    %c0_72 = arith.constant 0 : index
    %169 = vector.load %arg13[%c0_70, %c0_71, %c0_72] : memref<2x1x32xf32, #tpu.memory_space<vmem>>, vector<1x1x32xf32>
    %170 = vector.shape_cast %169 : vector<1x1x32xf32> to vector<1x32xf32>
    %171 = vector.broadcast %170 : vector<1x32xf32> to vector<16x32xf32>
    %172 = arith.addf %168, %171 : vector<16x32xf32>
    %173 = arith.addf %172, %150 : vector<16x32xf32>
    %c0_73 = arith.constant 0 : index
    %c0_74 = arith.constant 0 : index
    %c0_75 = arith.constant 0 : index
    %174 = vector.load %arg14[%c0_73, %c0_74, %c0_75] : memref<2x1x32xf32, #tpu.memory_space<vmem>>, vector<1x1x32xf32>
    %175 = vector.shape_cast %174 : vector<1x1x32xf32> to vector<1x32xf32>
    %c0_76 = arith.constant 0 : index
    %c0_77 = arith.constant 0 : index
    %c0_78 = arith.constant 0 : index
    %176 = vector.load %arg15[%c0_76, %c0_77, %c0_78] : memref<2x1x32xf32, #tpu.memory_space<vmem>>, vector<1x1x32xf32>
    %177 = vector.shape_cast %176 : vector<1x1x32xf32> to vector<1x32xf32>
    %cst_79 = arith.constant dense<0.000000e+00> : vector<16xf32>
    %178 = vector.multi_reduction <add>, %173, %cst_79 [1] : vector<16x32xf32> to vector<16xf32>
    %179 = vector.shape_cast %178 : vector<16xf32> to vector<16x1xf32>
    %cst_80 = arith.constant 3.200000e+01 : f32
    %180 = vector.broadcast %cst_80 : f32 to vector<16x1xf32>
    %181 = arith.divf %179, %180 : vector<16x1xf32>
    %182 = vector.broadcast %181 : vector<16x1xf32> to vector<16x32xf32>
    %183 = arith.subf %173, %182 : vector<16x32xf32>
    %184 = arith.mulf %183, %183 : vector<16x32xf32>
    %cst_81 = arith.constant dense<0.000000e+00> : vector<16xf32>
    %185 = vector.multi_reduction <add>, %184, %cst_81 [1] : vector<16x32xf32> to vector<16xf32>
    %186 = vector.shape_cast %185 : vector<16xf32> to vector<16x1xf32>
    %cst_82 = arith.constant 3.200000e+01 : f32
    %187 = vector.broadcast %cst_82 : f32 to vector<16x1xf32>
    %188 = arith.divf %186, %187 : vector<16x1xf32>
    %189 = vector.broadcast %181 : vector<16x1xf32> to vector<16x32xf32>
    %190 = arith.subf %173, %189 : vector<16x32xf32>
    %cst_83 = arith.constant 9.99999996E-13 : f32
    %191 = vector.broadcast %cst_83 : f32 to vector<16x1xf32>
    %192 = arith.addf %188, %191 : vector<16x1xf32>
    %193 = math.rsqrt %192 : vector<16x1xf32>
    %194 = vector.broadcast %193 : vector<16x1xf32> to vector<16x32xf32>
    %195 = arith.mulf %190, %194 : vector<16x32xf32>
    %196 = vector.broadcast %175 : vector<1x32xf32> to vector<16x32xf32>
    %197 = arith.mulf %195, %196 : vector<16x32xf32>
    %198 = vector.broadcast %177 : vector<1x32xf32> to vector<16x32xf32>
    %199 = arith.addf %197, %198 : vector<16x32xf32>
    %c1 = arith.constant 1 : index
    %c0_84 = arith.constant 0 : index
    %c0_85 = arith.constant 0 : index
    %200 = vector.load %arg4[%c1, %c0_84, %c0_85] : memref<2x32x96xf32, #tpu.memory_space<vmem>>, vector<1x32x96xf32>
    %201 = vector.shape_cast %200 : vector<1x32x96xf32> to vector<32x96xf32>
    %cst_86 = arith.constant dense<0.000000e+00> : vector<16x96xf32>
    %202 = tpu.matmul %199, %201, %cst_86 {dimension_numbers = #tpu.dot_dimension_numbers<[1], [0], [0], [1], [0, 0, 1, 1], [], []>} : vector<16x32xf32>, vector<32x96xf32>, vector<16x96xf32> -> vector<16x96xf32>
    %c1_87 = arith.constant 1 : index
    %c0_88 = arith.constant 0 : index
    %c0_89 = arith.constant 0 : index
    %203 = vector.load %arg5[%c1_87, %c0_88, %c0_89] : memref<2x1x96xf32, #tpu.memory_space<vmem>>, vector<1x1x96xf32>
    %204 = vector.shape_cast %203 : vector<1x1x96xf32> to vector<1x96xf32>
    %205 = vector.broadcast %204 : vector<1x96xf32> to vector<16x96xf32>
    %206 = arith.addf %202, %205 : vector<16x96xf32>
    %207 = vector.extract_strided_slice %206 {offsets = [0, 0], sizes = [16, 32], strides = [1, 1]} : vector<16x96xf32> to vector<16x32xf32>
    %208 = vector.extract_strided_slice %206 {offsets = [0, 32], sizes = [16, 32], strides = [1, 1]} : vector<16x96xf32> to vector<16x32xf32>
    %209 = vector.extract_strided_slice %206 {offsets = [0, 64], sizes = [16, 32], strides = [1, 1]} : vector<16x96xf32> to vector<16x32xf32>
    %210 = vector.extract_strided_slice %25 {offsets = [0, 0], sizes = [1, 8], strides = [1, 1]} : vector<2x8xf32> to vector<1x8xf32>
    %211 = vector.extract_strided_slice %207 {offsets = [0, 0], sizes = [8, 16], strides = [1, 1]} : vector<16x32xf32> to vector<8x16xf32>
    %212 = vector.extract_strided_slice %208 {offsets = [0, 0], sizes = [8, 16], strides = [1, 1]} : vector<16x32xf32> to vector<8x16xf32>
    %213 = vector.extract_strided_slice %209 {offsets = [0, 0], sizes = [8, 16], strides = [1, 1]} : vector<16x32xf32> to vector<8x16xf32>
    %cst_90 = arith.constant dense<0.000000e+00> : vector<8x8xf32>
    %214 = tpu.matmul %211, %212, %cst_90 {dimension_numbers = #tpu.dot_dimension_numbers<[1], [1], [0], [0], [0, 0, 1, 0], [], []>} : vector<8x16xf32>, vector<8x16xf32>, vector<8x8xf32> -> vector<8x8xf32>
    %cst_91 = arith.constant 2.500000e-01 : f32
    %215 = vector.broadcast %cst_91 : f32 to vector<8x8xf32>
    %216 = arith.mulf %214, %215 : vector<8x8xf32>
    %217 = vector.broadcast %210 : vector<1x8xf32> to vector<8x8xf32>
    %218 = arith.addf %216, %217 : vector<8x8xf32>
    %cst_92 = arith.constant dense<0xFF800000> : vector<8xf32>
    %219 = vector.multi_reduction <maximumf>, %218, %cst_92 [1] : vector<8x8xf32> to vector<8xf32>
    %220 = vector.shape_cast %219 : vector<8xf32> to vector<8x1xf32>
    %221 = vector.broadcast %220 : vector<8x1xf32> to vector<8x8xf32>
    %222 = arith.subf %218, %221 : vector<8x8xf32>
    %223 = math.exp %222 : vector<8x8xf32>
    %cst_93 = arith.constant dense<0.000000e+00> : vector<8xf32>
    %224 = vector.multi_reduction <add>, %223, %cst_93 [1] : vector<8x8xf32> to vector<8xf32>
    %225 = vector.shape_cast %224 : vector<8xf32> to vector<8x1xf32>
    %226 = tpu.reciprocal %225 {approx = true} : vector<8x1xf32> -> vector<8x1xf32>
    %227 = vector.broadcast %226 : vector<8x1xf32> to vector<8x8xf32>
    %228 = arith.mulf %223, %227 : vector<8x8xf32>
    %cst_94 = arith.constant dense<0.000000e+00> : vector<8x16xf32>
    %229 = tpu.matmul %228, %213, %cst_94 {dimension_numbers = #tpu.dot_dimension_numbers<[1], [0], [0], [1], [0, 0, 1, 1], [], []>} : vector<8x8xf32>, vector<8x16xf32>, vector<8x16xf32> -> vector<8x16xf32>
    %230 = vector.extract_strided_slice %207 {offsets = [0, 16], sizes = [8, 16], strides = [1, 1]} : vector<16x32xf32> to vector<8x16xf32>
    %231 = vector.extract_strided_slice %208 {offsets = [0, 16], sizes = [8, 16], strides = [1, 1]} : vector<16x32xf32> to vector<8x16xf32>
    %232 = vector.extract_strided_slice %209 {offsets = [0, 16], sizes = [8, 16], strides = [1, 1]} : vector<16x32xf32> to vector<8x16xf32>
    %cst_95 = arith.constant dense<0.000000e+00> : vector<8x8xf32>
    %233 = tpu.matmul %230, %231, %cst_95 {dimension_numbers = #tpu.dot_dimension_numbers<[1], [1], [0], [0], [0, 0, 1, 0], [], []>} : vector<8x16xf32>, vector<8x16xf32>, vector<8x8xf32> -> vector<8x8xf32>
    %cst_96 = arith.constant 2.500000e-01 : f32
    %234 = vector.broadcast %cst_96 : f32 to vector<8x8xf32>
    %235 = arith.mulf %233, %234 : vector<8x8xf32>
    %236 = vector.broadcast %210 : vector<1x8xf32> to vector<8x8xf32>
    %237 = arith.addf %235, %236 : vector<8x8xf32>
    %cst_97 = arith.constant dense<0xFF800000> : vector<8xf32>
    %238 = vector.multi_reduction <maximumf>, %237, %cst_97 [1] : vector<8x8xf32> to vector<8xf32>
    %239 = vector.shape_cast %238 : vector<8xf32> to vector<8x1xf32>
    %240 = vector.broadcast %239 : vector<8x1xf32> to vector<8x8xf32>
    %241 = arith.subf %237, %240 : vector<8x8xf32>
    %242 = math.exp %241 : vector<8x8xf32>
    %cst_98 = arith.constant dense<0.000000e+00> : vector<8xf32>
    %243 = vector.multi_reduction <add>, %242, %cst_98 [1] : vector<8x8xf32> to vector<8xf32>
    %244 = vector.shape_cast %243 : vector<8xf32> to vector<8x1xf32>
    %245 = tpu.reciprocal %244 {approx = true} : vector<8x1xf32> -> vector<8x1xf32>
    %246 = vector.broadcast %245 : vector<8x1xf32> to vector<8x8xf32>
    %247 = arith.mulf %242, %246 : vector<8x8xf32>
    %cst_99 = arith.constant dense<0.000000e+00> : vector<8x16xf32>
    %248 = tpu.matmul %247, %232, %cst_99 {dimension_numbers = #tpu.dot_dimension_numbers<[1], [0], [0], [1], [0, 0, 1, 1], [], []>} : vector<8x8xf32>, vector<8x16xf32>, vector<8x16xf32> -> vector<8x16xf32>
    %249 = tpu.concatenate %229, %248 in 1 : vector<8x16xf32>, vector<8x16xf32> -> vector<8x32xf32>
    %250 = vector.extract_strided_slice %25 {offsets = [1, 0], sizes = [1, 8], strides = [1, 1]} : vector<2x8xf32> to vector<1x8xf32>
    %251 = vector.extract_strided_slice %207 {offsets = [8, 0], sizes = [8, 16], strides = [1, 1]} : vector<16x32xf32> to vector<8x16xf32>
    %252 = vector.extract_strided_slice %208 {offsets = [8, 0], sizes = [8, 16], strides = [1, 1]} : vector<16x32xf32> to vector<8x16xf32>
    %253 = vector.extract_strided_slice %209 {offsets = [8, 0], sizes = [8, 16], strides = [1, 1]} : vector<16x32xf32> to vector<8x16xf32>
    %cst_100 = arith.constant dense<0.000000e+00> : vector<8x8xf32>
    %254 = tpu.matmul %251, %252, %cst_100 {dimension_numbers = #tpu.dot_dimension_numbers<[1], [1], [0], [0], [0, 0, 1, 0], [], []>} : vector<8x16xf32>, vector<8x16xf32>, vector<8x8xf32> -> vector<8x8xf32>
    %cst_101 = arith.constant 2.500000e-01 : f32
    %255 = vector.broadcast %cst_101 : f32 to vector<8x8xf32>
    %256 = arith.mulf %254, %255 : vector<8x8xf32>
    %257 = vector.broadcast %250 : vector<1x8xf32> to vector<8x8xf32>
    %258 = arith.addf %256, %257 : vector<8x8xf32>
    %cst_102 = arith.constant dense<0xFF800000> : vector<8xf32>
    %259 = vector.multi_reduction <maximumf>, %258, %cst_102 [1] : vector<8x8xf32> to vector<8xf32>
    %260 = vector.shape_cast %259 : vector<8xf32> to vector<8x1xf32>
    %261 = vector.broadcast %260 : vector<8x1xf32> to vector<8x8xf32>
    %262 = arith.subf %258, %261 : vector<8x8xf32>
    %263 = math.exp %262 : vector<8x8xf32>
    %cst_103 = arith.constant dense<0.000000e+00> : vector<8xf32>
    %264 = vector.multi_reduction <add>, %263, %cst_103 [1] : vector<8x8xf32> to vector<8xf32>
    %265 = vector.shape_cast %264 : vector<8xf32> to vector<8x1xf32>
    %266 = tpu.reciprocal %265 {approx = true} : vector<8x1xf32> -> vector<8x1xf32>
    %267 = vector.broadcast %266 : vector<8x1xf32> to vector<8x8xf32>
    %268 = arith.mulf %263, %267 : vector<8x8xf32>
    %cst_104 = arith.constant dense<0.000000e+00> : vector<8x16xf32>
    %269 = tpu.matmul %268, %253, %cst_104 {dimension_numbers = #tpu.dot_dimension_numbers<[1], [0], [0], [1], [0, 0, 1, 1], [], []>} : vector<8x8xf32>, vector<8x16xf32>, vector<8x16xf32> -> vector<8x16xf32>
    %270 = vector.extract_strided_slice %207 {offsets = [8, 16], sizes = [8, 16], strides = [1, 1]} : vector<16x32xf32> to vector<8x16xf32>
    %271 = vector.extract_strided_slice %208 {offsets = [8, 16], sizes = [8, 16], strides = [1, 1]} : vector<16x32xf32> to vector<8x16xf32>
    %272 = vector.extract_strided_slice %209 {offsets = [8, 16], sizes = [8, 16], strides = [1, 1]} : vector<16x32xf32> to vector<8x16xf32>
    %cst_105 = arith.constant dense<0.000000e+00> : vector<8x8xf32>
    %273 = tpu.matmul %270, %271, %cst_105 {dimension_numbers = #tpu.dot_dimension_numbers<[1], [1], [0], [0], [0, 0, 1, 0], [], []>} : vector<8x16xf32>, vector<8x16xf32>, vector<8x8xf32> -> vector<8x8xf32>
    %cst_106 = arith.constant 2.500000e-01 : f32
    %274 = vector.broadcast %cst_106 : f32 to vector<8x8xf32>
    %275 = arith.mulf %273, %274 : vector<8x8xf32>
    %276 = vector.broadcast %250 : vector<1x8xf32> to vector<8x8xf32>
    %277 = arith.addf %275, %276 : vector<8x8xf32>
    %cst_107 = arith.constant dense<0xFF800000> : vector<8xf32>
    %278 = vector.multi_reduction <maximumf>, %277, %cst_107 [1] : vector<8x8xf32> to vector<8xf32>
    %279 = vector.shape_cast %278 : vector<8xf32> to vector<8x1xf32>
    %280 = vector.broadcast %279 : vector<8x1xf32> to vector<8x8xf32>
    %281 = arith.subf %277, %280 : vector<8x8xf32>
    %282 = math.exp %281 : vector<8x8xf32>
    %cst_108 = arith.constant dense<0.000000e+00> : vector<8xf32>
    %283 = vector.multi_reduction <add>, %282, %cst_108 [1] : vector<8x8xf32> to vector<8xf32>
    %284 = vector.shape_cast %283 : vector<8xf32> to vector<8x1xf32>
    %285 = tpu.reciprocal %284 {approx = true} : vector<8x1xf32> -> vector<8x1xf32>
    %286 = vector.broadcast %285 : vector<8x1xf32> to vector<8x8xf32>
    %287 = arith.mulf %282, %286 : vector<8x8xf32>
    %cst_109 = arith.constant dense<0.000000e+00> : vector<8x16xf32>
    %288 = tpu.matmul %287, %272, %cst_109 {dimension_numbers = #tpu.dot_dimension_numbers<[1], [0], [0], [1], [0, 0, 1, 1], [], []>} : vector<8x8xf32>, vector<8x16xf32>, vector<8x16xf32> -> vector<8x16xf32>
    %289 = tpu.concatenate %269, %288 in 1 : vector<8x16xf32>, vector<8x16xf32> -> vector<8x32xf32>
    %290 = tpu.concatenate %249, %289 in 0 : vector<8x32xf32>, vector<8x32xf32> -> vector<16x32xf32>
    %c1_110 = arith.constant 1 : index
    %c0_111 = arith.constant 0 : index
    %c0_112 = arith.constant 0 : index
    %291 = vector.load %arg6[%c1_110, %c0_111, %c0_112] : memref<2x32x32xf32, #tpu.memory_space<vmem>>, vector<1x32x32xf32>
    %292 = vector.shape_cast %291 : vector<1x32x32xf32> to vector<32x32xf32>
    %cst_113 = arith.constant dense<0.000000e+00> : vector<16x32xf32>
    %293 = tpu.matmul %290, %292, %cst_113 {dimension_numbers = #tpu.dot_dimension_numbers<[1], [0], [0], [1], [0, 0, 1, 1], [], []>} : vector<16x32xf32>, vector<32x32xf32>, vector<16x32xf32> -> vector<16x32xf32>
    %c1_114 = arith.constant 1 : index
    %c0_115 = arith.constant 0 : index
    %c0_116 = arith.constant 0 : index
    %294 = vector.load %arg7[%c1_114, %c0_115, %c0_116] : memref<2x1x32xf32, #tpu.memory_space<vmem>>, vector<1x1x32xf32>
    %295 = vector.shape_cast %294 : vector<1x1x32xf32> to vector<1x32xf32>
    %296 = vector.broadcast %295 : vector<1x32xf32> to vector<16x32xf32>
    %297 = arith.addf %293, %296 : vector<16x32xf32>
    %298 = arith.addf %297, %199 : vector<16x32xf32>
    %c1_117 = arith.constant 1 : index
    %c0_118 = arith.constant 0 : index
    %c0_119 = arith.constant 0 : index
    %299 = vector.load %arg8[%c1_117, %c0_118, %c0_119] : memref<2x1x32xf32, #tpu.memory_space<vmem>>, vector<1x1x32xf32>
    %300 = vector.shape_cast %299 : vector<1x1x32xf32> to vector<1x32xf32>
    %c1_120 = arith.constant 1 : index
    %c0_121 = arith.constant 0 : index
    %c0_122 = arith.constant 0 : index
    %301 = vector.load %arg9[%c1_120, %c0_121, %c0_122] : memref<2x1x32xf32, #tpu.memory_space<vmem>>, vector<1x1x32xf32>
    %302 = vector.shape_cast %301 : vector<1x1x32xf32> to vector<1x32xf32>
    %cst_123 = arith.constant dense<0.000000e+00> : vector<16xf32>
    %303 = vector.multi_reduction <add>, %298, %cst_123 [1] : vector<16x32xf32> to vector<16xf32>
    %304 = vector.shape_cast %303 : vector<16xf32> to vector<16x1xf32>
    %cst_124 = arith.constant 3.200000e+01 : f32
    %305 = vector.broadcast %cst_124 : f32 to vector<16x1xf32>
    %306 = arith.divf %304, %305 : vector<16x1xf32>
    %307 = vector.broadcast %306 : vector<16x1xf32> to vector<16x32xf32>
    %308 = arith.subf %298, %307 : vector<16x32xf32>
    %309 = arith.mulf %308, %308 : vector<16x32xf32>
    %cst_125 = arith.constant dense<0.000000e+00> : vector<16xf32>
    %310 = vector.multi_reduction <add>, %309, %cst_125 [1] : vector<16x32xf32> to vector<16xf32>
    %311 = vector.shape_cast %310 : vector<16xf32> to vector<16x1xf32>
    %cst_126 = arith.constant 3.200000e+01 : f32
    %312 = vector.broadcast %cst_126 : f32 to vector<16x1xf32>
    %313 = arith.divf %311, %312 : vector<16x1xf32>
    %314 = vector.broadcast %306 : vector<16x1xf32> to vector<16x32xf32>
    %315 = arith.subf %298, %314 : vector<16x32xf32>
    %cst_127 = arith.constant 9.99999996E-13 : f32
    %316 = vector.broadcast %cst_127 : f32 to vector<16x1xf32>
    %317 = arith.addf %313, %316 : vector<16x1xf32>
    %318 = math.rsqrt %317 : vector<16x1xf32>
    %319 = vector.broadcast %318 : vector<16x1xf32> to vector<16x32xf32>
    %320 = arith.mulf %315, %319 : vector<16x32xf32>
    %321 = vector.broadcast %300 : vector<1x32xf32> to vector<16x32xf32>
    %322 = arith.mulf %320, %321 : vector<16x32xf32>
    %323 = vector.broadcast %302 : vector<1x32xf32> to vector<16x32xf32>
    %324 = arith.addf %322, %323 : vector<16x32xf32>
    %c1_128 = arith.constant 1 : index
    %c0_129 = arith.constant 0 : index
    %c0_130 = arith.constant 0 : index
    %325 = vector.load %arg10[%c1_128, %c0_129, %c0_130] : memref<2x32x64xf32, #tpu.memory_space<vmem>>, vector<1x32x64xf32>
    %326 = vector.shape_cast %325 : vector<1x32x64xf32> to vector<32x64xf32>
    %cst_131 = arith.constant dense<0.000000e+00> : vector<16x64xf32>
    %327 = tpu.matmul %324, %326, %cst_131 {dimension_numbers = #tpu.dot_dimension_numbers<[1], [0], [0], [1], [0, 0, 1, 1], [], []>} : vector<16x32xf32>, vector<32x64xf32>, vector<16x64xf32> -> vector<16x64xf32>
    %c1_132 = arith.constant 1 : index
    %c0_133 = arith.constant 0 : index
    %c0_134 = arith.constant 0 : index
    %328 = vector.load %arg11[%c1_132, %c0_133, %c0_134] : memref<2x1x64xf32, #tpu.memory_space<vmem>>, vector<1x1x64xf32>
    %329 = vector.shape_cast %328 : vector<1x1x64xf32> to vector<1x64xf32>
    %330 = vector.broadcast %329 : vector<1x64xf32> to vector<16x64xf32>
    %331 = arith.addf %327, %330 : vector<16x64xf32>
    %cst_135 = arith.constant 5.000000e-01 : f32
    %332 = vector.broadcast %cst_135 : f32 to vector<16x64xf32>
    %333 = arith.mulf %332, %331 : vector<16x64xf32>
    %cst_136 = arith.constant 0.707106769 : f32
    %334 = vector.broadcast %cst_136 : f32 to vector<16x64xf32>
    %335 = arith.mulf %331, %334 : vector<16x64xf32>
    %336 = math.erf %335 : vector<16x64xf32>
    %cst_137 = arith.constant 1.000000e+00 : f32
    %337 = vector.broadcast %cst_137 : f32 to vector<16x64xf32>
    %338 = arith.addf %337, %336 : vector<16x64xf32>
    %339 = arith.mulf %333, %338 : vector<16x64xf32>
    %c1_138 = arith.constant 1 : index
    %c0_139 = arith.constant 0 : index
    %c0_140 = arith.constant 0 : index
    %340 = vector.load %arg12[%c1_138, %c0_139, %c0_140] : memref<2x64x32xf32, #tpu.memory_space<vmem>>, vector<1x64x32xf32>
    %341 = vector.shape_cast %340 : vector<1x64x32xf32> to vector<64x32xf32>
    %cst_141 = arith.constant dense<0.000000e+00> : vector<16x32xf32>
    %342 = tpu.matmul %339, %341, %cst_141 {dimension_numbers = #tpu.dot_dimension_numbers<[1], [0], [0], [1], [0, 0, 1, 1], [], []>} : vector<16x64xf32>, vector<64x32xf32>, vector<16x32xf32> -> vector<16x32xf32>
    %c1_142 = arith.constant 1 : index
    %c0_143 = arith.constant 0 : index
    %c0_144 = arith.constant 0 : index
    %343 = vector.load %arg13[%c1_142, %c0_143, %c0_144] : memref<2x1x32xf32, #tpu.memory_space<vmem>>, vector<1x1x32xf32>
    %344 = vector.shape_cast %343 : vector<1x1x32xf32> to vector<1x32xf32>
    %345 = vector.broadcast %344 : vector<1x32xf32> to vector<16x32xf32>
    %346 = arith.addf %342, %345 : vector<16x32xf32>
    %347 = arith.addf %346, %324 : vector<16x32xf32>
    %c1_145 = arith.constant 1 : index
    %c0_146 = arith.constant 0 : index
    %c0_147 = arith.constant 0 : index
    %348 = vector.load %arg14[%c1_145, %c0_146, %c0_147] : memref<2x1x32xf32, #tpu.memory_space<vmem>>, vector<1x1x32xf32>
    %349 = vector.shape_cast %348 : vector<1x1x32xf32> to vector<1x32xf32>
    %c1_148 = arith.constant 1 : index
    %c0_149 = arith.constant 0 : index
    %c0_150 = arith.constant 0 : index
    %350 = vector.load %arg15[%c1_148, %c0_149, %c0_150] : memref<2x1x32xf32, #tpu.memory_space<vmem>>, vector<1x1x32xf32>
    %351 = vector.shape_cast %350 : vector<1x1x32xf32> to vector<1x32xf32>
    %cst_151 = arith.constant dense<0.000000e+00> : vector<16xf32>
    %352 = vector.multi_reduction <add>, %347, %cst_151 [1] : vector<16x32xf32> to vector<16xf32>
    %353 = vector.shape_cast %352 : vector<16xf32> to vector<16x1xf32>
    %cst_152 = arith.constant 3.200000e+01 : f32
    %354 = vector.broadcast %cst_152 : f32 to vector<16x1xf32>
    %355 = arith.divf %353, %354 : vector<16x1xf32>
    %356 = vector.broadcast %355 : vector<16x1xf32> to vector<16x32xf32>
    %357 = arith.subf %347, %356 : vector<16x32xf32>
    %358 = arith.mulf %357, %357 : vector<16x32xf32>
    %cst_153 = arith.constant dense<0.000000e+00> : vector<16xf32>
    %359 = vector.multi_reduction <add>, %358, %cst_153 [1] : vector<16x32xf32> to vector<16xf32>
    %360 = vector.shape_cast %359 : vector<16xf32> to vector<16x1xf32>
    %cst_154 = arith.constant 3.200000e+01 : f32
    %361 = vector.broadcast %cst_154 : f32 to vector<16x1xf32>
    %362 = arith.divf %360, %361 : vector<16x1xf32>
    %363 = vector.broadcast %355 : vector<16x1xf32> to vector<16x32xf32>
    %364 = arith.subf %347, %363 : vector<16x32xf32>
    %cst_155 = arith.constant 9.99999996E-13 : f32
    %365 = vector.broadcast %cst_155 : f32 to vector<16x1xf32>
    %366 = arith.addf %362, %365 : vector<16x1xf32>
    %367 = math.rsqrt %366 : vector<16x1xf32>
    %368 = vector.broadcast %367 : vector<16x1xf32> to vector<16x32xf32>
    %369 = arith.mulf %364, %368 : vector<16x32xf32>
    %370 = vector.broadcast %349 : vector<1x32xf32> to vector<16x32xf32>
    %371 = arith.mulf %369, %370 : vector<16x32xf32>
    %372 = vector.broadcast %351 : vector<1x32xf32> to vector<16x32xf32>
    %373 = arith.addf %371, %372 : vector<16x32xf32>
    %374 = vector.extract_strided_slice %373 {offsets = [0, 0], sizes = [1, 32], strides = [1, 1]} : vector<16x32xf32> to vector<1x32xf32>
    %375 = vector.extract_strided_slice %373 {offsets = [8, 0], sizes = [1, 32], strides = [1, 1]} : vector<16x32xf32> to vector<1x32xf32>
    %376 = tpu.concatenate %374, %375 in 0 : vector<1x32xf32>, vector<1x32xf32> -> vector<2x32xf32>
    %c0_156 = arith.constant 0 : index
    %c0_157 = arith.constant 0 : index
    %377 = vector.load %arg16[%c0_156, %c0_157] : memref<32x32xf32, #tpu.memory_space<vmem>>, vector<32x32xf32>
    %cst_158 = arith.constant dense<0.000000e+00> : vector<2x32xf32>
    %378 = tpu.matmul %376, %377, %cst_158 {dimension_numbers = #tpu.dot_dimension_numbers<[1], [0], [0], [1], [0, 0, 1, 1], [], []>} : vector<2x32xf32>, vector<32x32xf32>, vector<2x32xf32> -> vector<2x32xf32>
    %c0_159 = arith.constant 0 : index
    %c0_160 = arith.constant 0 : index
    %379 = vector.load %arg17[%c0_159, %c0_160] : memref<1x32xf32, #tpu.memory_space<vmem>>, vector<1x32xf32>
    %380 = vector.broadcast %379 : vector<1x32xf32> to vector<2x32xf32>
    %381 = arith.addf %378, %380 : vector<2x32xf32>
    %382 = math.tanh %381 : vector<2x32xf32>
    %c0_161 = arith.constant 0 : index
    %c0_162 = arith.constant 0 : index
    %383 = vector.load %arg18[%c0_161, %c0_162] : memref<32x5xf32, #tpu.memory_space<vmem>>, vector<32x5xf32>
    %cst_163 = arith.constant dense<0.000000e+00> : vector<2x5xf32>
    %384 = tpu.matmul %382, %383, %cst_163 {dimension_numbers = #tpu.dot_dimension_numbers<[1], [0], [0], [1], [0, 0, 1, 1], [], []>} : vector<2x32xf32>, vector<32x5xf32>, vector<2x5xf32> -> vector<2x5xf32>
    %c0_164 = arith.constant 0 : index
    %c0_165 = arith.constant 0 : index
    %385 = vector.load %arg19[%c0_164, %c0_165] : memref<1x5xf32, #tpu.memory_space<vmem>>, vector<1x5xf32>
    %386 = vector.broadcast %385 : vector<1x5xf32> to vector<2x5xf32>
    %387 = arith.addf %384, %386 : vector<2x5xf32>
    %cst_166 = arith.constant 0.000000e+00 : f32
    %388 = vector.broadcast %cst_166 : f32 to vector<2x123xf32>
    %389 = tpu.concatenate %387, %388 in 1 : vector<2x5xf32>, vector<2x123xf32> -> vector<2x128xf32>
    %cst_167 = arith.constant 0.000000e+00 : f32
    %390 = vector.broadcast %cst_167 : f32 to vector<6x128xf32>
    %391 = tpu.concatenate %389, %390 in 0 : vector<2x128xf32>, vector<6x128xf32> -> vector<8x128xf32>
    %c0_168 = arith.constant 0 : index
    %c0_169 = arith.constant 0 : index
    %392 = vector.load %arg20[%c0_168, %c0_169] : memref<8x128xf32, #tpu.memory_space<vmem>>, vector<8x128xf32>
    tpu.vector_store %arg20[%c0_168, %c0_169], %391 {strides = array<i32>} : memref<8x128xf32, #tpu.memory_space<vmem>>, vector<8x128xf32>,
    return
  }
}

</mosaic_0001>

<llo_original>
// kernel: bert_forward.1
$region0: #{bert_forward.1}
  #allocation0 [shape = 'u32[]', space=smem, size = 0x4, offset = 0x4, fixed_abs, tag = 'smem constant byte address 0x4 - core index']
  #allocation1 [shape = 'u32[144,128]{1,0:T(1,128)}', space=vmem, size = 0x12000, scoped, tag = 'internal scratch']
  %s0 = inlined_call_operand.vmem [shape: f32[16,32], index: 0, kind: input, shape index: {}]
  %s1 = inlined_call_operand.vmem [shape: f32[2,8], index: 1, kind: input, shape index: {}]
  %s2 = inlined_call_operand.vmem [shape: f32[1,32], index: 2, kind: input, shape index: {}]
  %s3 = inlined_call_operand.vmem [shape: f32[1,32], index: 3, kind: input, shape index: {}]
  %s4 = inlined_call_operand.vmem [shape: f32[2,32,96], index: 4, kind: input, shape index: {}]
  %s5 = inlined_call_operand.vmem [shape: f32[2,1,96], index: 5, kind: input, shape index: {}]
  %s6 = inlined_call_operand.vmem [shape: f32[2,32,32], index: 6, kind: input, shape index: {}]
  %s7 = inlined_call_operand.vmem [shape: f32[2,1,32], index: 7, kind: input, shape index: {}]
  %s8 = inlined_call_operand.vmem [shape: f32[2,1,32], index: 8, kind: input, shape index: {}]
  %s9 = inlined_call_operand.vmem [shape: f32[2,1,32], index: 9, kind: input, shape index: {}]
  %s10 = inlined_call_operand.vmem [shape: f32[2,32,64], index: 10, kind: input, shape index: {}]
  %s11 = inlined_call_operand.vmem [shape: f32[2,1,64], index: 11, kind: input, shape index: {}]
  %s12 = inlined_call_operand.vmem [shape: f32[2,64,32], index: 12, kind: input, shape index: {}]
  %s13 = inlined_call_operand.vmem [shape: f32[2,1,32], index: 13, kind: input, shape index: {}]
  %s14 = inlined_call_operand.vmem [shape: f32[2,1,32], index: 14, kind: input, shape index: {}]
  %s15 = inlined_call_operand.vmem [shape: f32[2,1,32], index: 15, kind: input, shape index: {}]
  %s16 = inlined_call_operand.vmem [shape: f32[32,32], index: 16, kind: input, shape index: {}]
  %s17 = inlined_call_operand.vmem [shape: f32[1,32], index: 17, kind: input, shape index: {}]
  %s18 = inlined_call_operand.vmem [shape: f32[32,5], index: 18, kind: input, shape index: {}]
  %s19 = inlined_call_operand.vmem [shape: f32[1,5], index: 19, kind: input, shape index: {}]
  %s20 = inlined_call_operand.vmem [shape: f32[8,128], index: 20, kind: output, shape index: {}]
  %s21 = sld [smem:[#allocation0]]
  $region90: #{bert_forward.1} parent=0
    _
  %s23 = ssub.s32 1, %s21
  %s24 = scalar_select 0, %s23, %s21
  // Predicated region
  $region2: #{bert_forward.1} parent=0 // pred_check
    _
  $region3: #{bert_forward.1} parent=0 // pred_check_branch
    %26 = sbr.rel (0) target = $region5
  $region4: #{bert_forward.1} parent=0 // pred_region
    _
  $region5: #{bert_forward.1} parent=0 // pred_fallthru
    _
  // Predicated region
  $region6: #{bert_forward.1} parent=0 // pred_check
    _
  $region7: #{bert_forward.1} parent=0 // pred_check_branch
    %28 = sbr.rel (0) target = $region9
  $region8: #{bert_forward.1} parent=0 // pred_region
    _
  $region9: #{bert_forward.1} parent=0 // pred_fallthru
    _
  // Predicated region
  $region10: #{bert_forward.1} parent=0 // pred_check
    _
  $region11: #{bert_forward.1} parent=0 // pred_check_branch
    %30 = sbr.rel (0) target = $region13
  $region12: #{bert_forward.1} parent=0 // pred_region
    _
  $region13: #{bert_forward.1} parent=0 // pred_fallthru
    _
  // Predicated region
  $region14: #{bert_forward.1} parent=0 // pred_check
    _
  $region15: #{bert_forward.1} parent=0 // pred_check_branch
    %32 = sbr.rel (0) target = $region17
  $region16: #{bert_forward.1} parent=0 // pred_region
    _
  $region17: #{bert_forward.1} parent=0 // pred_fallthru
    _
  // Predicated region
  $region18: #{bert_forward.1} parent=0 // pred_check
    _
  $region19: #{bert_forward.1} parent=0 // pred_check_branch
    %34 = sbr.rel (0) target = $region21
  $region20: #{bert_forward.1} parent=0 // pred_region
    _
  $region21: #{bert_forward.1} parent=0 // pred_fallthru
    _
  // Predicated region
  $region22: #{bert_forward.1} parent=0 // pred_check
    _
  $region23: #{bert_forward.1} parent=0 // pred_check_branch
    %36 = sbr.rel (0) target = $region25
  $region24: #{bert_forward.1} parent=0 // pred_region
    _
  $region25: #{bert_forward.1} parent=0 // pred_fallthru
    _
  // Predicated region
  $region26: #{bert_forward.1} parent=0 // pred_check
    _
  $region27: #{bert_forward.1} parent=0 // pred_check_branch
    %38 = sbr.rel (0) target = $region29
  $region28: #{bert_forward.1} parent=0 // pred_region
    _
  $region29: #{bert_forward.1} parent=0 // pred_fallthru
    _
  // Predicated region
  $region30: #{bert_forward.1} parent=0 // pred_check
    _
  $region31: #{bert_forward.1} parent=0 // pred_check_branch
    %40 = sbr.rel (0) target = $region33
  $region32: #{bert_forward.1} parent=0 // pred_region
    _
  $region33: #{bert_forward.1} parent=0 // pred_fallthru
    _
  // Predicated region
  $region34: #{bert_forward.1} parent=0 // pred_check
    _
  $region35: #{bert_forward.1} parent=0 // pred_check_branch
    %42 = sbr.rel (0) target = $region37
  $region36: #{bert_forward.1} parent=0 // pred_region
    _
  $region37: #{bert_forward.1} parent=0 // pred_fallthru
    _
  // Predicated region
  $region38: #{bert_forward.1} parent=0 // pred_check
    _
  $region39: #{bert_forward.1} parent=0 // pred_check_branch
    %44 = sbr.rel (0) target = $region41
  $region40: #{bert_forward.1} parent=0 // pred_region
    _
  $region41: #{bert_forward.1} parent=0 // pred_fallthru
    _
  // Predicated region
  $region42: #{bert_forward.1} parent=0 // pred_check
    _
  $region43: #{bert_forward.1} parent=0 // pred_check_branch
    %46 = sbr.rel (0) target = $region45
  $region44: #{bert_forward.1} parent=0 // pred_region
    _
  $region45: #{bert_forward.1} parent=0 // pred_fallthru
    _
  // Predicated region
  $region46: #{bert_forward.1} parent=0 // pred_check
    _
  $region47: #{bert_forward.1} parent=0 // pred_check_branch
    %48 = sbr.rel (0) target = $region49
  $region48: #{bert_forward.1} parent=0 // pred_region
    _
  $region49: #{bert_forward.1} parent=0 // pred_fallthru
    _
  // Predicated region
  $region50: #{bert_forward.1} parent=0 // pred_check
    _
  $region51: #{bert_forward.1} parent=0 // pred_check_branch
    %50 = sbr.rel (0) target = $region53
  $region52: #{bert_forward.1} parent=0 // pred_region
    _
  $region53: #{bert_forward.1} parent=0 // pred_fallthru
    _
  // Predicated region
  $region54: #{bert_forward.1} parent=0 // pred_check
    _
  $region55: #{bert_forward.1} parent=0 // pred_check_branch
    %52 = sbr.rel (0) target = $region57
  $region56: #{bert_forward.1} parent=0 // pred_region
    _
  $region57: #{bert_forward.1} parent=0 // pred_fallthru
    _
  // Predicated region
  $region58: #{bert_forward.1} parent=0 // pred_check
    _
  $region59: #{bert_forward.1} parent=0 // pred_check_branch
    %54 = sbr.rel (0) target = $region61
  $region60: #{bert_forward.1} parent=0 // pred_region
    _
  $region61: #{bert_forward.1} parent=0 // pred_fallthru
    _
  // Predicated region
  $region62: #{bert_forward.1} parent=0 // pred_check
    _
  $region63: #{bert_forward.1} parent=0 // pred_check_branch
    %56 = sbr.rel (0) target = $region65
  $region64: #{bert_forward.1} parent=0 // pred_region
    _
  $region65: #{bert_forward.1} parent=0 // pred_fallthru
    _
  // Predicated region
  $region66: #{bert_forward.1} parent=0 // pred_check
    _
  $region67: #{bert_forward.1} parent=0 // pred_check_branch
    %58 = sbr.rel (0) target = $region69
  $region68: #{bert_forward.1} parent=0 // pred_region
    _
  $region69: #{bert_forward.1} parent=0 // pred_fallthru
    _
  // Predicated region
  $region70: #{bert_forward.1} parent=0 // pred_check
    _
  $region71: #{bert_forward.1} parent=0 // pred_check_branch
    %60 = sbr.rel (0) target = $region73
  $region72: #{bert_forward.1} parent=0 // pred_region
    _
  $region73: #{bert_forward.1} parent=0 // pred_fallthru
    _
  // Predicated region
  $region74: #{bert_forward.1} parent=0 // pred_check
    _
  $region75: #{bert_forward.1} parent=0 // pred_check_branch
    %62 = sbr.rel (0) target = $region77
  $region76: #{bert_forward.1} parent=0 // pred_region
    _
  $region77: #{bert_forward.1} parent=0 // pred_fallthru
    _
  // Predicated region
  $region78: #{bert_forward.1} parent=0 // pred_check
    _
  $region79: #{bert_forward.1} parent=0 // pred_check_branch
    %64 = sbr.rel (0) target = $region81
  $region80: #{bert_forward.1} parent=0 // pred_region
    _
  $region81: #{bert_forward.1} parent=0 // pred_fallthru
    _
  %v65 = vld [vmem:[%s0] sm:$0xff]
  %v66 = vld [vmem:[%s0 + $0x8] sm:$0xff]
  %v67 = vld [vmem:[%s2] sm:$0x1]
  %v68 = vld [vmem:[%s3] sm:$0x1]
  %vm69 = vcmask 261120
  %v70 = vsel %vm69, %v65, 0.0
  %71 = vadd.xlane.f32.xlu0 %v70
  %v72 = vpop.xlane.xlu0 %71
  %v73 = vsel %vm69, %v66, 0.0
  %74 = vadd.xlane.f32.xlu0 %v73
  %v75 = vpop.xlane.xlu0 %74
  %v76 = vrcp.pop 32.0
  %v77 = vmul.f32 %v72, %v76
  %v78 = vmul.f32 %v75, %v76
  %v79 = vsub.f32 %v65, %v77
  %v80 = vsub.f32 %v66, %v78
  %v81 = vmul.f32 %v79, %v79
  %v82 = vmul.f32 %v80, %v80
  %v83 = vsel %vm69, %v81, 0.0
  %84 = vadd.xlane.f32.xlu0 %v83
  %v85 = vpop.xlane.xlu0 %84
  %v86 = vsel %vm69, %v82, 0.0
  %87 = vadd.xlane.f32.xlu0 %v86
  %v88 = vpop.xlane.xlu0 %87
  %v89 = vmul.f32 %v85, %v76
  %v90 = vmul.f32 %v88, %v76
  %v91 = vadd.f32 %v89, 1e-12
  %v92 = vadd.f32 %v90, 1e-12
  %v93 = vrsqrt.pop %v91
  %v94 = vrsqrt.pop %v92
  %v95 = vmul.f32 %v79, %v93
  %v96 = vmul.f32 %v80, %v94
  %v98 = vlaneseq
  %v99 = vshrl.u32 %v98, 7
  %v100 = vsub.s32 0, %v99
  %v101 = vrot.slane %v67, %v100
  %v103 = vmul.f32 %v95, %v101
  %v104 = vmul.f32 %v96, %v101
  %v106 = vlaneseq
  %v107 = vshrl.u32 %v106, 7
  %v108 = vsub.s32 0, %v107
  %v109 = vrot.slane %v68, %v108
  %v111 = vadd.f32 %v103, %v109
  %v112 = vadd.f32 %v104, %v109
  %v113 = vld [vmem:[%s1] sm:$0x3]
  %v114 = vld [vmem:[%s4] sm:$0xff]
  %v115 = vld [vmem:[%s4 + $0x8] sm:$0xff]
  %v116 = vld [vmem:[%s4 + $0x10] sm:$0xff]
  %v117 = vld [vmem:[%s4 + $0x18] sm:$0xff]
  %v118 = vld [vmem:[%s5] sm:$0x1]
  %v120 = vlaneseq
  %v121 = vshrl.u32 %v120, 7
  %v122 = vsub.s32 0, %v121
  %v123 = vrot.slane %v118, %v122
  %v126 = vsel %vm69, %v111, 0
  %v129 = vsel %vm69, %v112, 0
  %131 = vmatprep.subr.mxu0 0.0
  %132 = vmatpush1.msra.mxu0 %v114
  %133 = vmatprep.subr.mxu0 0.0
  %134 = vmatpush1.msra.mxu0 %v115
  %135 = vmatprep.subr.mxu0 0.0
  %136 = vmatpush1.msra.mxu0 %v116
  %137 = vmatprep.subr.mxu0 0.0
  %138 = vmatpush1.msra.mxu0 %v117
  %139 = vmatprep.subr.mxu0 0.0
  %140 = vmatpush1.msra.mxu0 0.0
  %141 = vmatprep.subr.mxu0 0.0
  %142 = vmatpush1.msra.mxu0 0.0
  %143 = vmatprep.subr.mxu0 0.0
  %144 = vmatpush1.msra.mxu0 0.0
  %145 = vmatprep.subr.mxu0 0.0
  %146 = vmatpush1.msra.mxu0 0.0
  %147 = vmatprep.subr.mxu0 0.0
  %148 = vmatpush1.msra.mxu0 0.0
  %149 = vmatprep.subr.mxu0 0.0
  %150 = vmatpush1.msra.mxu0 0.0
  %151 = vmatprep.subr.mxu0 0.0
  %152 = vmatpush1.msra.mxu0 0.0
  %153 = vmatprep.subr.mxu0 0.0
  %154 = vmatpush1.msra.mxu0 0.0
  %155 = vmatprep.subr.mxu0 0.0
  %156 = vmatpush1.msra.mxu0 0.0
  %157 = vmatprep.subr.mxu0 0.0
  %158 = vmatpush1.msra.mxu0 0.0
  %159 = vmatprep.subr.mxu0 0.0
  %160 = vmatpush1.msra.mxu0 0.0
  %161 = vmatprep.subr.mxu0 0.0
  %162 = vmatpush1.msra.mxu0 0.0
  %163 = vmatprep.subr.mxu0 0.0
  %164 = vmatpush1.msra.mxu0 0.0
  %165 = vmatprep.subr.mxu0 0.0
  %166 = vmatpush1.msra.mxu0 0.0
  %167 = vmatprep.subr.mxu0 0.0
  %168 = vmatpush1.msra.mxu0 0.0
  %169 = vmatprep.subr.mxu0 0.0
  %170 = vmatpush1.msra.mxu0 0.0
  %171 = vmatprep.subr.mxu0 0.0
  %172 = vmatpush1.msra.mxu0 0.0
  %173 = vmatprep.subr.mxu0 0.0
  %174 = vmatpush1.msra.mxu0 0.0
  %175 = vmatprep.subr.mxu0 0.0
  %176 = vmatpush1.msra.mxu0 0.0
  %177 = vmatprep.subr.mxu0 0.0
  %178 = vmatpush1.msra.mxu0 0.0
  %179 = vmatprep.subr.mxu0 0.0
  %180 = vmatpush1.msra.mxu0 0.0
  %181 = vmatprep.subr.mxu0 0.0
  %182 = vmatpush1.msra.mxu0 0.0
  %183 = vmatprep.subr.mxu0 0.0
  %184 = vmatpush1.msra.mxu0 0.0
  %185 = vmatprep.subr.mxu0 0.0
  %186 = vmatpush1.msra.mxu0 0.0
  %187 = vmatprep.subr.mxu0 0.0
  %188 = vmatpush1.msra.mxu0 0.0
  %189 = vmatprep.subr.mxu0 0.0
  %190 = vmatpush1.msra.mxu0 0.0
  %191 = vmatprep.subr.mxu0 0.0
  %192 = vmatpush1.msra.mxu0 0.0
  %193 = vmatprep.subr.mxu0 0.0
  %194 = vmatpush1.msra.mxu0 0.0
  %195 = vmatprep.mubr.f32.mxu0 0.0
  %196 = vmatmul.mubr.f32.gmra.mrb[0].mxu0 %v126
  %v197 = vpop.f32.mrb[0].mxu0
  %v198 = vadd.f32 %v123, %v197
  %v199 = vpop.f32.mrb[0].mxu0
  %200 = vmatprep.mubr.f32.mxu0 0.0
  %201 = vmatmul.mubr.f32.gmra.mrb[0].mxu0 %v129
  %v202 = vpop.f32.mrb[0].mxu0
  %v203 = vadd.f32 %v123, %v202
  %v204 = vpop.f32.mrb[0].mxu0
  %205 = vdwg.mxu0
  %207 = vrot.lane.b32.xlu0 %v198, 96
  %v208 = vpop.permute.xlu0 %207
  %vm209 = vcmask 130048
  %v210 = vsel %vm209, %v198, 0
  %v212 = vsel %vm209, %v208, 0
  %214 = vmatprep.subr.mxu0 0.0
  %215 = vmatpush1.xpose.msra.mxu0 %v212
  %216 = vmatprep.subr.mxu0 0.0
  %217 = vmatpush1.xpose.msra.mxu0 0.0
  %218 = vmatprep.subr.mxu0 0.0
  %219 = vmatpush1.xpose.msra.mxu0 0.0
  %220 = vmatprep.subr.mxu0 0.0
  %221 = vmatpush1.xpose.msra.mxu0 0.0
  %222 = vmatprep.subr.mxu0 0.0
  %223 = vmatpush1.xpose.msra.mxu0 0.0
  %224 = vmatprep.subr.mxu0 0.0
  %225 = vmatpush1.xpose.msra.mxu0 0.0
  %226 = vmatprep.subr.mxu0 0.0
  %227 = vmatpush1.xpose.msra.mxu0 0.0
  %228 = vmatprep.subr.mxu0 0.0
  %229 = vmatpush1.xpose.msra.mxu0 0.0
  %230 = vmatprep.subr.mxu0 0.0
  %231 = vmatpush1.xpose.msra.mxu0 0.0
  %232 = vmatprep.subr.mxu0 0.0
  %233 = vmatpush1.xpose.msra.mxu0 0.0
  %234 = vmatprep.subr.mxu0 0.0
  %235 = vmatpush1.xpose.msra.mxu0 0.0
  %236 = vmatprep.subr.mxu0 0.0
  %237 = vmatpush1.xpose.msra.mxu0 0.0
  %238 = vmatprep.subr.mxu0 0.0
  %239 = vmatpush1.xpose.msra.mxu0 0.0
  %240 = vmatprep.subr.mxu0 0.0
  %241 = vmatpush1.xpose.msra.mxu0 0.0
  %242 = vmatprep.subr.mxu0 0.0
  %243 = vmatpush1.xpose.msra.mxu0 0.0
  %244 = vmatprep.subr.mxu0 0.0
  %245 = vmatpush1.xpose.msra.mxu0 0.0
  %246 = vmatprep.subr.mxu0 0.0
  %247 = vmatpush1.xpose.msra.mxu0 0.0
  %248 = vmatprep.subr.mxu0 0.0
  %249 = vmatpush1.xpose.msra.mxu0 0.0
  %250 = vmatprep.subr.mxu0 0.0
  %251 = vmatpush1.xpose.msra.mxu0 0.0
  %252 = vmatprep.subr.mxu0 0.0
  %253 = vmatpush1.xpose.msra.mxu0 0.0
  %254 = vmatprep.subr.mxu0 0.0
  %255 = vmatpush1.xpose.msra.mxu0 0.0
  %256 = vmatprep.subr.mxu0 0.0
  %257 = vmatpush1.xpose.msra.mxu0 0.0
  %258 = vmatprep.subr.mxu0 0.0
  %259 = vmatpush1.xpose.msra.mxu0 0.0
  %260 = vmatprep.subr.mxu0 0.0
  %261 = vmatpush1.xpose.msra.mxu0 0.0
  %262 = vmatprep.subr.mxu0 0.0
  %263 = vmatpush1.xpose.msra.mxu0 0.0
  %264 = vmatprep.subr.mxu0 0.0
  %265 = vmatpush1.xpose.msra.mxu0 0.0
  %266 = vmatprep.subr.mxu0 0.0
  %267 = vmatpush1.xpose.msra.mxu0 0.0
  %268 = vmatprep.subr.mxu0 0.0
  %269 = vmatpush1.xpose.msra.mxu0 0.0
  %270 = vmatprep.subr.mxu0 0.0
  %271 = vmatpush1.xpose.msra.mxu0 0.0
  %272 = vmatprep.subr.mxu0 0.0
  %273 = vmatpush1.xpose.msra.mxu0 0.0
  %274 = vmatprep.subr.mxu0 0.0
  %275 = vmatpush1.xpose.msra.mxu0 0.0
  %276 = vmatprep.subr.mxu0 0.0
  %277 = vmatpush1.xpose.msra.mxu0 0.0
  %278 = vmatprep.mubr.f32.mxu0 0.0
  %279 = vmatmul.mubr.f32.gmra.mrb[0].mxu0 %v210
  %v280 = vpop.f32.mrb[0].mxu0
  %v281 = vadd.f32 0.0, %v280
  %v282 = vpop.f32.mrb[0].mxu0
  %283 = vdwg.mxu0
  %v284 = vmul.f32 %v281, 0.25
  %v285 = vlaneseq
  %v286 = vshrl.u32 %v285, 7
  %v287 = vsub.s32 0, %v286
  %v288 = vrot.slane %v113, %v287
  %v289 = vadd.f32 %v284, %v288
  %vm290 = vcmask 64512
  %v291 = vsel %vm290, %v289, -inf
  %292 = vmax.xlane.f32.xlu0 %v291
  %v293 = vpop.xlane.xlu0 %292
  %v294 = vsub.f32 %v289, %v293
  %v295 = vmul.f32 %v294, 1.442695
  %v296 = vpow.pop %v295
  %v297 = vsel %vm290, %v296, 0.0
  %298 = vadd.xlane.f32.xlu0 %v297
  %v299 = vpop.xlane.xlu0 %298
  %v300 = vrcp.pop %v299
  %v301 = vmul.f32 %v296, %v300
  %302 = vrot.lane.b32.xlu0 %v198, 64
  %v303 = vpop.permute.xlu0 %302
  %v306 = vsel %vm290, %v301, 0
  %308 = vmatprep.subr.mxu0 0.0
  %309 = vmatpush1.msra.mxu0 %v303
  %310 = vmatprep.subr.mxu0 0.0
  %311 = vmatpush1.msra.mxu0 0.0
  %312 = vmatprep.subr.mxu0 0.0
  %313 = vmatpush1.msra.mxu0 0.0
  %314 = vmatprep.subr.mxu0 0.0
  %315 = vmatpush1.msra.mxu0 0.0
  %316 = vmatprep.subr.mxu0 0.0
  %317 = vmatpush1.msra.mxu0 0.0
  %318 = vmatprep.subr.mxu0 0.0
  %319 = vmatpush1.msra.mxu0 0.0
  %320 = vmatprep.subr.mxu0 0.0
  %321 = vmatpush1.msra.mxu0 0.0
  %322 = vmatprep.subr.mxu0 0.0
  %323 = vmatpush1.msra.mxu0 0.0
  %324 = vmatprep.subr.mxu0 0.0
  %325 = vmatpush1.msra.mxu0 0.0
  %326 = vmatprep.subr.mxu0 0.0
  %327 = vmatpush1.msra.mxu0 0.0
  %328 = vmatprep.subr.mxu0 0.0
  %329 = vmatpush1.msra.mxu0 0.0
  %330 = vmatprep.subr.mxu0 0.0
  %331 = vmatpush1.msra.mxu0 0.0
  %332 = vmatprep.subr.mxu0 0.0
  %333 = vmatpush1.msra.mxu0 0.0
  %334 = vmatprep.subr.mxu0 0.0
  %335 = vmatpush1.msra.mxu0 0.0
  %336 = vmatprep.subr.mxu0 0.0
  %337 = vmatpush1.msra.mxu0 0.0
  %338 = vmatprep.subr.mxu0 0.0
  %339 = vmatpush1.msra.mxu0 0.0
  %340 = vmatprep.subr.mxu0 0.0
  %341 = vmatpush1.msra.mxu0 0.0
  %342 = vmatprep.subr.mxu0 0.0
  %343 = vmatpush1.msra.mxu0 0.0
  %344 = vmatprep.subr.mxu0 0.0
  %345 = vmatpush1.msra.mxu0 0.0
  %346 = vmatprep.subr.mxu0 0.0
  %347 = vmatpush1.msra.mxu0 0.0
  %348 = vmatprep.subr.mxu0 0.0
  %349 = vmatpush1.msra.mxu0 0.0
  %350 = vmatprep.subr.mxu0 0.0
  %351 = vmatpush1.msra.mxu0 0.0
  %352 = vmatprep.subr.mxu0 0.0
  %353 = vmatpush1.msra.mxu0 0.0
  %354 = vmatprep.subr.mxu0 0.0
  %355 = vmatpush1.msra.mxu0 0.0
  %356 = vmatprep.subr.mxu0 0.0
  %357 = vmatpush1.msra.mxu0 0.0
  %358 = vmatprep.subr.mxu0 0.0
  %359 = vmatpush1.msra.mxu0 0.0
  %360 = vmatprep.subr.mxu0 0.0
  %361 = vmatpush1.msra.mxu0 0.0
  %362 = vmatprep.subr.mxu0 0.0
  %363 = vmatpush1.msra.mxu0 0.0
  %364 = vmatprep.subr.mxu0 0.0
  %365 = vmatpush1.msra.mxu0 0.0
  %366 = vmatprep.subr.mxu0 0.0
  %367 = vmatpush1.msra.mxu0 0.0
  %368 = vmatprep.subr.mxu0 0.0
  %369 = vmatpush1.msra.mxu0 0.0
  %370 = vmatprep.subr.mxu0 0.0
  %371 = vmatpush1.msra.mxu0 0.0
  %372 = vmatprep.mubr.f32.mxu0 0.0
  %373 = vmatmul.mubr.f32.gmra.mrb[0].mxu0 %v306
  %v374 = vpop.f32.mrb[0].mxu0
  %v375 = vadd.f32 0.0, %v374
  %v376 = vpop.f32.mrb[0].mxu0
  %377 = vdwg.mxu0
  %378 = vrot.lane.b32.xlu0 %v198, 112
  %v379 = vpop.permute.xlu0 %378
  %380 = vrot.lane.b32.xlu0 %v198, 80
  %v381 = vpop.permute.xlu0 %380
  %v382 = vsel %vm209, %v379, 0
  %v384 = vsel %vm209, %v381, 0
  %386 = vmatprep.subr.mxu0 0.0
  %387 = vmatpush1.xpose.msra.mxu0 %v384
  %388 = vmatprep.subr.mxu0 0.0
  %389 = vmatpush1.xpose.msra.mxu0 0.0
  %390 = vmatprep.subr.mxu0 0.0
  %391 = vmatpush1.xpose.msra.mxu0 0.0
  %392 = vmatprep.subr.mxu0 0.0
  %393 = vmatpush1.xpose.msra.mxu0 0.0
  %394 = vmatprep.subr.mxu0 0.0
  %395 = vmatpush1.xpose.msra.mxu0 0.0
  %396 = vmatprep.subr.mxu0 0.0
  %397 = vmatpush1.xpose.msra.mxu0 0.0
  %398 = vmatprep.subr.mxu0 0.0
  %399 = vmatpush1.xpose.msra.mxu0 0.0
  %400 = vmatprep.subr.mxu0 0.0
  %401 = vmatpush1.xpose.msra.mxu0 0.0
  %402 = vmatprep.subr.mxu0 0.0
  %403 = vmatpush1.xpose.msra.mxu0 0.0
  %404 = vmatprep.subr.mxu0 0.0
  %405 = vmatpush1.xpose.msra.mxu0 0.0
  %406 = vmatprep.subr.mxu0 0.0
  %407 = vmatpush1.xpose.msra.mxu0 0.0
  %408 = vmatprep.subr.mxu0 0.0
  %409 = vmatpush1.xpose.msra.mxu0 0.0
  %410 = vmatprep.subr.mxu0 0.0
  %411 = vmatpush1.xpose.msra.mxu0 0.0
  %412 = vmatprep.subr.mxu0 0.0
  %413 = vmatpush1.xpose.msra.mxu0 0.0
  %414 = vmatprep.subr.mxu0 0.0
  %415 = vmatpush1.xpose.msra.mxu0 0.0
  %416 = vmatprep.subr.mxu0 0.0
  %417 = vmatpush1.xpose.msra.mxu0 0.0
  %418 = vmatprep.subr.mxu0 0.0
  %419 = vmatpush1.xpose.msra.mxu0 0.0
  %420 = vmatprep.subr.mxu0 0.0
  %421 = vmatpush1.xpose.msra.mxu0 0.0
  %422 = vmatprep.subr.mxu0 0.0
  %423 = vmatpush1.xpose.msra.mxu0 0.0
  %424 = vmatprep.subr.mxu0 0.0
  %425 = vmatpush1.xpose.msra.mxu0 0.0
  %426 = vmatprep.subr.mxu0 0.0
  %427 = vmatpush1.xpose.msra.mxu0 0.0
  %428 = vmatprep.subr.mxu0 0.0
  %429 = vmatpush1.xpose.msra.mxu0 0.0
  %430 = vmatprep.subr.mxu0 0.0
  %431 = vmatpush1.xpose.msra.mxu0 0.0
  %432 = vmatprep.subr.mxu0 0.0
  %433 = vmatpush1.xpose.msra.mxu0 0.0
  %434 = vmatprep.subr.mxu0 0.0
  %435 = vmatpush1.xpose.msra.mxu0 0.0
  %436 = vmatprep.subr.mxu0 0.0
  %437 = vmatpush1.xpose.msra.mxu0 0.0
  %438 = vmatprep.subr.mxu0 0.0
  %439 = vmatpush1.xpose.msra.mxu0 0.0
  %440 = vmatprep.subr.mxu0 0.0
  %441 = vmatpush1.xpose.msra.mxu0 0.0
  %442 = vmatprep.subr.mxu0 0.0
  %443 = vmatpush1.xpose.msra.mxu0 0.0
  %444 = vmatprep.subr.mxu0 0.0
  %445 = vmatpush1.xpose.msra.mxu0 0.0
  %446 = vmatprep.subr.mxu0 0.0
  %447 = vmatpush1.xpose.msra.mxu0 0.0
  %448 = vmatprep.subr.mxu0 0.0
  %449 = vmatpush1.xpose.msra.mxu0 0.0
  %450 = vmatprep.mubr.f32.mxu0 0.0
  %451 = vmatmul.mubr.f32.gmra.mrb[0].mxu0 %v382
  %v452 = vpop.f32.mrb[0].mxu0
  %v453 = vadd.f32 0.0, %v452
  %v454 = vpop.f32.mrb[0].mxu0
  %455 = vdwg.mxu0
  %v456 = vmul.f32 %v453, 0.25
  %v457 = vadd.f32 %v456, %v288
  %v458 = vsel %vm290, %v457, -inf
  %459 = vmax.xlane.f32.xlu0 %v458
  %v460 = vpop.xlane.xlu0 %459
  %v461 = vsub.f32 %v457, %v460
  %v462 = vmul.f32 %v461, 1.442695
  %v463 = vpow.pop %v462
  %v464 = vsel %vm290, %v463, 0.0
  %465 = vadd.xlane.f32.xlu0 %v464
  %v466 = vpop.xlane.xlu0 %465
  %v467 = vrcp.pop %v466
  %v468 = vmul.f32 %v463, %v467
  %469 = vrot.lane.b32.xlu0 %v198, 48
  %v470 = vpop.permute.xlu0 %469
  %v473 = vsel %vm290, %v468, 0
  %475 = vmatprep.subr.mxu0 0.0
  %476 = vmatpush1.msra.mxu0 %v470
  %477 = vmatprep.subr.mxu0 0.0
  %478 = vmatpush1.msra.mxu0 0.0
  %479 = vmatprep.subr.mxu0 0.0
  %480 = vmatpush1.msra.mxu0 0.0
  %481 = vmatprep.subr.mxu0 0.0
  %482 = vmatpush1.msra.mxu0 0.0
  %483 = vmatprep.subr.mxu0 0.0
  %484 = vmatpush1.msra.mxu0 0.0
  %485 = vmatprep.subr.mxu0 0.0
  %486 = vmatpush1.msra.mxu0 0.0
  %487 = vmatprep.subr.mxu0 0.0
  %488 = vmatpush1.msra.mxu0 0.0
  %489 = vmatprep.subr.mxu0 0.0
  %490 = vmatpush1.msra.mxu0 0.0
  %491 = vmatprep.subr.mxu0 0.0
  %492 = vmatpush1.msra.mxu0 0.0
  %493 = vmatprep.subr.mxu0 0.0
  %494 = vmatpush1.msra.mxu0 0.0
  %495 = vmatprep.subr.mxu0 0.0
  %496 = vmatpush1.msra.mxu0 0.0
  %497 = vmatprep.subr.mxu0 0.0
  %498 = vmatpush1.msra.mxu0 0.0
  %499 = vmatprep.subr.mxu0 0.0
  %500 = vmatpush1.msra.mxu0 0.0
  %501 = vmatprep.subr.mxu0 0.0
  %502 = vmatpush1.msra.mxu0 0.0
  %503 = vmatprep.subr.mxu0 0.0
  %504 = vmatpush1.msra.mxu0 0.0
  %505 = vmatprep.subr.mxu0 0.0
  %506 = vmatpush1.msra.mxu0 0.0
  %507 = vmatprep.subr.mxu0 0.0
  %508 = vmatpush1.msra.mxu0 0.0
  %509 = vmatprep.subr.mxu0 0.0
  %510 = vmatpush1.msra.mxu0 0.0
  %511 = vmatprep.subr.mxu0 0.0
  %512 = vmatpush1.msra.mxu0 0.0
  %513 = vmatprep.subr.mxu0 0.0
  %514 = vmatpush1.msra.mxu0 0.0
  %515 = vmatprep.subr.mxu0 0.0
  %516 = vmatpush1.msra.mxu0 0.0
  %517 = vmatprep.subr.mxu0 0.0
  %518 = vmatpush1.msra.mxu0 0.0
  %519 = vmatprep.subr.mxu0 0.0
  %520 = vmatpush1.msra.mxu0 0.0
  %521 = vmatprep.subr.mxu0 0.0
  %522 = vmatpush1.msra.mxu0 0.0
  %523 = vmatprep.subr.mxu0 0.0
  %524 = vmatpush1.msra.mxu0 0.0
  %525 = vmatprep.subr.mxu0 0.0
  %526 = vmatpush1.msra.mxu0 0.0
  %527 = vmatprep.subr.mxu0 0.0
  %528 = vmatpush1.msra.mxu0 0.0
  %529 = vmatprep.subr.mxu0 0.0
  %530 = vmatpush1.msra.mxu0 0.0
  %531 = vmatprep.subr.mxu0 0.0
  %532 = vmatpush1.msra.mxu0 0.0
  %533 = vmatprep.subr.mxu0 0.0
  %534 = vmatpush1.msra.mxu0 0.0
  %535 = vmatprep.subr.mxu0 0.0
  %536 = vmatpush1.msra.mxu0 0.0
  %537 = vmatprep.subr.mxu0 0.0
  %538 = vmatpush1.msra.mxu0 0.0
  %539 = vmatprep.mubr.f32.mxu0 0.0
  %540 = vmatmul.mubr.f32.gmra.mrb[0].mxu0 %v473
  %v541 = vpop.f32.mrb[0].mxu0
  %v542 = vadd.f32 0.0, %v541
  %v543 = vpop.f32.mrb[0].mxu0
  %544 = vdwg.mxu0
  %546 = vrot.lane.b32.xlu0 %v542, 16
  %v547 = vpop.permute.xlu0 %546
  %v549 = vsel %vm209, %v375, %v547
  %551 = vrot.lane.b32.xlu0 %v203, 96
  %v552 = vpop.permute.xlu0 %551
  %v553 = vsel %vm209, %v203, 0
  %v555 = vsel %vm209, %v552, 0
  %557 = vmatprep.subr.mxu0 0.0
  %558 = vmatpush1.xpose.msra.mxu0 %v555
  %559 = vmatprep.subr.mxu0 0.0
  %560 = vmatpush1.xpose.msra.mxu0 0.0
  %561 = vmatprep.subr.mxu0 0.0
  %562 = vmatpush1.xpose.msra.mxu0 0.0
  %563 = vmatprep.subr.mxu0 0.0
  %564 = vmatpush1.xpose.msra.mxu0 0.0
  %565 = vmatprep.subr.mxu0 0.0
  %566 = vmatpush1.xpose.msra.mxu0 0.0
  %567 = vmatprep.subr.mxu0 0.0
  %568 = vmatpush1.xpose.msra.mxu0 0.0
  %569 = vmatprep.subr.mxu0 0.0
  %570 = vmatpush1.xpose.msra.mxu0 0.0
  %571 = vmatprep.subr.mxu0 0.0
  %572 = vmatpush1.xpose.msra.mxu0 0.0
  %573 = vmatprep.subr.mxu0 0.0
  %574 = vmatpush1.xpose.msra.mxu0 0.0
  %575 = vmatprep.subr.mxu0 0.0
  %576 = vmatpush1.xpose.msra.mxu0 0.0
  %577 = vmatprep.subr.mxu0 0.0
  %578 = vmatpush1.xpose.msra.mxu0 0.0
  %579 = vmatprep.subr.mxu0 0.0
  %580 = vmatpush1.xpose.msra.mxu0 0.0
  %581 = vmatprep.subr.mxu0 0.0
  %582 = vmatpush1.xpose.msra.mxu0 0.0
  %583 = vmatprep.subr.mxu0 0.0
  %584 = vmatpush1.xpose.msra.mxu0 0.0
  %585 = vmatprep.subr.mxu0 0.0
  %586 = vmatpush1.xpose.msra.mxu0 0.0
  %587 = vmatprep.subr.mxu0 0.0
  %588 = vmatpush1.xpose.msra.mxu0 0.0
  %589 = vmatprep.subr.mxu0 0.0
  %590 = vmatpush1.xpose.msra.mxu0 0.0
  %591 = vmatprep.subr.mxu0 0.0
  %592 = vmatpush1.xpose.msra.mxu0 0.0
  %593 = vmatprep.subr.mxu0 0.0
  %594 = vmatpush1.xpose.msra.mxu0 0.0
  %595 = vmatprep.subr.mxu0 0.0
  %596 = vmatpush1.xpose.msra.mxu0 0.0
  %597 = vmatprep.subr.mxu0 0.0
  %598 = vmatpush1.xpose.msra.mxu0 0.0
  %599 = vmatprep.subr.mxu0 0.0
  %600 = vmatpush1.xpose.msra.mxu0 0.0
  %601 = vmatprep.subr.mxu0 0.0
  %602 = vmatpush1.xpose.msra.mxu0 0.0
  %603 = vmatprep.subr.mxu0 0.0
  %604 = vmatpush1.xpose.msra.mxu0 0.0
  %605 = vmatprep.subr.mxu0 0.0
  %606 = vmatpush1.xpose.msra.mxu0 0.0
  %607 = vmatprep.subr.mxu0 0.0
  %608 = vmatpush1.xpose.msra.mxu0 0.0
  %609 = vmatprep.subr.mxu0 0.0
  %610 = vmatpush1.xpose.msra.mxu0 0.0
  %611 = vmatprep.subr.mxu0 0.0
  %612 = vmatpush1.xpose.msra.mxu0 0.0
  %613 = vmatprep.subr.mxu0 0.0
  %614 = vmatpush1.xpose.msra.mxu0 0.0
  %615 = vmatprep.subr.mxu0 0.0
  %616 = vmatpush1.xpose.msra.mxu0 0.0
  %617 = vmatprep.subr.mxu0 0.0
  %618 = vmatpush1.xpose.msra.mxu0 0.0
  %619 = vmatprep.subr.mxu0 0.0
  %620 = vmatpush1.xpose.msra.mxu0 0.0
  %621 = vmatprep.mubr.f32.mxu0 0.0
  %622 = vmatmul.mubr.f32.gmra.mrb[0].mxu0 %v553
  %v623 = vpop.f32.mrb[0].mxu0
  %v624 = vadd.f32 0.0, %v623
  %v625 = vpop.f32.mrb[0].mxu0
  %626 = vdwg.mxu0
  %v627 = vmul.f32 %v624, 0.25
  %v628 = vlaneseq
  %v629 = vshrl.u32 %v628, 7
  %v630 = vsub.s32 1, %v629
  %v631 = vrot.slane %v113, %v630
  %v632 = vadd.f32 %v627, %v631
  %v633 = vsel %vm290, %v632, -inf
  %634 = vmax.xlane.f32.xlu0 %v633
  %v635 = vpop.xlane.xlu0 %634
  %v636 = vsub.f32 %v632, %v635
  %v637 = vmul.f32 %v636, 1.442695
  %v638 = vpow.pop %v637
  %v639 = vsel %vm290, %v638, 0.0
  %640 = vadd.xlane.f32.xlu0 %v639
  %v641 = vpop.xlane.xlu0 %640
  %v642 = vrcp.pop %v641
  %v643 = vmul.f32 %v638, %v642
  %644 = vrot.lane.b32.xlu0 %v203, 64
  %v645 = vpop.permute.xlu0 %644
  %v648 = vsel %vm290, %v643, 0
  %650 = vmatprep.subr.mxu0 0.0
  %651 = vmatpush1.msra.mxu0 %v645
  %652 = vmatprep.subr.mxu0 0.0
  %653 = vmatpush1.msra.mxu0 0.0
  %654 = vmatprep.subr.mxu0 0.0
  %655 = vmatpush1.msra.mxu0 0.0
  %656 = vmatprep.subr.mxu0 0.0
  %657 = vmatpush1.msra.mxu0 0.0
  %658 = vmatprep.subr.mxu0 0.0
  %659 = vmatpush1.msra.mxu0 0.0
  %660 = vmatprep.subr.mxu0 0.0
  %661 = vmatpush1.msra.mxu0 0.0
  %662 = vmatprep.subr.mxu0 0.0
  %663 = vmatpush1.msra.mxu0 0.0
  %664 = vmatprep.subr.mxu0 0.0
  %665 = vmatpush1.msra.mxu0 0.0
  %666 = vmatprep.subr.mxu0 0.0
  %667 = vmatpush1.msra.mxu0 0.0
  %668 = vmatprep.subr.mxu0 0.0
  %669 = vmatpush1.msra.mxu0 0.0
  %670 = vmatprep.subr.mxu0 0.0
  %671 = vmatpush1.msra.mxu0 0.0
  %672 = vmatprep.subr.mxu0 0.0
  %673 = vmatpush1.msra.mxu0 0.0
  %674 = vmatprep.subr.mxu0 0.0
  %675 = vmatpush1.msra.mxu0 0.0
  %676 = vmatprep.subr.mxu0 0.0
  %677 = vmatpush1.msra.mxu0 0.0
  %678 = vmatprep.subr.mxu0 0.0
  %679 = vmatpush1.msra.mxu0 0.0
  %680 = vmatprep.subr.mxu0 0.0
  %681 = vmatpush1.msra.mxu0 0.0
  %682 = vmatprep.subr.mxu0 0.0
  %683 = vmatpush1.msra.mxu0 0.0
  %684 = vmatprep.subr.mxu0 0.0
  %685 = vmatpush1.msra.mxu0 0.0
  %686 = vmatprep.subr.mxu0 0.0
  %687 = vmatpush1.msra.mxu0 0.0
  %688 = vmatprep.subr.mxu0 0.0
  %689 = vmatpush1.msra.mxu0 0.0
  %690 = vmatprep.subr.mxu0 0.0
  %691 = vmatpush1.msra.mxu0 0.0
  %692 = vmatprep.subr.mxu0 0.0
  %693 = vmatpush1.msra.mxu0 0.0
  %694 = vmatprep.subr.mxu0 0.0
  %695 = vmatpush1.msra.mxu0 0.0
  %696 = vmatprep.subr.mxu0 0.0
  %697 = vmatpush1.msra.mxu0 0.0
  %698 = vmatprep.subr.mxu0 0.0
  %699 = vmatpush1.msra.mxu0 0.0
  %700 = vmatprep.subr.mxu0 0.0
  %701 = vmatpush1.msra.mxu0 0.0
  %702 = vmatprep.subr.mxu0 0.0
  %703 = vmatpush1.msra.mxu0 0.0
  %704 = vmatprep.subr.mxu0 0.0
  %705 = vmatpush1.msra.mxu0 0.0
  %706 = vmatprep.subr.mxu0 0.0
  %707 = vmatpush1.msra.mxu0 0.0
  %708 = vmatprep.subr.mxu0 0.0
  %709 = vmatpush1.msra.mxu0 0.0
  %710 = vmatprep.subr.mxu0 0.0
  %711 = vmatpush1.msra.mxu0 0.0
  %712 = vmatprep.subr.mxu0 0.0
  %713 = vmatpush1.msra.mxu0 0.0
  %714 = vmatprep.mubr.f32.mxu0 0.0
  %715 = vmatmul.mubr.f32.gmra.mrb[0].mxu0 %v648
  %v716 = vpop.f32.mrb[0].mxu0
  %v717 = vadd.f32 0.0, %v716
  %v718 = vpop.f32.mrb[0].mxu0
  %719 = vdwg.mxu0
  %720 = vrot.lane.b32.xlu0 %v203, 112
  %v721 = vpop.permute.xlu0 %720
  %722 = vrot.lane.b32.xlu0 %v203, 80
  %v723 = vpop.permute.xlu0 %722
  %v724 = vsel %vm209, %v721, 0
  %v726 = vsel %vm209, %v723, 0
  %728 = vmatprep.subr.mxu0 0.0
  %729 = vmatpush1.xpose.msra.mxu0 %v726
  %730 = vmatprep.subr.mxu0 0.0
  %731 = vmatpush1.xpose.msra.mxu0 0.0
  %732 = vmatprep.subr.mxu0 0.0
  %733 = vmatpush1.xpose.msra.mxu0 0.0
  %734 = vmatprep.subr.mxu0 0.0
  %735 = vmatpush1.xpose.msra.mxu0 0.0
  %736 = vmatprep.subr.mxu0 0.0
  %737 = vmatpush1.xpose.msra.mxu0 0.0
  %738 = vmatprep.subr.mxu0 0.0
  %739 = vmatpush1.xpose.msra.mxu0 0.0
  %740 = vmatprep.subr.mxu0 0.0
  %741 = vmatpush1.xpose.msra.mxu0 0.0
  %742 = vmatprep.subr.mxu0 0.0
  %743 = vmatpush1.xpose.msra.mxu0 0.0
  %744 = vmatprep.subr.mxu0 0.0
  %745 = vmatpush1.xpose.msra.mxu0 0.0
  %746 = vmatprep.subr.mxu0 0.0
  %747 = vmatpush1.xpose.msra.mxu0 0.0
  %748 = vmatprep.subr.mxu0 0.0
  %749 = vmatpush1.xpose.msra.mxu0 0.0
  %750 = vmatprep.subr.mxu0 0.0
  %751 = vmatpush1.xpose.msra.mxu0 0.0
  %752 = vmatprep.subr.mxu0 0.0
  %753 = vmatpush1.xpose.msra.mxu0 0.0
  %754 = vmatprep.subr.mxu0 0.0
  %755 = vmatpush1.xpose.msra.mxu0 0.0
  %756 = vmatprep.subr.mxu0 0.0
  %757 = vmatpush1.xpose.msra.mxu0 0.0
  %758 = vmatprep.subr.mxu0 0.0
  %759 = vmatpush1.xpose.msra.mxu0 0.0
  %760 = vmatprep.subr.mxu0 0.0
  %761 = vmatpush1.xpose.msra.mxu0 0.0
  %762 = vmatprep.subr.mxu0 0.0
  %763 = vmatpush1.xpose.msra.mxu0 0.0
  %764 = vmatprep.subr.mxu0 0.0
  %765 = vmatpush1.xpose.msra.mxu0 0.0
  %766 = vmatprep.subr.mxu0 0.0
  %767 = vmatpush1.xpose.msra.mxu0 0.0
  %768 = vmatprep.subr.mxu0 0.0
  %769 = vmatpush1.xpose.msra.mxu0 0.0
  %770 = vmatprep.subr.mxu0 0.0
  %771 = vmatpush1.xpose.msra.mxu0 0.0
  %772 = vmatprep.subr.mxu0 0.0
  %773 = vmatpush1.xpose.msra.mxu0 0.0
  %774 = vmatprep.subr.mxu0 0.0
  %775 = vmatpush1.xpose.msra.mxu0 0.0
  %776 = vmatprep.subr.mxu0 0.0
  %777 = vmatpush1.xpose.msra.mxu0 0.0
  %778 = vmatprep.subr.mxu0 0.0
  %779 = vmatpush1.xpose.msra.mxu0 0.0
  %780 = vmatprep.subr.mxu0 0.0
  %781 = vmatpush1.xpose.msra.mxu0 0.0
  %782 = vmatprep.subr.mxu0 0.0
  %783 = vmatpush1.xpose.msra.mxu0 0.0
  %784 = vmatprep.subr.mxu0 0.0
  %785 = vmatpush1.xpose.msra.mxu0 0.0
  %786 = vmatprep.subr.mxu0 0.0
  %787 = vmatpush1.xpose.msra.mxu0 0.0
  %788 = vmatprep.subr.mxu0 0.0
  %789 = vmatpush1.xpose.msra.mxu0 0.0
  %790 = vmatprep.subr.mxu0 0.0
  %791 = vmatpush1.xpose.msra.mxu0 0.0
  %792 = vmatprep.mubr.f32.mxu0 0.0
  %793 = vmatmul.mubr.f32.gmra.mrb[0].mxu0 %v724
  %v794 = vpop.f32.mrb[0].mxu0
  %v795 = vadd.f32 0.0, %v794
  %v796 = vpop.f32.mrb[0].mxu0
  %797 = vdwg.mxu0
  %v798 = vmul.f32 %v795, 0.25
  %v799 = vadd.f32 %v798, %v631
  %v800 = vsel %vm290, %v799, -inf
  %801 = vmax.xlane.f32.xlu0 %v800
  %v802 = vpop.xlane.xlu0 %801
  %v803 = vsub.f32 %v799, %v802
  %v804 = vmul.f32 %v803, 1.442695
  %v805 = vpow.pop %v804
  %v806 = vsel %vm290, %v805, 0.0
  %807 = vadd.xlane.f32.xlu0 %v806
  %v808 = vpop.xlane.xlu0 %807
  %v809 = vrcp.pop %v808
  %v810 = vmul.f32 %v805, %v809
  %811 = vrot.lane.b32.xlu0 %v203, 48
  %v812 = vpop.permute.xlu0 %811
  %v815 = vsel %vm290, %v810, 0
  %817 = vmatprep.subr.mxu0 0.0
  %818 = vmatpush1.msra.mxu0 %v812
  %819 = vmatprep.subr.mxu0 0.0
  %820 = vmatpush1.msra.mxu0 0.0
  %821 = vmatprep.subr.mxu0 0.0
  %822 = vmatpush1.msra.mxu0 0.0
  %823 = vmatprep.subr.mxu0 0.0
  %824 = vmatpush1.msra.mxu0 0.0
  %825 = vmatprep.subr.mxu0 0.0
  %826 = vmatpush1.msra.mxu0 0.0
  %827 = vmatprep.subr.mxu0 0.0
  %828 = vmatpush1.msra.mxu0 0.0
  %829 = vmatprep.subr.mxu0 0.0
  %830 = vmatpush1.msra.mxu0 0.0
  %831 = vmatprep.subr.mxu0 0.0
  %832 = vmatpush1.msra.mxu0 0.0
  %833 = vmatprep.subr.mxu0 0.0
  %834 = vmatpush1.msra.mxu0 0.0
  %835 = vmatprep.subr.mxu0 0.0
  %836 = vmatpush1.msra.mxu0 0.0
  %837 = vmatprep.subr.mxu0 0.0
  %838 = vmatpush1.msra.mxu0 0.0
  %839 = vmatprep.subr.mxu0 0.0
  %840 = vmatpush1.msra.mxu0 0.0
  %841 = vmatprep.subr.mxu0 0.0
  %842 = vmatpush1.msra.mxu0 0.0
  %843 = vmatprep.subr.mxu0 0.0
  %844 = vmatpush1.msra.mxu0 0.0
  %845 = vmatprep.subr.mxu0 0.0
  %846 = vmatpush1.msra.mxu0 0.0
  %847 = vmatprep.subr.mxu0 0.0
  %848 = vmatpush1.msra.mxu0 0.0
  %849 = vmatprep.subr.mxu0 0.0
  %850 = vmatpush1.msra.mxu0 0.0
  %851 = vmatprep.subr.mxu0 0.0
  %852 = vmatpush1.msra.mxu0 0.0
  %853 = vmatprep.subr.mxu0 0.0
  %854 = vmatpush1.msra.mxu0 0.0
  %855 = vmatprep.subr.mxu0 0.0
  %856 = vmatpush1.msra.mxu0 0.0
  %857 = vmatprep.subr.mxu0 0.0
  %858 = vmatpush1.msra.mxu0 0.0
  %859 = vmatprep.subr.mxu0 0.0
  %860 = vmatpush1.msra.mxu0 0.0
  %861 = vmatprep.subr.mxu0 0.0
  %862 = vmatpush1.msra.mxu0 0.0
  %863 = vmatprep.subr.mxu0 0.0
  %864 = vmatpush1.msra.mxu0 0.0
  %865 = vmatprep.subr.mxu0 0.0
  %866 = vmatpush1.msra.mxu0 0.0
  %867 = vmatprep.subr.mxu0 0.0
  %868 = vmatpush1.msra.mxu0 0.0
  %869 = vmatprep.subr.mxu0 0.0
  %870 = vmatpush1.msra.mxu0 0.0
  %871 = vmatprep.subr.mxu0 0.0
  %872 = vmatpush1.msra.mxu0 0.0
  %873 = vmatprep.subr.mxu0 0.0
  %874 = vmatpush1.msra.mxu0 0.0
  %875 = vmatprep.subr.mxu0 0.0
  %876 = vmatpush1.msra.mxu0 0.0
  %877 = vmatprep.subr.mxu0 0.0
  %878 = vmatpush1.msra.mxu0 0.0
  %879 = vmatprep.subr.mxu0 0.0
  %880 = vmatpush1.msra.mxu0 0.0
  %881 = vmatprep.mubr.f32.mxu0 0.0
  %882 = vmatmul.mubr.f32.gmra.mrb[0].mxu0 %v815
  %v883 = vpop.f32.mrb[0].mxu0
  %v884 = vadd.f32 0.0, %v883
  %v885 = vpop.f32.mrb[0].mxu0
  %886 = vdwg.mxu0
  %888 = vrot.lane.b32.xlu0 %v884, 16
  %v889 = vpop.permute.xlu0 %888
  %v891 = vsel %vm209, %v717, %v889
  %v892 = vld [vmem:[%s6] sm:$0xff]
  %v893 = vld [vmem:[%s6 + $0x8] sm:$0xff]
  %v894 = vld [vmem:[%s6 + $0x10] sm:$0xff]
  %v895 = vld [vmem:[%s6 + $0x18] sm:$0xff]
  %v896 = vld [vmem:[%s7] sm:$0x1]
  %v898 = vlaneseq
  %v899 = vshrl.u32 %v898, 7
  %v900 = vsub.s32 0, %v899
  %v901 = vrot.slane %v896, %v900
  %v904 = vsel %vm69, %v549, 0
  %v907 = vsel %vm69, %v891, 0
  %909 = vmatprep.subr.mxu0 0.0
  %910 = vmatpush1.msra.mxu0 %v892
  %911 = vmatprep.subr.mxu0 0.0
  %912 = vmatpush1.msra.mxu0 %v893
  %913 = vmatprep.subr.mxu0 0.0
  %914 = vmatpush1.msra.mxu0 %v894
  %915 = vmatprep.subr.mxu0 0.0
  %916 = vmatpush1.msra.mxu0 %v895
  %917 = vmatprep.subr.mxu0 0.0
  %918 = vmatpush1.msra.mxu0 0.0
  %919 = vmatprep.subr.mxu0 0.0
  %920 = vmatpush1.msra.mxu0 0.0
  %921 = vmatprep.subr.mxu0 0.0
  %922 = vmatpush1.msra.mxu0 0.0
  %923 = vmatprep.subr.mxu0 0.0
  %924 = vmatpush1.msra.mxu0 0.0
  %925 = vmatprep.subr.mxu0 0.0
  %926 = vmatpush1.msra.mxu0 0.0
  %927 = vmatprep.subr.mxu0 0.0
  %928 = vmatpush1.msra.mxu0 0.0
  %929 = vmatprep.subr.mxu0 0.0
  %930 = vmatpush1.msra.mxu0 0.0
  %931 = vmatprep.subr.mxu0 0.0
  %932 = vmatpush1.msra.mxu0 0.0
  %933 = vmatprep.subr.mxu0 0.0
  %934 = vmatpush1.msra.mxu0 0.0
  %935 = vmatprep.subr.mxu0 0.0
  %936 = vmatpush1.msra.mxu0 0.0
  %937 = vmatprep.subr.mxu0 0.0
  %938 = vmatpush1.msra.mxu0 0.0
  %939 = vmatprep.subr.mxu0 0.0
  %940 = vmatpush1.msra.mxu0 0.0
  %941 = vmatprep.subr.mxu0 0.0
  %942 = vmatpush1.msra.mxu0 0.0
  %943 = vmatprep.subr.mxu0 0.0
  %944 = vmatpush1.msra.mxu0 0.0
  %945 = vmatprep.subr.mxu0 0.0
  %946 = vmatpush1.msra.mxu0 0.0
  %947 = vmatprep.subr.mxu0 0.0
  %948 = vmatpush1.msra.mxu0 0.0
  %949 = vmatprep.subr.mxu0 0.0
  %950 = vmatpush1.msra.mxu0 0.0
  %951 = vmatprep.subr.mxu0 0.0
  %952 = vmatpush1.msra.mxu0 0.0
  %953 = vmatprep.subr.mxu0 0.0
  %954 = vmatpush1.msra.mxu0 0.0
  %955 = vmatprep.subr.mxu0 0.0
  %956 = vmatpush1.msra.mxu0 0.0
  %957 = vmatprep.subr.mxu0 0.0
  %958 = vmatpush1.msra.mxu0 0.0
  %959 = vmatprep.subr.mxu0 0.0
  %960 = vmatpush1.msra.mxu0 0.0
  %961 = vmatprep.subr.mxu0 0.0
  %962 = vmatpush1.msra.mxu0 0.0
  %963 = vmatprep.subr.mxu0 0.0
  %964 = vmatpush1.msra.mxu0 0.0
  %965 = vmatprep.subr.mxu0 0.0
  %966 = vmatpush1.msra.mxu0 0.0
  %967 = vmatprep.subr.mxu0 0.0
  %968 = vmatpush1.msra.mxu0 0.0
  %969 = vmatprep.subr.mxu0 0.0
  %970 = vmatpush1.msra.mxu0 0.0
  %971 = vmatprep.subr.mxu0 0.0
  %972 = vmatpush1.msra.mxu0 0.0
  %973 = vmatprep.mubr.f32.mxu0 0.0
  %974 = vmatmul.mubr.f32.gmra.mrb[0].mxu0 %v904
  %v975 = vpop.f32.mrb[0].mxu0
  %v976 = vadd.f32 %v901, %v975
  %v977 = vpop.f32.mrb[0].mxu0
  %978 = vmatprep.mubr.f32.mxu0 0.0
  %979 = vmatmul.mubr.f32.gmra.mrb[0].mxu0 %v907
  %v980 = vpop.f32.mrb[0].mxu0
  %v981 = vadd.f32 %v901, %v980
  %v982 = vpop.f32.mrb[0].mxu0
  %983 = vdwg.mxu0
  %v984 = vadd.f32 %v976, %v111
  %v985 = vadd.f32 %v981, %v112
  %v986 = vld [vmem:[%s8] sm:$0x1]
  %v987 = vld [vmem:[%s9] sm:$0x1]
  %v988 = vsel %vm69, %v984, 0.0
  %989 = vadd.xlane.f32.xlu0 %v988
  %v990 = vpop.xlane.xlu0 %989
  %v991 = vsel %vm69, %v985, 0.0
  %992 = vadd.xlane.f32.xlu0 %v991
  %v993 = vpop.xlane.xlu0 %992
  %v994 = vmul.f32 %v990, %v76
  %v995 = vmul.f32 %v993, %v76
  %v996 = vsub.f32 %v984, %v994
  %v997 = vsub.f32 %v985, %v995
  %v998 = vmul.f32 %v996, %v996
  %v999 = vmul.f32 %v997, %v997
  %v1000 = vsel %vm69, %v998, 0.0
  %1001 = vadd.xlane.f32.xlu0 %v1000
  %v1002 = vpop.xlane.xlu0 %1001
  %v1003 = vsel %vm69, %v999, 0.0
  %1004 = vadd.xlane.f32.xlu0 %v1003
  %v1005 = vpop.xlane.xlu0 %1004
  %v1006 = vmul.f32 %v1002, %v76
  %v1007 = vmul.f32 %v1005, %v76
  %v1008 = vadd.f32 %v1006, 1e-12
  %v1009 = vadd.f32 %v1007, 1e-12
  %v1010 = vrsqrt.pop %v1008
  %v1011 = vrsqrt.pop %v1009
  %v1012 = vmul.f32 %v996, %v1010
  %v1013 = vmul.f32 %v997, %v1011
  %v1015 = vlaneseq
  %v1016 = vshrl.u32 %v1015, 7
  %v1017 = vsub.s32 0, %v1016
  %v1018 = vrot.slane %v986, %v1017
  %v1020 = vmul.f32 %v1012, %v1018
  %v1021 = vmul.f32 %v1013, %v1018
  %v1023 = vlaneseq
  %v1024 = vshrl.u32 %v1023, 7
  %v1025 = vsub.s32 0, %v1024
  %v1026 = vrot.slane %v987, %v1025
  %v1028 = vadd.f32 %v1020, %v1026
  %v1029 = vadd.f32 %v1021, %v1026
  %v1030 = vld [vmem:[%s10] sm:$0xff]
  %v1031 = vld [vmem:[%s10 + $0x8] sm:$0xff]
  %v1032 = vld [vmem:[%s10 + $0x10] sm:$0xff]
  %v1033 = vld [vmem:[%s10 + $0x18] sm:$0xff]
  %v1034 = vld [vmem:[%s11] sm:$0x1]
  %v1036 = vlaneseq
  %v1037 = vshrl.u32 %v1036, 7
  %v1038 = vsub.s32 0, %v1037
  %v1039 = vrot.slane %v1034, %v1038
  %v1042 = vsel %vm69, %v1028, 0
  %v1045 = vsel %vm69, %v1029, 0
  %1047 = vmatprep.subr.mxu0 0.0
  %1048 = vmatpush1.msra.mxu0 %v1030
  %1049 = vmatprep.subr.mxu0 0.0
  %1050 = vmatpush1.msra.mxu0 %v1031
  %1051 = vmatprep.subr.mxu0 0.0
  %1052 = vmatpush1.msra.mxu0 %v1032
  %1053 = vmatprep.subr.mxu0 0.0
  %1054 = vmatpush1.msra.mxu0 %v1033
  %1055 = vmatprep.subr.mxu0 0.0
  %1056 = vmatpush1.msra.mxu0 0.0
  %1057 = vmatprep.subr.mxu0 0.0
  %1058 = vmatpush1.msra.mxu0 0.0
  %1059 = vmatprep.subr.mxu0 0.0
  %1060 = vmatpush1.msra.mxu0 0.0
  %1061 = vmatprep.subr.mxu0 0.0
  %1062 = vmatpush1.msra.mxu0 0.0
  %1063 = vmatprep.subr.mxu0 0.0
  %1064 = vmatpush1.msra.mxu0 0.0
  %1065 = vmatprep.subr.mxu0 0.0
  %1066 = vmatpush1.msra.mxu0 0.0
  %1067 = vmatprep.subr.mxu0 0.0
  %1068 = vmatpush1.msra.mxu0 0.0
  %1069 = vmatprep.subr.mxu0 0.0
  %1070 = vmatpush1.msra.mxu0 0.0
  %1071 = vmatprep.subr.mxu0 0.0
  %1072 = vmatpush1.msra.mxu0 0.0
  %1073 = vmatprep.subr.mxu0 0.0
  %1074 = vmatpush1.msra.mxu0 0.0
  %1075 = vmatprep.subr.mxu0 0.0
  %1076 = vmatpush1.msra.mxu0 0.0
  %1077 = vmatprep.subr.mxu0 0.0
  %1078 = vmatpush1.msra.mxu0 0.0
  %1079 = vmatprep.subr.mxu0 0.0
  %1080 = vmatpush1.msra.mxu0 0.0
  %1081 = vmatprep.subr.mxu0 0.0
  %1082 = vmatpush1.msra.mxu0 0.0
  %1083 = vmatprep.subr.mxu0 0.0
  %1084 = vmatpush1.msra.mxu0 0.0
  %1085 = vmatprep.subr.mxu0 0.0
  %1086 = vmatpush1.msra.mxu0 0.0
  %1087 = vmatprep.subr.mxu0 0.0
  %1088 = vmatpush1.msra.mxu0 0.0
  %1089 = vmatprep.subr.mxu0 0.0
  %1090 = vmatpush1.msra.mxu0 0.0
  %1091 = vmatprep.subr.mxu0 0.0
  %1092 = vmatpush1.msra.mxu0 0.0
  %1093 = vmatprep.subr.mxu0 0.0
  %1094 = vmatpush1.msra.mxu0 0.0
  %1095 = vmatprep.subr.mxu0 0.0
  %1096 = vmatpush1.msra.mxu0 0.0
  %1097 = vmatprep.subr.mxu0 0.0
  %1098 = vmatpush1.msra.mxu0 0.0
  %1099 = vmatprep.subr.mxu0 0.0
  %1100 = vmatpush1.msra.mxu0 0.0
  %1101 = vmatprep.subr.mxu0 0.0
  %1102 = vmatpush1.msra.mxu0 0.0
  %1103 = vmatprep.subr.mxu0 0.0
  %1104 = vmatpush1.msra.mxu0 0.0
  %1105 = vmatprep.subr.mxu0 0.0
  %1106 = vmatpush1.msra.mxu0 0.0
  %1107 = vmatprep.subr.mxu0 0.0
  %1108 = vmatpush1.msra.mxu0 0.0
  %1109 = vmatprep.subr.mxu0 0.0
  %1110 = vmatpush1.msra.mxu0 0.0
  %1111 = vmatprep.mubr.f32.mxu0 0.0
  %1112 = vmatmul.mubr.f32.gmra.mrb[0].mxu0 %v1042
  %v1113 = vpop.f32.mrb[0].mxu0
  %v1114 = vadd.f32 %v1039, %v1113
  %v1115 = vpop.f32.mrb[0].mxu0
  %1116 = vmatprep.mubr.f32.mxu0 0.0
  %1117 = vmatmul.mubr.f32.gmra.mrb[0].mxu0 %v1045
  %v1118 = vpop.f32.mrb[0].mxu0
  %v1119 = vadd.f32 %v1039, %v1118
  %v1120 = vpop.f32.mrb[0].mxu0
  %1121 = vdwg.mxu0
  %v1122 = vmul.f32 %v1114, 0.5
  %v1123 = vmul.f32 %v1119, 0.5
  %v1124 = vmul.f32 %v1114, 0.70710677
  %v1125 = vmul.f32 %v1119, 0.70710677
  %v1126 = verf.f32.pop %v1124
  %v1127 = verf.f32.pop %v1125
  %v1128 = vadd.f32 %v1126, 1.0
  %v1129 = vadd.f32 %v1127, 1.0
  %v1130 = vmul.f32 %v1122, %v1128
  %v1131 = vmul.f32 %v1123, %v1129
  %v1132 = vld [vmem:[%s12] sm:$0xff]
  %v1133 = vld [vmem:[%s12 + $0x8] sm:$0xff]
  %v1134 = vld [vmem:[%s12 + $0x10] sm:$0xff]
  %v1135 = vld [vmem:[%s12 + $0x18] sm:$0xff]
  %v1136 = vld [vmem:[%s12 + $0x20] sm:$0xff]
  %v1137 = vld [vmem:[%s12 + $0x28] sm:$0xff]
  %v1138 = vld [vmem:[%s12 + $0x30] sm:$0xff]
  %v1139 = vld [vmem:[%s12 + $0x38] sm:$0xff]
  %v1140 = vld [vmem:[%s13] sm:$0x1]
  %v1142 = vlaneseq
  %v1143 = vshrl.u32 %v1142, 7
  %v1144 = vsub.s32 0, %v1143
  %v1145 = vrot.slane %v1140, %v1144
  %vm1147 = vcmask 523264
  %v1149 = vsel %vm1147, %v1130, 0
  %v1152 = vsel %vm1147, %v1131, 0
  %1154 = vmatprep.subr.mxu0 0.0
  %1155 = vmatpush1.msra.mxu0 %v1132
  %1156 = vmatprep.subr.mxu0 0.0
  %1157 = vmatpush1.msra.mxu0 %v1133
  %1158 = vmatprep.subr.mxu0 0.0
  %1159 = vmatpush1.msra.mxu0 %v1134
  %1160 = vmatprep.subr.mxu0 0.0
  %1161 = vmatpush1.msra.mxu0 %v1135
  %1162 = vmatprep.subr.mxu0 0.0
  %1163 = vmatpush1.msra.mxu0 %v1136
  %1164 = vmatprep.subr.mxu0 0.0
  %1165 = vmatpush1.msra.mxu0 %v1137
  %1166 = vmatprep.subr.mxu0 0.0
  %1167 = vmatpush1.msra.mxu0 %v1138
  %1168 = vmatprep.subr.mxu0 0.0
  %1169 = vmatpush1.msra.mxu0 %v1139
  %1170 = vmatprep.subr.mxu0 0.0
  %1171 = vmatpush1.msra.mxu0 0.0
  %1172 = vmatprep.subr.mxu0 0.0
  %1173 = vmatpush1.msra.mxu0 0.0
  %1174 = vmatprep.subr.mxu0 0.0
  %1175 = vmatpush1.msra.mxu0 0.0
  %1176 = vmatprep.subr.mxu0 0.0
  %1177 = vmatpush1.msra.mxu0 0.0
  %1178 = vmatprep.subr.mxu0 0.0
  %1179 = vmatpush1.msra.mxu0 0.0
  %1180 = vmatprep.subr.mxu0 0.0
  %1181 = vmatpush1.msra.mxu0 0.0
  %1182 = vmatprep.subr.mxu0 0.0
  %1183 = vmatpush1.msra.mxu0 0.0
  %1184 = vmatprep.subr.mxu0 0.0
  %1185 = vmatpush1.msra.mxu0 0.0
  %1186 = vmatprep.subr.mxu0 0.0
  %1187 = vmatpush1.msra.mxu0 0.0
  %1188 = vmatprep.subr.mxu0 0.0
  %1189 = vmatpush1.msra.mxu0 0.0
  %1190 = vmatprep.subr.mxu0 0.0
  %1191 = vmatpush1.msra.mxu0 0.0
  %1192 = vmatprep.subr.mxu0 0.0
  %1193 = vmatpush1.msra.mxu0 0.0
  %1194 = vmatprep.subr.mxu0 0.0
  %1195 = vmatpush1.msra.mxu0 0.0
  %1196 = vmatprep.subr.mxu0 0.0
  %1197 = vmatpush1.msra.mxu0 0.0
  %1198 = vmatprep.subr.mxu0 0.0
  %1199 = vmatpush1.msra.mxu0 0.0
  %1200 = vmatprep.subr.mxu0 0.0
  %1201 = vmatpush1.msra.mxu0 0.0
  %1202 = vmatprep.subr.mxu0 0.0
  %1203 = vmatpush1.msra.mxu0 0.0
  %1204 = vmatprep.subr.mxu0 0.0
  %1205 = vmatpush1.msra.mxu0 0.0
  %1206 = vmatprep.subr.mxu0 0.0
  %1207 = vmatpush1.msra.mxu0 0.0
  %1208 = vmatprep.subr.mxu0 0.0
  %1209 = vmatpush1.msra.mxu0 0.0
  %1210 = vmatprep.subr.mxu0 0.0
  %1211 = vmatpush1.msra.mxu0 0.0
  %1212 = vmatprep.subr.mxu0 0.0
  %1213 = vmatpush1.msra.mxu0 0.0
  %1214 = vmatprep.subr.mxu0 0.0
  %1215 = vmatpush1.msra.mxu0 0.0
  %1216 = vmatprep.subr.mxu0 0.0
  %1217 = vmatpush1.msra.mxu0 0.0
  %1218 = vmatprep.mubr.f32.mxu0 0.0
  %1219 = vmatmul.mubr.f32.gmra.mrb[0].mxu0 %v1149
  %v1220 = vpop.f32.mrb[0].mxu0
  %v1221 = vadd.f32 %v1145, %v1220
  %v1222 = vpop.f32.mrb[0].mxu0
  %1223 = vmatprep.mubr.f32.mxu0 0.0
  %1224 = vmatmul.mubr.f32.gmra.mrb[0].mxu0 %v1152
  %v1225 = vpop.f32.mrb[0].mxu0
  %v1226 = vadd.f32 %v1145, %v1225
  %v1227 = vpop.f32.mrb[0].mxu0
  %1228 = vdwg.mxu0
  %v1229 = vadd.f32 %v1221, %v1028
  %v1230 = vadd.f32 %v1226, %v1029
  %v1231 = vld [vmem:[%s14] sm:$0x1]
  %v1232 = vld [vmem:[%s15] sm:$0x1]
  %v1233 = vsel %vm69, %v1229, 0.0
  %1234 = vadd.xlane.f32.xlu0 %v1233
  %v1235 = vpop.xlane.xlu0 %1234
  %v1236 = vsel %vm69, %v1230, 0.0
  %1237 = vadd.xlane.f32.xlu0 %v1236
  %v1238 = vpop.xlane.xlu0 %1237
  %v1239 = vmul.f32 %v1235, %v76
  %v1240 = vmul.f32 %v1238, %v76
  %v1241 = vsub.f32 %v1229, %v1239
  %v1242 = vsub.f32 %v1230, %v1240
  %v1243 = vmul.f32 %v1241, %v1241
  %v1244 = vmul.f32 %v1242, %v1242
  %v1245 = vsel %vm69, %v1243, 0.0
  %1246 = vadd.xlane.f32.xlu0 %v1245
  %v1247 = vpop.xlane.xlu0 %1246
  %v1248 = vsel %vm69, %v1244, 0.0
  %1249 = vadd.xlane.f32.xlu0 %v1248
  %v1250 = vpop.xlane.xlu0 %1249
  %v1251 = vmul.f32 %v1247, %v76
  %v1252 = vmul.f32 %v1250, %v76
  %v1253 = vadd.f32 %v1251, 1e-12
  %v1254 = vadd.f32 %v1252, 1e-12
  %v1255 = vrsqrt.pop %v1253
  %v1256 = vrsqrt.pop %v1254
  %v1257 = vmul.f32 %v1241, %v1255
  %v1258 = vmul.f32 %v1242, %v1256
  %v1260 = vlaneseq
  %v1261 = vshrl.u32 %v1260, 7
  %v1262 = vsub.s32 0, %v1261
  %v1263 = vrot.slane %v1231, %v1262
  %v1265 = vmul.f32 %v1257, %v1263
  %v1266 = vmul.f32 %v1258, %v1263
  %v1268 = vlaneseq
  %v1269 = vshrl.u32 %v1268, 7
  %v1270 = vsub.s32 0, %v1269
  %v1271 = vrot.slane %v1232, %v1270
  %v1273 = vadd.f32 %v1265, %v1271
  %v1274 = vadd.f32 %v1266, %v1271
  %s1275 = scalar_lea.vmem %s4, 32
  %v1276 = vld [vmem:[%s1275] sm:$0xff]
  %v1277 = vld [vmem:[%s1275 + $0x8] sm:$0xff]
  %v1278 = vld [vmem:[%s1275 + $0x10] sm:$0xff]
  %v1279 = vld [vmem:[%s1275 + $0x18] sm:$0xff]
  %s1280 = scalar_lea.vmem %s5, 1
  %v1281 = vld [vmem:[%s1280] sm:$0x1]
  %v1283 = vlaneseq
  %v1284 = vshrl.u32 %v1283, 7
  %v1285 = vsub.s32 0, %v1284
  %v1286 = vrot.slane %v1281, %v1285
  %v1289 = vsel %vm69, %v1273, 0
  %v1292 = vsel %vm69, %v1274, 0
  %1294 = vmatprep.subr.mxu0 0.0
  %1295 = vmatpush1.msra.mxu0 %v1276
  %1296 = vmatprep.subr.mxu0 0.0
  %1297 = vmatpush1.msra.mxu0 %v1277
  %1298 = vmatprep.subr.mxu0 0.0
  %1299 = vmatpush1.msra.mxu0 %v1278
  %1300 = vmatprep.subr.mxu0 0.0
  %1301 = vmatpush1.msra.mxu0 %v1279
  %1302 = vmatprep.subr.mxu0 0.0
  %1303 = vmatpush1.msra.mxu0 0.0
  %1304 = vmatprep.subr.mxu0 0.0
  %1305 = vmatpush1.msra.mxu0 0.0
  %1306 = vmatprep.subr.mxu0 0.0
  %1307 = vmatpush1.msra.mxu0 0.0
  %1308 = vmatprep.subr.mxu0 0.0
  %1309 = vmatpush1.msra.mxu0 0.0
  %1310 = vmatprep.subr.mxu0 0.0
  %1311 = vmatpush1.msra.mxu0 0.0
  %1312 = vmatprep.subr.mxu0 0.0
  %1313 = vmatpush1.msra.mxu0 0.0
  %1314 = vmatprep.subr.mxu0 0.0
  %1315 = vmatpush1.msra.mxu0 0.0
  %1316 = vmatprep.subr.mxu0 0.0
  %1317 = vmatpush1.msra.mxu0 0.0
  %1318 = vmatprep.subr.mxu0 0.0
  %1319 = vmatpush1.msra.mxu0 0.0
  %1320 = vmatprep.subr.mxu0 0.0
  %1321 = vmatpush1.msra.mxu0 0.0
  %1322 = vmatprep.subr.mxu0 0.0
  %1323 = vmatpush1.msra.mxu0 0.0
  %1324 = vmatprep.subr.mxu0 0.0
  %1325 = vmatpush1.msra.mxu0 0.0
  %1326 = vmatprep.subr.mxu0 0.0
  %1327 = vmatpush1.msra.mxu0 0.0
  %1328 = vmatprep.subr.mxu0 0.0
  %1329 = vmatpush1.msra.mxu0 0.0
  %1330 = vmatprep.subr.mxu0 0.0
  %1331 = vmatpush1.msra.mxu0 0.0
  %1332 = vmatprep.subr.mxu0 0.0
  %1333 = vmatpush1.msra.mxu0 0.0
  %1334 = vmatprep.subr.mxu0 0.0
  %1335 = vmatpush1.msra.mxu0 0.0
  %1336 = vmatprep.subr.mxu0 0.0
  %1337 = vmatpush1.msra.mxu0 0.0
  %1338 = vmatprep.subr.mxu0 0.0
  %1339 = vmatpush1.msra.mxu0 0.0
  %1340 = vmatprep.subr.mxu0 0.0
  %1341 = vmatpush1.msra.mxu0 0.0
  %1342 = vmatprep.subr.mxu0 0.0
  %1343 = vmatpush1.msra.mxu0 0.0
  %1344 = vmatprep.subr.mxu0 0.0
  %1345 = vmatpush1.msra.mxu0 0.0
  %1346 = vmatprep.subr.mxu0 0.0
  %1347 = vmatpush1.msra.mxu0 0.0
  %1348 = vmatprep.subr.mxu0 0.0
  %1349 = vmatpush1.msra.mxu0 0.0
  %1350 = vmatprep.subr.mxu0 0.0
  %1351 = vmatpush1.msra.mxu0 0.0
  %1352 = vmatprep.subr.mxu0 0.0
  %1353 = vmatpush1.msra.mxu0 0.0
  %1354 = vmatprep.subr.mxu0 0.0
  %1355 = vmatpush1.msra.mxu0 0.0
  %1356 = vmatprep.subr.mxu0 0.0
  %1357 = vmatpush1.msra.mxu0 0.0
  %1358 = vmatprep.mubr.f32.mxu0 0.0
  %1359 = vmatmul.mubr.f32.gmra.mrb[0].mxu0 %v1289
  %v1360 = vpop.f32.mrb[0].mxu0
  %v1361 = vadd.f32 %v1286, %v1360
  %v1362 = vpop.f32.mrb[0].mxu0
  %1363 = vmatprep.mubr.f32.mxu0 0.0
  %1364 = vmatmul.mubr.f32.gmra.mrb[0].mxu0 %v1292
  %v1365 = vpop.f32.mrb[0].mxu0
  %v1366 = vadd.f32 %v1286, %v1365
  %v1367 = vpop.f32.mrb[0].mxu0
  %1368 = vdwg.mxu0
  %1370 = vrot.lane.b32.xlu0 %v1361, 96
  %v1371 = vpop.permute.xlu0 %1370
  %v1372 = vsel %vm209, %v1361, 0
  %v1374 = vsel %vm209, %v1371, 0
  %1376 = vmatprep.subr.mxu0 0.0
  %1377 = vmatpush1.xpose.msra.mxu0 %v1374
  %1378 = vmatprep.subr.mxu0 0.0
  %1379 = vmatpush1.xpose.msra.mxu0 0.0
  %1380 = vmatprep.subr.mxu0 0.0
  %1381 = vmatpush1.xpose.msra.mxu0 0.0
  %1382 = vmatprep.subr.mxu0 0.0
  %1383 = vmatpush1.xpose.msra.mxu0 0.0
  %1384 = vmatprep.subr.mxu0 0.0
  %1385 = vmatpush1.xpose.msra.mxu0 0.0
  %1386 = vmatprep.subr.mxu0 0.0
  %1387 = vmatpush1.xpose.msra.mxu0 0.0
  %1388 = vmatprep.subr.mxu0 0.0
  %1389 = vmatpush1.xpose.msra.mxu0 0.0
  %1390 = vmatprep.subr.mxu0 0.0
  %1391 = vmatpush1.xpose.msra.mxu0 0.0
  %1392 = vmatprep.subr.mxu0 0.0
  %1393 = vmatpush1.xpose.msra.mxu0 0.0
  %1394 = vmatprep.subr.mxu0 0.0
  %1395 = vmatpush1.xpose.msra.mxu0 0.0
  %1396 = vmatprep.subr.mxu0 0.0
  %1397 = vmatpush1.xpose.msra.mxu0 0.0
  %1398 = vmatprep.subr.mxu0 0.0
  %1399 = vmatpush1.xpose.msra.mxu0 0.0
  %1400 = vmatprep.subr.mxu0 0.0
  %1401 = vmatpush1.xpose.msra.mxu0 0.0
  %1402 = vmatprep.subr.mxu0 0.0
  %1403 = vmatpush1.xpose.msra.mxu0 0.0
  %1404 = vmatprep.subr.mxu0 0.0
  %1405 = vmatpush1.xpose.msra.mxu0 0.0
  %1406 = vmatprep.subr.mxu0 0.0
  %1407 = vmatpush1.xpose.msra.mxu0 0.0
  %1408 = vmatprep.subr.mxu0 0.0
  %1409 = vmatpush1.xpose.msra.mxu0 0.0
  %1410 = vmatprep.subr.mxu0 0.0
  %1411 = vmatpush1.xpose.msra.mxu0 0.0
  %1412 = vmatprep.subr.mxu0 0.0
  %1413 = vmatpush1.xpose.msra.mxu0 0.0
  %1414 = vmatprep.subr.mxu0 0.0
  %1415 = vmatpush1.xpose.msra.mxu0 0.0
  %1416 = vmatprep.subr.mxu0 0.0
  %1417 = vmatpush1.xpose.msra.mxu0 0.0
  %1418 = vmatprep.subr.mxu0 0.0
  %1419 = vmatpush1.xpose.msra.mxu0 0.0
  %1420 = vmatprep.subr.mxu0 0.0
  %1421 = vmatpush1.xpose.msra.mxu0 0.0
  %1422 = vmatprep.subr.mxu0 0.0
  %1423 = vmatpush1.xpose.msra.mxu0 0.0
  %1424 = vmatprep.subr.mxu0 0.0
  %1425 = vmatpush1.xpose.msra.mxu0 0.0
  %1426 = vmatprep.subr.mxu0 0.0
  %1427 = vmatpush1.xpose.msra.mxu0 0.0
  %1428 = vmatprep.subr.mxu0 0.0
  %1429 = vmatpush1.xpose.msra.mxu0 0.0
  %1430 = vmatprep.subr.mxu0 0.0
  %1431 = vmatpush1.xpose.msra.mxu0 0.0
  %1432 = vmatprep.subr.mxu0 0.0
  %1433 = vmatpush1.xpose.msra.mxu0 0.0
  %1434 = vmatprep.subr.mxu0 0.0
  %1435 = vmatpush1.xpose.msra.mxu0 0.0
  %1436 = vmatprep.subr.mxu0 0.0
  %1437 = vmatpush1.xpose.msra.mxu0 0.0
  %1438 = vmatprep.subr.mxu0 0.0
  %1439 = vmatpush1.xpose.msra.mxu0 0.0
  %1440 = vmatprep.mubr.f32.mxu0 0.0
  %1441 = vmatmul.mubr.f32.gmra.mrb[0].mxu0 %v1372
  %v1442 = vpop.f32.mrb[0].mxu0
  %v1443 = vadd.f32 0.0, %v1442
  %v1444 = vpop.f32.mrb[0].mxu0
  %1445 = vdwg.mxu0
  %v1446 = vmul.f32 %v1443, 0.25
  %v1447 = vadd.f32 %v1446, %v288
  %v1448 = vsel %vm290, %v1447, -inf
  %1449 = vmax.xlane.f32.xlu0 %v1448
  %v1450 = vpop.xlane.xlu0 %1449
  %v1451 = vsub.f32 %v1447, %v1450
  %v1452 = vmul.f32 %v1451, 1.442695
  %v1453 = vpow.pop %v1452
  %v1454 = vsel %vm290, %v1453, 0.0
  %1455 = vadd.xlane.f32.xlu0 %v1454
  %v1456 = vpop.xlane.xlu0 %1455
  %v1457 = vrcp.pop %v1456
  %v1458 = vmul.f32 %v1453, %v1457
  %1459 = vrot.lane.b32.xlu0 %v1361, 64
  %v1460 = vpop.permute.xlu0 %1459
  %v1463 = vsel %vm290, %v1458, 0
  %1465 = vmatprep.subr.mxu0 0.0
  %1466 = vmatpush1.msra.mxu0 %v1460
  %1467 = vmatprep.subr.mxu0 0.0
  %1468 = vmatpush1.msra.mxu0 0.0
  %1469 = vmatprep.subr.mxu0 0.0
  %1470 = vmatpush1.msra.mxu0 0.0
  %1471 = vmatprep.subr.mxu0 0.0
  %1472 = vmatpush1.msra.mxu0 0.0
  %1473 = vmatprep.subr.mxu0 0.0
  %1474 = vmatpush1.msra.mxu0 0.0
  %1475 = vmatprep.subr.mxu0 0.0
  %1476 = vmatpush1.msra.mxu0 0.0
  %1477 = vmatprep.subr.mxu0 0.0
  %1478 = vmatpush1.msra.mxu0 0.0
  %1479 = vmatprep.subr.mxu0 0.0
  %1480 = vmatpush1.msra.mxu0 0.0
  %1481 = vmatprep.subr.mxu0 0.0
  %1482 = vmatpush1.msra.mxu0 0.0
  %1483 = vmatprep.subr.mxu0 0.0
  %1484 = vmatpush1.msra.mxu0 0.0
  %1485 = vmatprep.subr.mxu0 0.0
  %1486 = vmatpush1.msra.mxu0 0.0
  %1487 = vmatprep.subr.mxu0 0.0
  %1488 = vmatpush1.msra.mxu0 0.0
  %1489 = vmatprep.subr.mxu0 0.0
  %1490 = vmatpush1.msra.mxu0 0.0
  %1491 = vmatprep.subr.mxu0 0.0
  %1492 = vmatpush1.msra.mxu0 0.0
  %1493 = vmatprep.subr.mxu0 0.0
  %1494 = vmatpush1.msra.mxu0 0.0
  %1495 = vmatprep.subr.mxu0 0.0
  %1496 = vmatpush1.msra.mxu0 0.0
  %1497 = vmatprep.subr.mxu0 0.0
  %1498 = vmatpush1.msra.mxu0 0.0
  %1499 = vmatprep.subr.mxu0 0.0
  %1500 = vmatpush1.msra.mxu0 0.0
  %1501 = vmatprep.subr.mxu0 0.0
  %1502 = vmatpush1.msra.mxu0 0.0
  %1503 = vmatprep.subr.mxu0 0.0
  %1504 = vmatpush1.msra.mxu0 0.0
  %1505 = vmatprep.subr.mxu0 0.0
  %1506 = vmatpush1.msra.mxu0 0.0
  %1507 = vmatprep.subr.mxu0 0.0
  %1508 = vmatpush1.msra.mxu0 0.0
  %1509 = vmatprep.subr.mxu0 0.0
  %1510 = vmatpush1.msra.mxu0 0.0
  %1511 = vmatprep.subr.mxu0 0.0
  %1512 = vmatpush1.msra.mxu0 0.0
  %1513 = vmatprep.subr.mxu0 0.0
  %1514 = vmatpush1.msra.mxu0 0.0
  %1515 = vmatprep.subr.mxu0 0.0
  %1516 = vmatpush1.msra.mxu0 0.0
  %1517 = vmatprep.subr.mxu0 0.0
  %1518 = vmatpush1.msra.mxu0 0.0
  %1519 = vmatprep.subr.mxu0 0.0
  %1520 = vmatpush1.msra.mxu0 0.0
  %1521 = vmatprep.subr.mxu0 0.0
  %1522 = vmatpush1.msra.mxu0 0.0
  %1523 = vmatprep.subr.mxu0 0.0
  %1524 = vmatpush1.msra.mxu0 0.0
  %1525 = vmatprep.subr.mxu0 0.0
  %1526 = vmatpush1.msra.mxu0 0.0
  %1527 = vmatprep.subr.mxu0 0.0
  %1528 = vmatpush1.msra.mxu0 0.0
  %1529 = vmatprep.mubr.f32.mxu0 0.0
  %1530 = vmatmul.mubr.f32.gmra.mrb[0].mxu0 %v1463
  %v1531 = vpop.f32.mrb[0].mxu0
  %v1532 = vadd.f32 0.0, %v1531
  %v1533 = vpop.f32.mrb[0].mxu0
  %1534 = vdwg.mxu0
  %1535 = vrot.lane.b32.xlu0 %v1361, 112
  %v1536 = vpop.permute.xlu0 %1535
  %1537 = vrot.lane.b32.xlu0 %v1361, 80
  %v1538 = vpop.permute.xlu0 %1537
  %v1539 = vsel %vm209, %v1536, 0
  %v1541 = vsel %vm209, %v1538, 0
  %1543 = vmatprep.subr.mxu0 0.0
  %1544 = vmatpush1.xpose.msra.mxu0 %v1541
  %1545 = vmatprep.subr.mxu0 0.0
  %1546 = vmatpush1.xpose.msra.mxu0 0.0
  %1547 = vmatprep.subr.mxu0 0.0
  %1548 = vmatpush1.xpose.msra.mxu0 0.0
  %1549 = vmatprep.subr.mxu0 0.0
  %1550 = vmatpush1.xpose.msra.mxu0 0.0
  %1551 = vmatprep.subr.mxu0 0.0
  %1552 = vmatpush1.xpose.msra.mxu0 0.0
  %1553 = vmatprep.subr.mxu0 0.0
  %1554 = vmatpush1.xpose.msra.mxu0 0.0
  %1555 = vmatprep.subr.mxu0 0.0
  %1556 = vmatpush1.xpose.msra.mxu0 0.0
  %1557 = vmatprep.subr.mxu0 0.0
  %1558 = vmatpush1.xpose.msra.mxu0 0.0
  %1559 = vmatprep.subr.mxu0 0.0
  %1560 = vmatpush1.xpose.msra.mxu0 0.0
  %1561 = vmatprep.subr.mxu0 0.0
  %1562 = vmatpush1.xpose.msra.mxu0 0.0
  %1563 = vmatprep.subr.mxu0 0.0
  %1564 = vmatpush1.xpose.msra.mxu0 0.0
  %1565 = vmatprep.subr.mxu0 0.0
  %1566 = vmatpush1.xpose.msra.mxu0 0.0
  %1567 = vmatprep.subr.mxu0 0.0
  %1568 = vmatpush1.xpose.msra.mxu0 0.0
  %1569 = vmatprep.subr.mxu0 0.0
  %1570 = vmatpush1.xpose.msra.mxu0 0.0
  %1571 = vmatprep.subr.mxu0 0.0
  %1572 = vmatpush1.xpose.msra.mxu0 0.0
  %1573 = vmatprep.subr.mxu0 0.0
  %1574 = vmatpush1.xpose.msra.mxu0 0.0
  %1575 = vmatprep.subr.mxu0 0.0
  %1576 = vmatpush1.xpose.msra.mxu0 0.0
  %1577 = vmatprep.subr.mxu0 0.0
  %1578 = vmatpush1.xpose.msra.mxu0 0.0
  %1579 = vmatprep.subr.mxu0 0.0
  %1580 = vmatpush1.xpose.msra.mxu0 0.0
  %1581 = vmatprep.subr.mxu0 0.0
  %1582 = vmatpush1.xpose.msra.mxu0 0.0
  %1583 = vmatprep.subr.mxu0 0.0
  %1584 = vmatpush1.xpose.msra.mxu0 0.0
  %1585 = vmatprep.subr.mxu0 0.0
  %1586 = vmatpush1.xpose.msra.mxu0 0.0
  %1587 = vmatprep.subr.mxu0 0.0
  %1588 = vmatpush1.xpose.msra.mxu0 0.0
  %1589 = vmatprep.subr.mxu0 0.0
  %1590 = vmatpush1.xpose.msra.mxu0 0.0
  %1591 = vmatprep.subr.mxu0 0.0
  %1592 = vmatpush1.xpose.msra.mxu0 0.0
  %1593 = vmatprep.subr.mxu0 0.0
  %1594 = vmatpush1.xpose.msra.mxu0 0.0
  %1595 = vmatprep.subr.mxu0 0.0
  %1596 = vmatpush1.xpose.msra.mxu0 0.0
  %1597 = vmatprep.subr.mxu0 0.0
  %1598 = vmatpush1.xpose.msra.mxu0 0.0
  %1599 = vmatprep.subr.mxu0 0.0
  %1600 = vmatpush1.xpose.msra.mxu0 0.0
  %1601 = vmatprep.subr.mxu0 0.0
  %1602 = vmatpush1.xpose.msra.mxu0 0.0
  %1603 = vmatprep.subr.mxu0 0.0
  %1604 = vmatpush1.xpose.msra.mxu0 0.0
  %1605 = vmatprep.subr.mxu0 0.0
  %1606 = vmatpush1.xpose.msra.mxu0 0.0
  %1607 = vmatprep.mubr.f32.mxu0 0.0
  %1608 = vmatmul.mubr.f32.gmra.mrb[0].mxu0 %v1539
  %v1609 = vpop.f32.mrb[0].mxu0
  %v1610 = vadd.f32 0.0, %v1609
  %v1611 = vpop.f32.mrb[0].mxu0
  %1612 = vdwg.mxu0
  %v1613 = vmul.f32 %v1610, 0.25
  %v1614 = vadd.f32 %v1613, %v288
  %v1615 = vsel %vm290, %v1614, -inf
  %1616 = vmax.xlane.f32.xlu0 %v1615
  %v1617 = vpop.xlane.xlu0 %1616
  %v1618 = vsub.f32 %v1614, %v1617
  %v1619 = vmul.f32 %v1618, 1.442695
  %v1620 = vpow.pop %v1619
  %v1621 = vsel %vm290, %v1620, 0.0
  %1622 = vadd.xlane.f32.xlu0 %v1621
  %v1623 = vpop.xlane.xlu0 %1622
  %v1624 = vrcp.pop %v1623
  %v1625 = vmul.f32 %v1620, %v1624
  %1626 = vrot.lane.b32.xlu0 %v1361, 48
  %v1627 = vpop.permute.xlu0 %1626
  %v1630 = vsel %vm290, %v1625, 0
  %1632 = vmatprep.subr.mxu0 0.0
  %1633 = vmatpush1.msra.mxu0 %v1627
  %1634 = vmatprep.subr.mxu0 0.0
  %1635 = vmatpush1.msra.mxu0 0.0
  %1636 = vmatprep.subr.mxu0 0.0
  %1637 = vmatpush1.msra.mxu0 0.0
  %1638 = vmatprep.subr.mxu0 0.0
  %1639 = vmatpush1.msra.mxu0 0.0
  %1640 = vmatprep.subr.mxu0 0.0
  %1641 = vmatpush1.msra.mxu0 0.0
  %1642 = vmatprep.subr.mxu0 0.0
  %1643 = vmatpush1.msra.mxu0 0.0
  %1644 = vmatprep.subr.mxu0 0.0
  %1645 = vmatpush1.msra.mxu0 0.0
  %1646 = vmatprep.subr.mxu0 0.0
  %1647 = vmatpush1.msra.mxu0 0.0
  %1648 = vmatprep.subr.mxu0 0.0
  %1649 = vmatpush1.msra.mxu0 0.0
  %1650 = vmatprep.subr.mxu0 0.0
  %1651 = vmatpush1.msra.mxu0 0.0
  %1652 = vmatprep.subr.mxu0 0.0
  %1653 = vmatpush1.msra.mxu0 0.0
  %1654 = vmatprep.subr.mxu0 0.0
  %1655 = vmatpush1.msra.mxu0 0.0
  %1656 = vmatprep.subr.mxu0 0.0
  %1657 = vmatpush1.msra.mxu0 0.0
  %1658 = vmatprep.subr.mxu0 0.0
  %1659 = vmatpush1.msra.mxu0 0.0
  %1660 = vmatprep.subr.mxu0 0.0
  %1661 = vmatpush1.msra.mxu0 0.0
  %1662 = vmatprep.subr.mxu0 0.0
  %1663 = vmatpush1.msra.mxu0 0.0
  %1664 = vmatprep.subr.mxu0 0.0
  %1665 = vmatpush1.msra.mxu0 0.0
  %1666 = vmatprep.subr.mxu0 0.0
  %1667 = vmatpush1.msra.mxu0 0.0
  %1668 = vmatprep.subr.mxu0 0.0
  %1669 = vmatpush1.msra.mxu0 0.0
  %1670 = vmatprep.subr.mxu0 0.0
  %1671 = vmatpush1.msra.mxu0 0.0
  %1672 = vmatprep.subr.mxu0 0.0
  %1673 = vmatpush1.msra.mxu0 0.0
  %1674 = vmatprep.subr.mxu0 0.0
  %1675 = vmatpush1.msra.mxu0 0.0
  %1676 = vmatprep.subr.mxu0 0.0
  %1677 = vmatpush1.msra.mxu0 0.0
  %1678 = vmatprep.subr.mxu0 0.0
  %1679 = vmatpush1.msra.mxu0 0.0
  %1680 = vmatprep.subr.mxu0 0.0
  %1681 = vmatpush1.msra.mxu0 0.0
  %1682 = vmatprep.subr.mxu0 0.0
  %1683 = vmatpush1.msra.mxu0 0.0
  %1684 = vmatprep.subr.mxu0 0.0
  %1685 = vmatpush1.msra.mxu0 0.0
  %1686 = vmatprep.subr.mxu0 0.0
  %1687 = vmatpush1.msra.mxu0 0.0
  %1688 = vmatprep.subr.mxu0 0.0
  %1689 = vmatpush1.msra.mxu0 0.0
  %1690 = vmatprep.subr.mxu0 0.0
  %1691 = vmatpush1.msra.mxu0 0.0
  %1692 = vmatprep.subr.mxu0 0.0
  %1693 = vmatpush1.msra.mxu0 0.0
  %1694 = vmatprep.subr.mxu0 0.0
  %1695 = vmatpush1.msra.mxu0 0.0
  %1696 = vmatprep.mubr.f32.mxu0 0.0
  %1697 = vmatmul.mubr.f32.gmra.mrb[0].mxu0 %v1630
  %v1698 = vpop.f32.mrb[0].mxu0
  %v1699 = vadd.f32 0.0, %v1698
  %v1700 = vpop.f32.mrb[0].mxu0
  %1701 = vdwg.mxu0
  %1703 = vrot.lane.b32.xlu0 %v1699, 16
  %v1704 = vpop.permute.xlu0 %1703
  %v1706 = vsel %vm209, %v1532, %v1704
  %1708 = vrot.lane.b32.xlu0 %v1366, 96
  %v1709 = vpop.permute.xlu0 %1708
  %v1710 = vsel %vm209, %v1366, 0
  %v1712 = vsel %vm209, %v1709, 0
  %1714 = vmatprep.subr.mxu0 0.0
  %1715 = vmatpush1.xpose.msra.mxu0 %v1712
  %1716 = vmatprep.subr.mxu0 0.0
  %1717 = vmatpush1.xpose.msra.mxu0 0.0
  %1718 = vmatprep.subr.mxu0 0.0
  %1719 = vmatpush1.xpose.msra.mxu0 0.0
  %1720 = vmatprep.subr.mxu0 0.0
  %1721 = vmatpush1.xpose.msra.mxu0 0.0
  %1722 = vmatprep.subr.mxu0 0.0
  %1723 = vmatpush1.xpose.msra.mxu0 0.0
  %1724 = vmatprep.subr.mxu0 0.0
  %1725 = vmatpush1.xpose.msra.mxu0 0.0
  %1726 = vmatprep.subr.mxu0 0.0
  %1727 = vmatpush1.xpose.msra.mxu0 0.0
  %1728 = vmatprep.subr.mxu0 0.0
  %1729 = vmatpush1.xpose.msra.mxu0 0.0
  %1730 = vmatprep.subr.mxu0 0.0
  %1731 = vmatpush1.xpose.msra.mxu0 0.0
  %1732 = vmatprep.subr.mxu0 0.0
  %1733 = vmatpush1.xpose.msra.mxu0 0.0
  %1734 = vmatprep.subr.mxu0 0.0
  %1735 = vmatpush1.xpose.msra.mxu0 0.0
  %1736 = vmatprep.subr.mxu0 0.0
  %1737 = vmatpush1.xpose.msra.mxu0 0.0
  %1738 = vmatprep.subr.mxu0 0.0
  %1739 = vmatpush1.xpose.msra.mxu0 0.0
  %1740 = vmatprep.subr.mxu0 0.0
  %1741 = vmatpush1.xpose.msra.mxu0 0.0
  %1742 = vmatprep.subr.mxu0 0.0
  %1743 = vmatpush1.xpose.msra.mxu0 0.0
  %1744 = vmatprep.subr.mxu0 0.0
  %1745 = vmatpush1.xpose.msra.mxu0 0.0
  %1746 = vmatprep.subr.mxu0 0.0
  %1747 = vmatpush1.xpose.msra.mxu0 0.0
  %1748 = vmatprep.subr.mxu0 0.0
  %1749 = vmatpush1.xpose.msra.mxu0 0.0
  %1750 = vmatprep.subr.mxu0 0.0
  %1751 = vmatpush1.xpose.msra.mxu0 0.0
  %1752 = vmatprep.subr.mxu0 0.0
  %1753 = vmatpush1.xpose.msra.mxu0 0.0
  %1754 = vmatprep.subr.mxu0 0.0
  %1755 = vmatpush1.xpose.msra.mxu0 0.0
  %1756 = vmatprep.subr.mxu0 0.0
  %1757 = vmatpush1.xpose.msra.mxu0 0.0
  %1758 = vmatprep.subr.mxu0 0.0
  %1759 = vmatpush1.xpose.msra.mxu0 0.0
  %1760 = vmatprep.subr.mxu0 0.0
  %1761 = vmatpush1.xpose.msra.mxu0 0.0
  %1762 = vmatprep.subr.mxu0 0.0
  %1763 = vmatpush1.xpose.msra.mxu0 0.0
  %1764 = vmatprep.subr.mxu0 0.0
  %1765 = vmatpush1.xpose.msra.mxu0 0.0
  %1766 = vmatprep.subr.mxu0 0.0
  %1767 = vmatpush1.xpose.msra.mxu0 0.0
  %1768 = vmatprep.subr.mxu0 0.0
  %1769 = vmatpush1.xpose.msra.mxu0 0.0
  %1770 = vmatprep.subr.mxu0 0.0
  %1771 = vmatpush1.xpose.msra.mxu0 0.0
  %1772 = vmatprep.subr.mxu0 0.0
  %1773 = vmatpush1.xpose.msra.mxu0 0.0
  %1774 = vmatprep.subr.mxu0 0.0
  %1775 = vmatpush1.xpose.msra.mxu0 0.0
  %1776 = vmatprep.subr.mxu0 0.0
  %1777 = vmatpush1.xpose.msra.mxu0 0.0
  %1778 = vmatprep.mubr.f32.mxu0 0.0
  %1779 = vmatmul.mubr.f32.gmra.mrb[0].mxu0 %v1710
  %v1780 = vpop.f32.mrb[0].mxu0
  %v1781 = vadd.f32 0.0, %v1780
  %v1782 = vpop.f32.mrb[0].mxu0
  %1783 = vdwg.mxu0
  %v1784 = vmul.f32 %v1781, 0.25
  %v1785 = vadd.f32 %v1784, %v631
  %v1786 = vsel %vm290, %v1785, -inf
  %1787 = vmax.xlane.f32.xlu0 %v1786
  %v1788 = vpop.xlane.xlu0 %1787
  %v1789 = vsub.f32 %v1785, %v1788
  %v1790 = vmul.f32 %v1789, 1.442695
  %v1791 = vpow.pop %v1790
  %v1792 = vsel %vm290, %v1791, 0.0
  %1793 = vadd.xlane.f32.xlu0 %v1792
  %v1794 = vpop.xlane.xlu0 %1793
  %v1795 = vrcp.pop %v1794
  %v1796 = vmul.f32 %v1791, %v1795
  %1797 = vrot.lane.b32.xlu0 %v1366, 64
  %v1798 = vpop.permute.xlu0 %1797
  %v1801 = vsel %vm290, %v1796, 0
  %1803 = vmatprep.subr.mxu0 0.0
  %1804 = vmatpush1.msra.mxu0 %v1798
  %1805 = vmatprep.subr.mxu0 0.0
  %1806 = vmatpush1.msra.mxu0 0.0
  %1807 = vmatprep.subr.mxu0 0.0
  %1808 = vmatpush1.msra.mxu0 0.0
  %1809 = vmatprep.subr.mxu0 0.0
  %1810 = vmatpush1.msra.mxu0 0.0
  %1811 = vmatprep.subr.mxu0 0.0
  %1812 = vmatpush1.msra.mxu0 0.0
  %1813 = vmatprep.subr.mxu0 0.0
  %1814 = vmatpush1.msra.mxu0 0.0
  %1815 = vmatprep.subr.mxu0 0.0
  %1816 = vmatpush1.msra.mxu0 0.0
  %1817 = vmatprep.subr.mxu0 0.0
  %1818 = vmatpush1.msra.mxu0 0.0
  %1819 = vmatprep.subr.mxu0 0.0
  %1820 = vmatpush1.msra.mxu0 0.0
  %1821 = vmatprep.subr.mxu0 0.0
  %1822 = vmatpush1.msra.mxu0 0.0
  %1823 = vmatprep.subr.mxu0 0.0
  %1824 = vmatpush1.msra.mxu0 0.0
  %1825 = vmatprep.subr.mxu0 0.0
  %1826 = vmatpush1.msra.mxu0 0.0
  %1827 = vmatprep.subr.mxu0 0.0
  %1828 = vmatpush1.msra.mxu0 0.0
  %1829 = vmatprep.subr.mxu0 0.0
  %1830 = vmatpush1.msra.mxu0 0.0
  %1831 = vmatprep.subr.mxu0 0.0
  %1832 = vmatpush1.msra.mxu0 0.0
  %1833 = vmatprep.subr.mxu0 0.0
  %1834 = vmatpush1.msra.mxu0 0.0
  %1835 = vmatprep.subr.mxu0 0.0
  %1836 = vmatpush1.msra.mxu0 0.0
  %1837 = vmatprep.subr.mxu0 0.0
  %1838 = vmatpush1.msra.mxu0 0.0
  %1839 = vmatprep.subr.mxu0 0.0
  %1840 = vmatpush1.msra.mxu0 0.0
  %1841 = vmatprep.subr.mxu0 0.0
  %1842 = vmatpush1.msra.mxu0 0.0
  %1843 = vmatprep.subr.mxu0 0.0
  %1844 = vmatpush1.msra.mxu0 0.0
  %1845 = vmatprep.subr.mxu0 0.0
  %1846 = vmatpush1.msra.mxu0 0.0
  %1847 = vmatprep.subr.mxu0 0.0
  %1848 = vmatpush1.msra.mxu0 0.0
  %1849 = vmatprep.subr.mxu0 0.0
  %1850 = vmatpush1.msra.mxu0 0.0
  %1851 = vmatprep.subr.mxu0 0.0
  %1852 = vmatpush1.msra.mxu0 0.0
  %1853 = vmatprep.subr.mxu0 0.0
  %1854 = vmatpush1.msra.mxu0 0.0
  %1855 = vmatprep.subr.mxu0 0.0
  %1856 = vmatpush1.msra.mxu0 0.0
  %1857 = vmatprep.subr.mxu0 0.0
  %1858 = vmatpush1.msra.mxu0 0.0
  %1859 = vmatprep.subr.mxu0 0.0
  %1860 = vmatpush1.msra.mxu0 0.0
  %1861 = vmatprep.subr.mxu0 0.0
  %1862 = vmatpush1.msra.mxu0 0.0
  %1863 = vmatprep.subr.mxu0 0.0
  %1864 = vmatpush1.msra.mxu0 0.0
  %1865 = vmatprep.subr.mxu0 0.0
  %1866 = vmatpush1.msra.mxu0 0.0
  %1867 = vmatprep.mubr.f32.mxu0 0.0
  %1868 = vmatmul.mubr.f32.gmra.mrb[0].mxu0 %v1801
  %v1869 = vpop.f32.mrb[0].mxu0
  %v1870 = vadd.f32 0.0, %v1869
  %v1871 = vpop.f32.mrb[0].mxu0
  %1872 = vdwg.mxu0
  %1873 = vrot.lane.b32.xlu0 %v1366, 112
  %v1874 = vpop.permute.xlu0 %1873
  %1875 = vrot.lane.b32.xlu0 %v1366, 80
  %v1876 = vpop.permute.xlu0 %1875
  %v1877 = vsel %vm209, %v1874, 0
  %v1879 = vsel %vm209, %v1876, 0
  %1881 = vmatprep.subr.mxu0 0.0
  %1882 = vmatpush1.xpose.msra.mxu0 %v1879
  %1883 = vmatprep.subr.mxu0 0.0
  %1884 = vmatpush1.xpose.msra.mxu0 0.0
  %1885 = vmatprep.subr.mxu0 0.0
  %1886 = vmatpush1.xpose.msra.mxu0 0.0
  %1887 = vmatprep.subr.mxu0 0.0
  %1888 = vmatpush1.xpose.msra.mxu0 0.0
  %1889 = vmatprep.subr.mxu0 0.0
  %1890 = vmatpush1.xpose.msra.mxu0 0.0
  %1891 = vmatprep.subr.mxu0 0.0
  %1892 = vmatpush1.xpose.msra.mxu0 0.0
  %1893 = vmatprep.subr.mxu0 0.0
  %1894 = vmatpush1.xpose.msra.mxu0 0.0
  %1895 = vmatprep.subr.mxu0 0.0
  %1896 = vmatpush1.xpose.msra.mxu0 0.0
  %1897 = vmatprep.subr.mxu0 0.0
  %1898 = vmatpush1.xpose.msra.mxu0 0.0
  %1899 = vmatprep.subr.mxu0 0.0
  %1900 = vmatpush1.xpose.msra.mxu0 0.0
  %1901 = vmatprep.subr.mxu0 0.0
  %1902 = vmatpush1.xpose.msra.mxu0 0.0
  %1903 = vmatprep.subr.mxu0 0.0
  %1904 = vmatpush1.xpose.msra.mxu0 0.0
  %1905 = vmatprep.subr.mxu0 0.0
  %1906 = vmatpush1.xpose.msra.mxu0 0.0
  %1907 = vmatprep.subr.mxu0 0.0
  %1908 = vmatpush1.xpose.msra.mxu0 0.0
  %1909 = vmatprep.subr.mxu0 0.0
  %1910 = vmatpush1.xpose.msra.mxu0 0.0
  %1911 = vmatprep.subr.mxu0 0.0
  %1912 = vmatpush1.xpose.msra.mxu0 0.0
  %1913 = vmatprep.subr.mxu0 0.0
  %1914 = vmatpush1.xpose.msra.mxu0 0.0
  %1915 = vmatprep.subr.mxu0 0.0
  %1916 = vmatpush1.xpose.msra.mxu0 0.0
  %1917 = vmatprep.subr.mxu0 0.0
  %1918 = vmatpush1.xpose.msra.mxu0 0.0
  %1919 = vmatprep.subr.mxu0 0.0
  %1920 = vmatpush1.xpose.msra.mxu0 0.0
  %1921 = vmatprep.subr.mxu0 0.0
  %1922 = vmatpush1.xpose.msra.mxu0 0.0
  %1923 = vmatprep.subr.mxu0 0.0
  %1924 = vmatpush1.xpose.msra.mxu0 0.0
  %1925 = vmatprep.subr.mxu0 0.0
  %1926 = vmatpush1.xpose.msra.mxu0 0.0
  %1927 = vmatprep.subr.mxu0 0.0
  %1928 = vmatpush1.xpose.msra.mxu0 0.0
  %1929 = vmatprep.subr.mxu0 0.0
  %1930 = vmatpush1.xpose.msra.mxu0 0.0
  %1931 = vmatprep.subr.mxu0 0.0
  %1932 = vmatpush1.xpose.msra.mxu0 0.0
  %1933 = vmatprep.subr.mxu0 0.0
  %1934 = vmatpush1.xpose.msra.mxu0 0.0
  %1935 = vmatprep.subr.mxu0 0.0
  %1936 = vmatpush1.xpose.msra.mxu0 0.0
  %1937 = vmatprep.subr.mxu0 0.0
  %1938 = vmatpush1.xpose.msra.mxu0 0.0
  %1939 = vmatprep.subr.mxu0 0.0
  %1940 = vmatpush1.xpose.msra.mxu0 0.0
  %1941 = vmatprep.subr.mxu0 0.0
  %1942 = vmatpush1.xpose.msra.mxu0 0.0
  %1943 = vmatprep.subr.mxu0 0.0
  %1944 = vmatpush1.xpose.msra.mxu0 0.0
  %1945 = vmatprep.mubr.f32.mxu0 0.0
  %1946 = vmatmul.mubr.f32.gmra.mrb[0].mxu0 %v1877
  %v1947 = vpop.f32.mrb[0].mxu0
  %v1948 = vadd.f32 0.0, %v1947
  %v1949 = vpop.f32.mrb[0].mxu0
  %1950 = vdwg.mxu0
  %v1951 = vmul.f32 %v1948, 0.25
  %v1952 = vadd.f32 %v1951, %v631
  %v1953 = vsel %vm290, %v1952, -inf
  %1954 = vmax.xlane.f32.xlu0 %v1953
  %v1955 = vpop.xlane.xlu0 %1954
  %v1956 = vsub.f32 %v1952, %v1955
  %v1957 = vmul.f32 %v1956, 1.442695
  %v1958 = vpow.pop %v1957
  %v1959 = vsel %vm290, %v1958, 0.0
  %1960 = vadd.xlane.f32.xlu0 %v1959
  %v1961 = vpop.xlane.xlu0 %1960
  %v1962 = vrcp.pop %v1961
  %v1963 = vmul.f32 %v1958, %v1962
  %1964 = vrot.lane.b32.xlu0 %v1366, 48
  %v1965 = vpop.permute.xlu0 %1964
  %v1968 = vsel %vm290, %v1963, 0
  %1970 = vmatprep.subr.mxu0 0.0
  %1971 = vmatpush1.msra.mxu0 %v1965
  %1972 = vmatprep.subr.mxu0 0.0
  %1973 = vmatpush1.msra.mxu0 0.0
  %1974 = vmatprep.subr.mxu0 0.0
  %1975 = vmatpush1.msra.mxu0 0.0
  %1976 = vmatprep.subr.mxu0 0.0
  %1977 = vmatpush1.msra.mxu0 0.0
  %1978 = vmatprep.subr.mxu0 0.0
  %1979 = vmatpush1.msra.mxu0 0.0
  %1980 = vmatprep.subr.mxu0 0.0
  %1981 = vmatpush1.msra.mxu0 0.0
  %1982 = vmatprep.subr.mxu0 0.0
  %1983 = vmatpush1.msra.mxu0 0.0
  %1984 = vmatprep.subr.mxu0 0.0
  %1985 = vmatpush1.msra.mxu0 0.0
  %1986 = vmatprep.subr.mxu0 0.0
  %1987 = vmatpush1.msra.mxu0 0.0
  %1988 = vmatprep.subr.mxu0 0.0
  %1989 = vmatpush1.msra.mxu0 0.0
  %1990 = vmatprep.subr.mxu0 0.0
  %1991 = vmatpush1.msra.mxu0 0.0
  %1992 = vmatprep.subr.mxu0 0.0
  %1993 = vmatpush1.msra.mxu0 0.0
  %1994 = vmatprep.subr.mxu0 0.0
  %1995 = vmatpush1.msra.mxu0 0.0
  %1996 = vmatprep.subr.mxu0 0.0
  %1997 = vmatpush1.msra.mxu0 0.0
  %1998 = vmatprep.subr.mxu0 0.0
  %1999 = vmatpush1.msra.mxu0 0.0
  %2000 = vmatprep.subr.mxu0 0.0
  %2001 = vmatpush1.msra.mxu0 0.0
  %2002 = vmatprep.subr.mxu0 0.0
  %2003 = vmatpush1.msra.mxu0 0.0
  %2004 = vmatprep.subr.mxu0 0.0
  %2005 = vmatpush1.msra.mxu0 0.0
  %2006 = vmatprep.subr.mxu0 0.0
  %2007 = vmatpush1.msra.mxu0 0.0
  %2008 = vmatprep.subr.mxu0 0.0
  %2009 = vmatpush1.msra.mxu0 0.0
  %2010 = vmatprep.subr.mxu0 0.0
  %2011 = vmatpush1.msra.mxu0 0.0
  %2012 = vmatprep.subr.mxu0 0.0
  %2013 = vmatpush1.msra.mxu0 0.0
  %2014 = vmatprep.subr.mxu0 0.0
  %2015 = vmatpush1.msra.mxu0 0.0
  %2016 = vmatprep.subr.mxu0 0.0
  %2017 = vmatpush1.msra.mxu0 0.0
  %2018 = vmatprep.subr.mxu0 0.0
  %2019 = vmatpush1.msra.mxu0 0.0
  %2020 = vmatprep.subr.mxu0 0.0
  %2021 = vmatpush1.msra.mxu0 0.0
  %2022 = vmatprep.subr.mxu0 0.0
  %2023 = vmatpush1.msra.mxu0 0.0
  %2024 = vmatprep.subr.mxu0 0.0
  %2025 = vmatpush1.msra.mxu0 0.0
  %2026 = vmatprep.subr.mxu0 0.0
  %2027 = vmatpush1.msra.mxu0 0.0
  %2028 = vmatprep.subr.mxu0 0.0
  %2029 = vmatpush1.msra.mxu0 0.0
  %2030 = vmatprep.subr.mxu0 0.0
  %2031 = vmatpush1.msra.mxu0 0.0
  %2032 = vmatprep.subr.mxu0 0.0
  %2033 = vmatpush1.msra.mxu0 0.0
  %2034 = vmatprep.mubr.f32.mxu0 0.0
  %2035 = vmatmul.mubr.f32.gmra.mrb[0].mxu0 %v1968
  %v2036 = vpop.f32.mrb[0].mxu0
  %v2037 = vadd.f32 0.0, %v2036
  %v2038 = vpop.f32.mrb[0].mxu0
  %2039 = vdwg.mxu0
  %2041 = vrot.lane.b32.xlu0 %v2037, 16
  %v2042 = vpop.permute.xlu0 %2041
  %v2044 = vsel %vm209, %v1870, %v2042
  %s2045 = scalar_lea.vmem %s6, 32
  %v2046 = vld [vmem:[%s2045] sm:$0xff]
  %v2047 = vld [vmem:[%s2045 + $0x8] sm:$0xff]
  %v2048 = vld [vmem:[%s2045 + $0x10] sm:$0xff]
  %v2049 = vld [vmem:[%s2045 + $0x18] sm:$0xff]
  %s2050 = scalar_lea.vmem %s7, 1
  %v2051 = vld [vmem:[%s2050] sm:$0x1]
  %v2053 = vlaneseq
  %v2054 = vshrl.u32 %v2053, 7
  %v2055 = vsub.s32 0, %v2054
  %v2056 = vrot.slane %v2051, %v2055
  %v2059 = vsel %vm69, %v1706, 0
  %v2062 = vsel %vm69, %v2044, 0
  %2064 = vmatprep.subr.mxu0 0.0
  %2065 = vmatpush1.msra.mxu0 %v2046
  %2066 = vmatprep.subr.mxu0 0.0
  %2067 = vmatpush1.msra.mxu0 %v2047
  %2068 = vmatprep.subr.mxu0 0.0
  %2069 = vmatpush1.msra.mxu0 %v2048
  %2070 = vmatprep.subr.mxu0 0.0
  %2071 = vmatpush1.msra.mxu0 %v2049
  %2072 = vmatprep.subr.mxu0 0.0
  %2073 = vmatpush1.msra.mxu0 0.0
  %2074 = vmatprep.subr.mxu0 0.0
  %2075 = vmatpush1.msra.mxu0 0.0
  %2076 = vmatprep.subr.mxu0 0.0
  %2077 = vmatpush1.msra.mxu0 0.0
  %2078 = vmatprep.subr.mxu0 0.0
  %2079 = vmatpush1.msra.mxu0 0.0
  %2080 = vmatprep.subr.mxu0 0.0
  %2081 = vmatpush1.msra.mxu0 0.0
  %2082 = vmatprep.subr.mxu0 0.0
  %2083 = vmatpush1.msra.mxu0 0.0
  %2084 = vmatprep.subr.mxu0 0.0
  %2085 = vmatpush1.msra.mxu0 0.0
  %2086 = vmatprep.subr.mxu0 0.0
  %2087 = vmatpush1.msra.mxu0 0.0
  %2088 = vmatprep.subr.mxu0 0.0
  %2089 = vmatpush1.msra.mxu0 0.0
  %2090 = vmatprep.subr.mxu0 0.0
  %2091 = vmatpush1.msra.mxu0 0.0
  %2092 = vmatprep.subr.mxu0 0.0
  %2093 = vmatpush1.msra.mxu0 0.0
  %2094 = vmatprep.subr.mxu0 0.0
  %2095 = vmatpush1.msra.mxu0 0.0
  %2096 = vmatprep.subr.mxu0 0.0
  %2097 = vmatpush1.msra.mxu0 0.0
  %2098 = vmatprep.subr.mxu0 0.0
  %2099 = vmatpush1.msra.mxu0 0.0
  %2100 = vmatprep.subr.mxu0 0.0
  %2101 = vmatpush1.msra.mxu0 0.0
  %2102 = vmatprep.subr.mxu0 0.0
  %2103 = vmatpush1.msra.mxu0 0.0
  %2104 = vmatprep.subr.mxu0 0.0
  %2105 = vmatpush1.msra.mxu0 0.0
  %2106 = vmatprep.subr.mxu0 0.0
  %2107 = vmatpush1.msra.mxu0 0.0
  %2108 = vmatprep.subr.mxu0 0.0
  %2109 = vmatpush1.msra.mxu0 0.0
  %2110 = vmatprep.subr.mxu0 0.0
  %2111 = vmatpush1.msra.mxu0 0.0
  %2112 = vmatprep.subr.mxu0 0.0
  %2113 = vmatpush1.msra.mxu0 0.0
  %2114 = vmatprep.subr.mxu0 0.0
  %2115 = vmatpush1.msra.mxu0 0.0
  %2116 = vmatprep.subr.mxu0 0.0
  %2117 = vmatpush1.msra.mxu0 0.0
  %2118 = vmatprep.subr.mxu0 0.0
  %2119 = vmatpush1.msra.mxu0 0.0
  %2120 = vmatprep.subr.mxu0 0.0
  %2121 = vmatpush1.msra.mxu0 0.0
  %2122 = vmatprep.subr.mxu0 0.0
  %2123 = vmatpush1.msra.mxu0 0.0
  %2124 = vmatprep.subr.mxu0 0.0
  %2125 = vmatpush1.msra.mxu0 0.0
  %2126 = vmatprep.subr.mxu0 0.0
  %2127 = vmatpush1.msra.mxu0 0.0
  %2128 = vmatprep.mubr.f32.mxu0 0.0
  %2129 = vmatmul.mubr.f32.gmra.mrb[0].mxu0 %v2059
  %v2130 = vpop.f32.mrb[0].mxu0
  %v2131 = vadd.f32 %v2056, %v2130
  %v2132 = vpop.f32.mrb[0].mxu0
  %2133 = vmatprep.mubr.f32.mxu0 0.0
  %2134 = vmatmul.mubr.f32.gmra.mrb[0].mxu0 %v2062
  %v2135 = vpop.f32.mrb[0].mxu0
  %v2136 = vadd.f32 %v2056, %v2135
  %v2137 = vpop.f32.mrb[0].mxu0
  %2138 = vdwg.mxu0
  %v2139 = vadd.f32 %v2131, %v1273
  %v2140 = vadd.f32 %v2136, %v1274
  %s2141 = scalar_lea.vmem %s8, 1
  %v2142 = vld [vmem:[%s2141] sm:$0x1]
  %s2143 = scalar_lea.vmem %s9, 1
  %v2144 = vld [vmem:[%s2143] sm:$0x1]
  %v2145 = vsel %vm69, %v2139, 0.0
  %2146 = vadd.xlane.f32.xlu0 %v2145
  %v2147 = vpop.xlane.xlu0 %2146
  %v2148 = vsel %vm69, %v2140, 0.0
  %2149 = vadd.xlane.f32.xlu0 %v2148
  %v2150 = vpop.xlane.xlu0 %2149
  %v2151 = vmul.f32 %v2147, %v76
  %v2152 = vmul.f32 %v2150, %v76
  %v2153 = vsub.f32 %v2139, %v2151
  %v2154 = vsub.f32 %v2140, %v2152
  %v2155 = vmul.f32 %v2153, %v2153
  %v2156 = vmul.f32 %v2154, %v2154
  %v2157 = vsel %vm69, %v2155, 0.0
  %2158 = vadd.xlane.f32.xlu0 %v2157
  %v2159 = vpop.xlane.xlu0 %2158
  %v2160 = vsel %vm69, %v2156, 0.0
  %2161 = vadd.xlane.f32.xlu0 %v2160
  %v2162 = vpop.xlane.xlu0 %2161
  %v2163 = vmul.f32 %v2159, %v76
  %v2164 = vmul.f32 %v2162, %v76
  %v2165 = vadd.f32 %v2163, 1e-12
  %v2166 = vadd.f32 %v2164, 1e-12
  %v2167 = vrsqrt.pop %v2165
  %v2168 = vrsqrt.pop %v2166
  %v2169 = vmul.f32 %v2153, %v2167
  %v2170 = vmul.f32 %v2154, %v2168
  %v2172 = vlaneseq
  %v2173 = vshrl.u32 %v2172, 7
  %v2174 = vsub.s32 0, %v2173
  %v2175 = vrot.slane %v2142, %v2174
  %v2177 = vmul.f32 %v2169, %v2175
  %v2178 = vmul.f32 %v2170, %v2175
  %v2180 = vlaneseq
  %v2181 = vshrl.u32 %v2180, 7
  %v2182 = vsub.s32 0, %v2181
  %v2183 = vrot.slane %v2144, %v2182
  %v2185 = vadd.f32 %v2177, %v2183
  %v2186 = vadd.f32 %v2178, %v2183
  %s2187 = scalar_lea.vmem %s10, 32
  %v2188 = vld [vmem:[%s2187] sm:$0xff]
  %v2189 = vld [vmem:[%s2187 + $0x8] sm:$0xff]
  %v2190 = vld [vmem:[%s2187 + $0x10] sm:$0xff]
  %v2191 = vld [vmem:[%s2187 + $0x18] sm:$0xff]
  %s2192 = scalar_lea.vmem %s11, 1
  %v2193 = vld [vmem:[%s2192] sm:$0x1]
  %v2195 = vlaneseq
  %v2196 = vshrl.u32 %v2195, 7
  %v2197 = vsub.s32 0, %v2196
  %v2198 = vrot.slane %v2193, %v2197
  %v2201 = vsel %vm69, %v2185, 0
  %v2204 = vsel %vm69, %v2186, 0
  %2206 = vmatprep.subr.mxu0 0.0
  %2207 = vmatpush1.msra.mxu0 %v2188
  %2208 = vmatprep.subr.mxu0 0.0
  %2209 = vmatpush1.msra.mxu0 %v2189
  %2210 = vmatprep.subr.mxu0 0.0
  %2211 = vmatpush1.msra.mxu0 %v2190
  %2212 = vmatprep.subr.mxu0 0.0
  %2213 = vmatpush1.msra.mxu0 %v2191
  %2214 = vmatprep.subr.mxu0 0.0
  %2215 = vmatpush1.msra.mxu0 0.0
  %2216 = vmatprep.subr.mxu0 0.0
  %2217 = vmatpush1.msra.mxu0 0.0
  %2218 = vmatprep.subr.mxu0 0.0
  %2219 = vmatpush1.msra.mxu0 0.0
  %2220 = vmatprep.subr.mxu0 0.0
  %2221 = vmatpush1.msra.mxu0 0.0
  %2222 = vmatprep.subr.mxu0 0.0
  %2223 = vmatpush1.msra.mxu0 0.0
  %2224 = vmatprep.subr.mxu0 0.0
  %2225 = vmatpush1.msra.mxu0 0.0
  %2226 = vmatprep.subr.mxu0 0.0
  %2227 = vmatpush1.msra.mxu0 0.0
  %2228 = vmatprep.subr.mxu0 0.0
  %2229 = vmatpush1.msra.mxu0 0.0
  %2230 = vmatprep.subr.mxu0 0.0
  %2231 = vmatpush1.msra.mxu0 0.0
  %2232 = vmatprep.subr.mxu0 0.0
  %2233 = vmatpush1.msra.mxu0 0.0
  %2234 = vmatprep.subr.mxu0 0.0
  %2235 = vmatpush1.msra.mxu0 0.0
  %2236 = vmatprep.subr.mxu0 0.0
  %2237 = vmatpush1.msra.mxu0 0.0
  %2238 = vmatprep.subr.mxu0 0.0
  %2239 = vmatpush1.msra.mxu0 0.0
  %2240 = vmatprep.subr.mxu0 0.0
  %2241 = vmatpush1.msra.mxu0 0.0
  %2242 = vmatprep.subr.mxu0 0.0
  %2243 = vmatpush1.msra.mxu0 0.0
  %2244 = vmatprep.subr.mxu0 0.0
  %2245 = vmatpush1.msra.mxu0 0.0
  %2246 = vmatprep.subr.mxu0 0.0
  %2247 = vmatpush1.msra.mxu0 0.0
  %2248 = vmatprep.subr.mxu0 0.0
  %2249 = vmatpush1.msra.mxu0 0.0
  %2250 = vmatprep.subr.mxu0 0.0
  %2251 = vmatpush1.msra.mxu0 0.0
  %2252 = vmatprep.subr.mxu0 0.0
  %2253 = vmatpush1.msra.mxu0 0.0
  %2254 = vmatprep.subr.mxu0 0.0
  %2255 = vmatpush1.msra.mxu0 0.0
  %2256 = vmatprep.subr.mxu0 0.0
  %2257 = vmatpush1.msra.mxu0 0.0
  %2258 = vmatprep.subr.mxu0 0.0
  %2259 = vmatpush1.msra.mxu0 0.0
  %2260 = vmatprep.subr.mxu0 0.0
  %2261 = vmatpush1.msra.mxu0 0.0
  %2262 = vmatprep.subr.mxu0 0.0
  %2263 = vmatpush1.msra.mxu0 0.0
  %2264 = vmatprep.subr.mxu0 0.0
  %2265 = vmatpush1.msra.mxu0 0.0
  %2266 = vmatprep.subr.mxu0 0.0
  %2267 = vmatpush1.msra.mxu0 0.0
  %2268 = vmatprep.subr.mxu0 0.0
  %2269 = vmatpush1.msra.mxu0 0.0
  %2270 = vmatprep.mubr.f32.mxu0 0.0
  %2271 = vmatmul.mubr.f32.gmra.mrb[0].mxu0 %v2201
  %v2272 = vpop.f32.mrb[0].mxu0
  %v2273 = vadd.f32 %v2198, %v2272
  %v2274 = vpop.f32.mrb[0].mxu0
  %2275 = vmatprep.mubr.f32.mxu0 0.0
  %2276 = vmatmul.mubr.f32.gmra.mrb[0].mxu0 %v2204
  %v2277 = vpop.f32.mrb[0].mxu0
  %v2278 = vadd.f32 %v2198, %v2277
  %v2279 = vpop.f32.mrb[0].mxu0
  %2280 = vdwg.mxu0
  %v2281 = vmul.f32 %v2273, 0.5
  %v2282 = vmul.f32 %v2278, 0.5
  %v2283 = vmul.f32 %v2273, 0.70710677
  %v2284 = vmul.f32 %v2278, 0.70710677
  %v2285 = verf.f32.pop %v2283
  %v2286 = verf.f32.pop %v2284
  %v2287 = vadd.f32 %v2285, 1.0
  %v2288 = vadd.f32 %v2286, 1.0
  %v2289 = vmul.f32 %v2281, %v2287
  %v2290 = vmul.f32 %v2282, %v2288
  %s2291 = scalar_lea.vmem %s12, 64
  %v2292 = vld [vmem:[%s2291] sm:$0xff]
  %v2293 = vld [vmem:[%s2291 + $0x8] sm:$0xff]
  %v2294 = vld [vmem:[%s2291 + $0x10] sm:$0xff]
  %v2295 = vld [vmem:[%s2291 + $0x18] sm:$0xff]
  %v2296 = vld [vmem:[%s2291 + $0x20] sm:$0xff]
  %v2297 = vld [vmem:[%s2291 + $0x28] sm:$0xff]
  %v2298 = vld [vmem:[%s2291 + $0x30] sm:$0xff]
  %v2299 = vld [vmem:[%s2291 + $0x38] sm:$0xff]
  %s2300 = scalar_lea.vmem %s13, 1
  %v2301 = vld [vmem:[%s2300] sm:$0x1]
  %v2303 = vlaneseq
  %v2304 = vshrl.u32 %v2303, 7
  %v2305 = vsub.s32 0, %v2304
  %v2306 = vrot.slane %v2301, %v2305
  %v2309 = vsel %vm1147, %v2289, 0
  %v2312 = vsel %vm1147, %v2290, 0
  %2314 = vmatprep.subr.mxu0 0.0
  %2315 = vmatpush1.msra.mxu0 %v2292
  %2316 = vmatprep.subr.mxu0 0.0
  %2317 = vmatpush1.msra.mxu0 %v2293
  %2318 = vmatprep.subr.mxu0 0.0
  %2319 = vmatpush1.msra.mxu0 %v2294
  %2320 = vmatprep.subr.mxu0 0.0
  %2321 = vmatpush1.msra.mxu0 %v2295
  %2322 = vmatprep.subr.mxu0 0.0
  %2323 = vmatpush1.msra.mxu0 %v2296
  %2324 = vmatprep.subr.mxu0 0.0
  %2325 = vmatpush1.msra.mxu0 %v2297
  %2326 = vmatprep.subr.mxu0 0.0
  %2327 = vmatpush1.msra.mxu0 %v2298
  %2328 = vmatprep.subr.mxu0 0.0
  %2329 = vmatpush1.msra.mxu0 %v2299
  %2330 = vmatprep.subr.mxu0 0.0
  %2331 = vmatpush1.msra.mxu0 0.0
  %2332 = vmatprep.subr.mxu0 0.0
  %2333 = vmatpush1.msra.mxu0 0.0
  %2334 = vmatprep.subr.mxu0 0.0
  %2335 = vmatpush1.msra.mxu0 0.0
  %2336 = vmatprep.subr.mxu0 0.0
  %2337 = vmatpush1.msra.mxu0 0.0
  %2338 = vmatprep.subr.mxu0 0.0
  %2339 = vmatpush1.msra.mxu0 0.0
  %2340 = vmatprep.subr.mxu0 0.0
  %2341 = vmatpush1.msra.mxu0 0.0
  %2342 = vmatprep.subr.mxu0 0.0
  %2343 = vmatpush1.msra.mxu0 0.0
  %2344 = vmatprep.subr.mxu0 0.0
  %2345 = vmatpush1.msra.mxu0 0.0
  %2346 = vmatprep.subr.mxu0 0.0
  %2347 = vmatpush1.msra.mxu0 0.0
  %2348 = vmatprep.subr.mxu0 0.0
  %2349 = vmatpush1.msra.mxu0 0.0
  %2350 = vmatprep.subr.mxu0 0.0
  %2351 = vmatpush1.msra.mxu0 0.0
  %2352 = vmatprep.subr.mxu0 0.0
  %2353 = vmatpush1.msra.mxu0 0.0
  %2354 = vmatprep.subr.mxu0 0.0
  %2355 = vmatpush1.msra.mxu0 0.0
  %2356 = vmatprep.subr.mxu0 0.0
  %2357 = vmatpush1.msra.mxu0 0.0
  %2358 = vmatprep.subr.mxu0 0.0
  %2359 = vmatpush1.msra.mxu0 0.0
  %2360 = vmatprep.subr.mxu0 0.0
  %2361 = vmatpush1.msra.mxu0 0.0
  %2362 = vmatprep.subr.mxu0 0.0
  %2363 = vmatpush1.msra.mxu0 0.0
  %2364 = vmatprep.subr.mxu0 0.0
  %2365 = vmatpush1.msra.mxu0 0.0
  %2366 = vmatprep.subr.mxu0 0.0
  %2367 = vmatpush1.msra.mxu0 0.0
  %2368 = vmatprep.subr.mxu0 0.0
  %2369 = vmatpush1.msra.mxu0 0.0
  %2370 = vmatprep.subr.mxu0 0.0
  %2371 = vmatpush1.msra.mxu0 0.0
  %2372 = vmatprep.subr.mxu0 0.0
  %2373 = vmatpush1.msra.mxu0 0.0
  %2374 = vmatprep.subr.mxu0 0.0
  %2375 = vmatpush1.msra.mxu0 0.0
  %2376 = vmatprep.subr.mxu0 0.0
  %2377 = vmatpush1.msra.mxu0 0.0
  %2378 = vmatprep.mubr.f32.mxu0 0.0
  %2379 = vmatmul.mubr.f32.gmra.mrb[0].mxu0 %v2309
  %v2380 = vpop.f32.mrb[0].mxu0
  %v2381 = vadd.f32 %v2306, %v2380
  %v2382 = vpop.f32.mrb[0].mxu0
  %2383 = vmatprep.mubr.f32.mxu0 0.0
  %2384 = vmatmul.mubr.f32.gmra.mrb[0].mxu0 %v2312
  %v2385 = vpop.f32.mrb[0].mxu0
  %v2386 = vadd.f32 %v2306, %v2385
  %v2387 = vpop.f32.mrb[0].mxu0
  %2388 = vdwg.mxu0
  %v2389 = vadd.f32 %v2381, %v2185
  %v2390 = vadd.f32 %v2386, %v2186
  %s2391 = scalar_lea.vmem %s14, 1
  %v2392 = vld [vmem:[%s2391] sm:$0x1]
  %s2393 = scalar_lea.vmem %s15, 1
  %v2394 = vld [vmem:[%s2393] sm:$0x1]
  %v2395 = vsel %vm69, %v2389, 0.0
  %2396 = vadd.xlane.f32.xlu0 %v2395
  %v2397 = vpop.xlane.xlu0 %2396
  %v2398 = vsel %vm69, %v2390, 0.0
  %2399 = vadd.xlane.f32.xlu0 %v2398
  %v2400 = vpop.xlane.xlu0 %2399
  %v2401 = vmul.f32 %v2397, %v76
  %v2402 = vmul.f32 %v2400, %v76
  %v2403 = vsub.f32 %v2389, %v2401
  %v2404 = vsub.f32 %v2390, %v2402
  %v2405 = vmul.f32 %v2403, %v2403
  %v2406 = vmul.f32 %v2404, %v2404
  %v2407 = vsel %vm69, %v2405, 0.0
  %2408 = vadd.xlane.f32.xlu0 %v2407
  %v2409 = vpop.xlane.xlu0 %2408
  %v2410 = vsel %vm69, %v2406, 0.0
  %2411 = vadd.xlane.f32.xlu0 %v2410
  %v2412 = vpop.xlane.xlu0 %2411
  %v2413 = vmul.f32 %v2409, %v76
  %v2414 = vmul.f32 %v2412, %v76
  %v2415 = vadd.f32 %v2413, 1e-12
  %v2416 = vadd.f32 %v2414, 1e-12
  %v2417 = vrsqrt.pop %v2415
  %v2418 = vrsqrt.pop %v2416
  %v2419 = vmul.f32 %v2403, %v2417
  %v2420 = vmul.f32 %v2404, %v2418
  %v2422 = vlaneseq
  %v2423 = vshrl.u32 %v2422, 7
  %v2424 = vsub.s32 0, %v2423
  %v2425 = vrot.slane %v2392, %v2424
  %v2427 = vmul.f32 %v2419, %v2425
  %v2428 = vmul.f32 %v2420, %v2425
  %v2430 = vlaneseq
  %v2431 = vshrl.u32 %v2430, 7
  %v2432 = vsub.s32 0, %v2431
  %v2433 = vrot.slane %v2394, %v2432
  %v2435 = vadd.f32 %v2427, %v2433
  %v2436 = vadd.f32 %v2428, %v2433
  %v2438 = vrot.slane %v2436, 7
  %vm2440 = vcmask 1040384
  %v2441 = vsel %vm2440, %v2435, %v2438
  %v2442 = vld [vmem:[%s16] sm:$0xff]
  %v2443 = vld [vmem:[%s16 + $0x8] sm:$0xff]
  %v2444 = vld [vmem:[%s16 + $0x10] sm:$0xff]
  %v2445 = vld [vmem:[%s16 + $0x18] sm:$0xff]
  %v2446 = vld [vmem:[%s17] sm:$0x1]
  %v2448 = vlaneseq
  %v2449 = vshrl.u32 %v2448, 7
  %v2450 = vsub.s32 0, %v2449
  %v2451 = vrot.slane %v2446, %v2450
  %v2454 = vsel %vm69, %v2441, 0
  %2456 = vmatprep.subr.mxu0 0.0
  %2457 = vmatpush1.msra.mxu0 %v2442
  %2458 = vmatprep.subr.mxu0 0.0
  %2459 = vmatpush1.msra.mxu0 %v2443
  %2460 = vmatprep.subr.mxu0 0.0
  %2461 = vmatpush1.msra.mxu0 %v2444
  %2462 = vmatprep.subr.mxu0 0.0
  %2463 = vmatpush1.msra.mxu0 %v2445
  %2464 = vmatprep.subr.mxu0 0.0
  %2465 = vmatpush1.msra.mxu0 0.0
  %2466 = vmatprep.subr.mxu0 0.0
  %2467 = vmatpush1.msra.mxu0 0.0
  %2468 = vmatprep.subr.mxu0 0.0
  %2469 = vmatpush1.msra.mxu0 0.0
  %2470 = vmatprep.subr.mxu0 0.0
  %2471 = vmatpush1.msra.mxu0 0.0
  %2472 = vmatprep.subr.mxu0 0.0
  %2473 = vmatpush1.msra.mxu0 0.0
  %2474 = vmatprep.subr.mxu0 0.0
  %2475 = vmatpush1.msra.mxu0 0.0
  %2476 = vmatprep.subr.mxu0 0.0
  %2477 = vmatpush1.msra.mxu0 0.0
  %2478 = vmatprep.subr.mxu0 0.0
  %2479 = vmatpush1.msra.mxu0 0.0
  %2480 = vmatprep.subr.mxu0 0.0
  %2481 = vmatpush1.msra.mxu0 0.0
  %2482 = vmatprep.subr.mxu0 0.0
  %2483 = vmatpush1.msra.mxu0 0.0
  %2484 = vmatprep.subr.mxu0 0.0
  %2485 = vmatpush1.msra.mxu0 0.0
  %2486 = vmatprep.subr.mxu0 0.0
  %2487 = vmatpush1.msra.mxu0 0.0
  %2488 = vmatprep.subr.mxu0 0.0
  %2489 = vmatpush1.msra.mxu0 0.0
  %2490 = vmatprep.subr.mxu0 0.0
  %2491 = vmatpush1.msra.mxu0 0.0
  %2492 = vmatprep.subr.mxu0 0.0
  %2493 = vmatpush1.msra.mxu0 0.0
  %2494 = vmatprep.subr.mxu0 0.0
  %2495 = vmatpush1.msra.mxu0 0.0
  %2496 = vmatprep.subr.mxu0 0.0
  %2497 = vmatpush1.msra.mxu0 0.0
  %2498 = vmatprep.subr.mxu0 0.0
  %2499 = vmatpush1.msra.mxu0 0.0
  %2500 = vmatprep.subr.mxu0 0.0
  %2501 = vmatpush1.msra.mxu0 0.0
  %2502 = vmatprep.subr.mxu0 0.0
  %2503 = vmatpush1.msra.mxu0 0.0
  %2504 = vmatprep.subr.mxu0 0.0
  %2505 = vmatpush1.msra.mxu0 0.0
  %2506 = vmatprep.subr.mxu0 0.0
  %2507 = vmatpush1.msra.mxu0 0.0
  %2508 = vmatprep.subr.mxu0 0.0
  %2509 = vmatpush1.msra.mxu0 0.0
  %2510 = vmatprep.subr.mxu0 0.0
  %2511 = vmatpush1.msra.mxu0 0.0
  %2512 = vmatprep.subr.mxu0 0.0
  %2513 = vmatpush1.msra.mxu0 0.0
  %2514 = vmatprep.subr.mxu0 0.0
  %2515 = vmatpush1.msra.mxu0 0.0
  %2516 = vmatprep.subr.mxu0 0.0
  %2517 = vmatpush1.msra.mxu0 0.0
  %2518 = vmatprep.subr.mxu0 0.0
  %2519 = vmatpush1.msra.mxu0 0.0
  %2520 = vmatprep.mubr.f32.mxu0 0.0
  %2521 = vmatmul.mubr.f32.gmra.mrb[0].mxu0 %v2454
  %v2522 = vpop.f32.mrb[0].mxu0
  %v2523 = vadd.f32 %v2451, %v2522
  %v2524 = vpop.f32.mrb[0].mxu0
  %2525 = vdwg.mxu0
  %v2526 = vtanh.pop %v2523
  %v2527 = vld [vmem:[%s18] sm:$0xff]
  %v2528 = vld [vmem:[%s18 + $0x8] sm:$0xff]
  %v2529 = vld [vmem:[%s18 + $0x10] sm:$0xff]
  %v2530 = vld [vmem:[%s18 + $0x18] sm:$0xff]
  %v2531 = vld [vmem:[%s19] sm:$0x1]
  %v2533 = vlaneseq
  %v2534 = vshrl.u32 %v2533, 7
  %v2535 = vsub.s32 0, %v2534
  %v2536 = vrot.slane %v2531, %v2535
  %v2539 = vsel %vm69, %v2526, 0
  %2541 = vmatprep.subr.mxu0 0.0
  %2542 = vmatpush1.msra.mxu0 %v2527
  %2543 = vmatprep.subr.mxu0 0.0
  %2544 = vmatpush1.msra.mxu0 %v2528
  %2545 = vmatprep.subr.mxu0 0.0
  %2546 = vmatpush1.msra.mxu0 %v2529
  %2547 = vmatprep.subr.mxu0 0.0
  %2548 = vmatpush1.msra.mxu0 %v2530
  %2549 = vmatprep.subr.mxu0 0.0
  %2550 = vmatpush1.msra.mxu0 0.0
  %2551 = vmatprep.subr.mxu0 0.0
  %2552 = vmatpush1.msra.mxu0 0.0
  %2553 = vmatprep.subr.mxu0 0.0
  %2554 = vmatpush1.msra.mxu0 0.0
  %2555 = vmatprep.subr.mxu0 0.0
  %2556 = vmatpush1.msra.mxu0 0.0
  %2557 = vmatprep.subr.mxu0 0.0
  %2558 = vmatpush1.msra.mxu0 0.0
  %2559 = vmatprep.subr.mxu0 0.0
  %2560 = vmatpush1.msra.mxu0 0.0
  %2561 = vmatprep.subr.mxu0 0.0
  %2562 = vmatpush1.msra.mxu0 0.0
  %2563 = vmatprep.subr.mxu0 0.0
  %2564 = vmatpush1.msra.mxu0 0.0
  %2565 = vmatprep.subr.mxu0 0.0
  %2566 = vmatpush1.msra.mxu0 0.0
  %2567 = vmatprep.subr.mxu0 0.0
  %2568 = vmatpush1.msra.mxu0 0.0
  %2569 = vmatprep.subr.mxu0 0.0
  %2570 = vmatpush1.msra.mxu0 0.0
  %2571 = vmatprep.subr.mxu0 0.0
  %2572 = vmatpush1.msra.mxu0 0.0
  %2573 = vmatprep.subr.mxu0 0.0
  %2574 = vmatpush1.msra.mxu0 0.0
  %2575 = vmatprep.subr.mxu0 0.0
  %2576 = vmatpush1.msra.mxu0 0.0
  %2577 = vmatprep.subr.mxu0 0.0
  %2578 = vmatpush1.msra.mxu0 0.0
  %2579 = vmatprep.subr.mxu0 0.0
  %2580 = vmatpush1.msra.mxu0 0.0
  %2581 = vmatprep.subr.mxu0 0.0
  %2582 = vmatpush1.msra.mxu0 0.0
  %2583 = vmatprep.subr.mxu0 0.0
  %2584 = vmatpush1.msra.mxu0 0.0
  %2585 = vmatprep.subr.mxu0 0.0
  %2586 = vmatpush1.msra.mxu0 0.0
  %2587 = vmatprep.subr.mxu0 0.0
  %2588 = vmatpush1.msra.mxu0 0.0
  %2589 = vmatprep.subr.mxu0 0.0
  %2590 = vmatpush1.msra.mxu0 0.0
  %2591 = vmatprep.subr.mxu0 0.0
  %2592 = vmatpush1.msra.mxu0 0.0
  %2593 = vmatprep.subr.mxu0 0.0
  %2594 = vmatpush1.msra.mxu0 0.0
  %2595 = vmatprep.subr.mxu0 0.0
  %2596 = vmatpush1.msra.mxu0 0.0
  %2597 = vmatprep.subr.mxu0 0.0
  %2598 = vmatpush1.msra.mxu0 0.0
  %2599 = vmatprep.subr.mxu0 0.0
  %2600 = vmatpush1.msra.mxu0 0.0
  %2601 = vmatprep.subr.mxu0 0.0
  %2602 = vmatpush1.msra.mxu0 0.0
  %2603 = vmatprep.subr.mxu0 0.0
  %2604 = vmatpush1.msra.mxu0 0.0
  %2605 = vmatprep.mubr.f32.mxu0 0.0
  %2606 = vmatmul.mubr.f32.gmra.mrb[0].mxu0 %v2539
  %v2607 = vpop.f32.mrb[0].mxu0
  %v2608 = vadd.f32 %v2536, %v2607
  %v2609 = vpop.f32.mrb[0].mxu0
  %2610 = vdwg.mxu0
  %vm2611 = vcmask 39936
  %v2612 = vsel %vm2611, %v2608, 0.0
  %vm2613 = vcmask 1041408
  %v2614 = vsel %vm2613, %v2612, 0.0
  %2615 = vst [vmem:[%s20] sm:$0xff] %v2614
  // Predicated region
  $region82: #{bert_forward.1} parent=0 // pred_check
    _
  $region83: #{bert_forward.1} parent=0 // pred_check_branch
    %2617 = sbr.rel (0) target = $region85
  $region84: #{bert_forward.1} parent=0 // pred_region
    _
  $region85: #{bert_forward.1} parent=0 // pred_fallthru
    _
  // Predicated region
  $region86: #{bert_forward.1} parent=0 // pred_check
    _
  $region87: #{bert_forward.1} parent=0 // pred_check_branch
    %2619 = sbr.rel (0) target = $region89
  $region88: #{bert_forward.1} parent=0 // pred_region
    _
  $region89: #{bert_forward.1} parent=0 // pred_fallthru
    _

</llo_original>
